<compile_context>
chip_gen: v6e
topology: v6e:2x2x1
jax: 0.10.0
libtpu: 0.0.40
codegen_flags: <defaults>
</compile_context>

<pallas_src>
import jax
import jax.numpy as jnp
from jax.experimental import pallas as pl
from jax.experimental.pallas import tpu as pltpu  # noqa: F401  (TPU backend)

# ----- model hyperparameters (small, deterministic "mini-BERT") -----
B = 2              # batch
S = 16             # sequence length
BS = B * S
H = 128            # hidden size
NH = 2             # attention heads
HD = H // NH       # head dim
INTER = 256        # FFN intermediate size
VOCAB = 100
TYPE_VOCAB = 2
MAXPOS = 64
NUM_INTENT_LABELS = 7
NUM_SLOT_LABELS = 9
NUM_LAYERS = 2
LN_EPS = 1e-12
PAD = 128          # lane-padded classifier width


# ---------------------------------------------------------------- kernel ----
def _ln(x, g, b):
    mu = jnp.mean(x, axis=-1, keepdims=True)
    var = jnp.mean((x - mu) ** 2, axis=-1, keepdims=True)
    return (x - mu) * jax.lax.rsqrt(var + LN_EPS) * g + b


def fused_forward_kernel(
        # activations / labels
        emb_ref,        # [BS, H]   f32  summed embeddings (pre-LN)
        mask_ref,       # [B, S]    f32  additive attention mask
        active_ref,     # [BS, 1]   f32  1.0 where attention_mask == 1
        int_oh_ref,     # [B, PAD]  f32  one-hot intent labels (lane padded)
        slot_oh_ref,    # [BS, PAD] f32  one-hot slot labels (lane padded)
        # embedding layernorm
        emb_g_ref, emb_b_ref,                       # [1, H]
        # stacked encoder-layer weights (leading axis = layer)
        wqkv_ref, bqkv_ref,                         # [L,H,3H] bf16, [L,1,3H] f32
        wo_ref, bo_ref,                             # [L,H,H]  bf16, [L,1,H]  f32
        ln1g_ref, ln1b_ref,                         # [L,1,H]  f32
        w1_ref, b1_ref,                             # [L,H,INTER] bf16, [L,1,INTER] f32
        w2_ref, b2_ref,                             # [L,INTER,H] bf16, [L,1,H] f32
        ln2g_ref, ln2b_ref,                         # [L,1,H]  f32
        # pooler + classifiers
        wp_ref, bp_ref,                             # [H,H] bf16, [1,H] f32
        wc_ref, bc_ref,                             # [H,PAD] bf16, [1,PAD] f32
        ws_ref, bs_ref,                             # [H,PAD] bf16, [1,PAD] f32
        # outputs
        intent_ref,     # [B, PAD]  f32
        slot_ref,       # [BS, PAD] f32
        loss_ref):      # [1, 1]    f32
    # --- embedding layernorm (batch folded to rows) ---
    x = _ln(emb_ref[...], emb_g_ref[...], emb_b_ref[...])          # [BS, H] f32

    mask3 = mask_ref[...][:, None, :]                               # [B, 1, S]
    scale = 1.0 / (HD ** 0.5)

    # --- encoder layers (static unrolled loop over stacked weights) ---
    for l in range(NUM_LAYERS):
        xb = x.astype(jnp.bfloat16)
        qkv = jnp.dot(xb, wqkv_ref[l],
                      preferred_element_type=jnp.float32) + bqkv_ref[l]   # [BS, 3H]
        q = qkv[:, 0:H].reshape(B, S, H)
        k = qkv[:, H:2 * H].reshape(B, S, H)
        v = qkv[:, 2 * H:3 * H].reshape(B, S, H)

        attn = jnp.zeros((BS, H), jnp.float32)
        for h in range(NH):                         # static per-head loop (NH=2)
            sl = slice(h * HD, (h + 1) * HD)
            qh = q[:, :, sl].astype(jnp.bfloat16)   # [B, S, HD]
            kh = k[:, :, sl].astype(jnp.bfloat16)
            vh = v[:, :, sl].astype(jnp.bfloat16)
            s = jnp.einsum('bqd,bkd->bqk', qh, kh,
                           preferred_element_type=jnp.float32) * scale    # [B,S,S]
            s = s + mask3
            s = s - jnp.max(s, axis=-1, keepdims=True)
            e = jnp.exp(s)
            p = e * pl.reciprocal(jnp.sum(e, axis=-1, keepdims=True), approx=True)
            ctx = jnp.einsum('bqk,bkd->bqd', p.astype(jnp.bfloat16), vh,
                             preferred_element_type=jnp.float32)          # [B,S,HD]
            # per-head output projection (avoids concat over heads)
            attn = attn + jnp.dot(ctx.reshape(BS, HD).astype(jnp.bfloat16),
                                  wo_ref[l][sl, :],
                                  preferred_element_type=jnp.float32)
        attn = attn + bo_ref[l]
        h1 = _ln(x + attn, ln1g_ref[l], ln1b_ref[l])                      # [BS, H]

        ff = jnp.dot(h1.astype(jnp.bfloat16), w1_ref[l],
                     preferred_element_type=jnp.float32) + b1_ref[l]      # [BS, INTER]
        ff = jax.nn.gelu(ff, approximate=True)
        ff = jnp.dot(ff.astype(jnp.bfloat16), w2_ref[l],
                     preferred_element_type=jnp.float32) + b2_ref[l]      # [BS, H]
        x = _ln(h1 + ff, ln2g_ref[l], ln2b_ref[l])

    # --- pooler + intent classifier (lane-padded output) ---
    cls = x.reshape(B, S, H)[:, 0, :]                                     # [B, H]
    pooled = jnp.tanh(jnp.dot(cls.astype(jnp.bfloat16), wp_ref[...],
                              preferred_element_type=jnp.float32) + bp_ref[...])
    # dropout(pooled) == pooled in eval mode
    intent_logits = jnp.dot(pooled.astype(jnp.bfloat16), wc_ref[...],
                            preferred_element_type=jnp.float32) + bc_ref[...]  # [B, PAD]
    intent_ref[...] = intent_logits

    # --- slot classifier on all token hidden states (lane-padded output) ---
    slot_logits = jnp.dot(x.astype(jnp.bfloat16), ws_ref[...],
                          preferred_element_type=jnp.float32) + bs_ref[...]    # [BS, PAD]
    slot_ref[...] = slot_logits

    # --- intent cross-entropy (mean over batch), padded classes masked out ---
    icol = jax.lax.broadcasted_iota(jnp.int32, (B, PAD), 1)
    imask = jnp.where(icol < NUM_INTENT_LABELS, intent_logits, -1e30)
    im = jnp.max(imask, axis=-1, keepdims=True)
    ilse = im + jnp.log(jnp.sum(jnp.exp(imask - im), axis=-1, keepdims=True))
    icorrect = jnp.sum(intent_logits * int_oh_ref[...], axis=-1, keepdims=True)
    intent_loss = jnp.mean(ilse - icorrect)

    # --- slot cross-entropy (mean over active tokens), padded classes masked ---
    scol = jax.lax.broadcasted_iota(jnp.int32, (BS, PAD), 1)
    smask = jnp.where(scol < NUM_SLOT_LABELS, slot_logits, -1e30)
    sm = jnp.max(smask, axis=-1, keepdims=True)
    slse = sm + jnp.log(jnp.sum(jnp.exp(smask - sm), axis=-1, keepdims=True))
    scorrect = jnp.sum(slot_logits * slot_oh_ref[...], axis=-1, keepdims=True)
    act = active_ref[...]                                                  # [BS, 1]
    slot_loss = jnp.sum(act * (slse - scorrect)) / jnp.sum(act)

    # full-block store (more robust than scalar element store into VMEM)
    loss_ref[...] = jnp.reshape(intent_loss + slot_loss, (1, 1))


# ------------------------------------------------------------- parameters ----
def init_params(key):
    keys = iter(jax.random.split(key, 64))

    def dense(fan_in, fan_out):
        return jax.random.normal(next(keys), (fan_in, fan_out), jnp.float32) * 0.02

    wqkv, bqkv, wo, bo = [], [], [], []
    ln1g, ln1b, w1, b1, w2, b2, ln2g, ln2b = [], [], [], [], [], [], [], []
    for _ in range(NUM_LAYERS):
        wqkv.append(jnp.concatenate([dense(H, H), dense(H, H), dense(H, H)], axis=1))
        bqkv.append(jnp.zeros((1, 3 * H), jnp.float32))
        wo.append(dense(H, H))
        bo.append(jnp.zeros((1, H), jnp.float32))
        ln1g.append(jnp.ones((1, H), jnp.float32))
        ln1b.append(jnp.zeros((1, H), jnp.float32))
        w1.append(dense(H, INTER))
        b1.append(jnp.zeros((1, INTER), jnp.float32))
        w2.append(dense(INTER, H))
        b2.append(jnp.zeros((1, H), jnp.float32))
        ln2g.append(jnp.ones((1, H), jnp.float32))
        ln2b.append(jnp.zeros((1, H), jnp.float32))

    int_w = dense(H, NUM_INTENT_LABELS)
    slot_w = dense(H, NUM_SLOT_LABELS)

    return {
        'word_emb': jax.random.normal(next(keys), (VOCAB, H), jnp.float32) * 0.02,
        'pos_emb': jax.random.normal(next(keys), (MAXPOS, H), jnp.float32) * 0.02,
        'type_emb': jax.random.normal(next(keys), (TYPE_VOCAB, H), jnp.float32) * 0.02,
        'emb_ln_g': jnp.ones((1, H), jnp.float32),
        'emb_ln_b': jnp.zeros((1, H), jnp.float32),
        # stacked per-layer weights; matmul operands pre-cast to bf16 once here
        'wqkv': jnp.stack(wqkv).astype(jnp.bfloat16),   # [L, H, 3H]
        'bqkv': jnp.stack(bqkv),                        # [L, 1, 3H]
        'wo': jnp.stack(wo).astype(jnp.bfloat16),
        'bo': jnp.stack(bo),
        'ln1_g': jnp.stack(ln1g), 'ln1_b': jnp.stack(ln1b),
        'w1': jnp.stack(w1).astype(jnp.bfloat16), 'b1': jnp.stack(b1),
        'w2': jnp.stack(w2).astype(jnp.bfloat16), 'b2': jnp.stack(b2),
        'ln2_g': jnp.stack(ln2g), 'ln2_b': jnp.stack(ln2b),
        'pool_w': dense(H, H).astype(jnp.bfloat16),
        'pool_b': jnp.zeros((1, H), jnp.float32),
        # classifiers zero-padded to 128 lanes
        'int_w': jnp.zeros((H, PAD), jnp.float32)
                    .at[:, :NUM_INTENT_LABELS].set(int_w).astype(jnp.bfloat16),
        'int_b': jnp.zeros((1, PAD), jnp.float32),
        'slot_w': jnp.zeros((H, PAD), jnp.float32)
                    .at[:, :NUM_SLOT_LABELS].set(slot_w).astype(jnp.bfloat16),
        'slot_b': jnp.zeros((1, PAD), jnp.float32),
    }


# ----------------------------------------------------------------- forward ----
@jax.jit
def joint_bert_forward(params, input_ids, attention_mask, token_type_ids,
                       intent_label, slot_labels):
    # --- embeddings (gather / one-hot is glue in JAX; everything else is Pallas) ---
    pos_ids = jnp.arange(S)
    emb = (params['word_emb'][input_ids]
           + params['pos_emb'][pos_ids][None, :, :]
           + params['type_emb'][token_type_ids])                  # [B, S, H]
    emb2d = emb.reshape(BS, H)

    ext_mask = (1.0 - attention_mask.astype(jnp.float32)) * -10000.0    # [B, S]
    active = attention_mask.astype(jnp.float32).reshape(BS, 1)          # [BS, 1]
    int_oh = jax.nn.one_hot(intent_label, PAD, dtype=jnp.float32)       # [B, PAD]
    slot_oh = jax.nn.one_hot(slot_labels.reshape(-1), PAD, dtype=jnp.float32)  # [BS, PAD]

    intent_pad, slot_pad, loss = pl.pallas_call(
        fused_forward_kernel,
        out_shape=(
            jax.ShapeDtypeStruct((B, PAD), jnp.float32),
            jax.ShapeDtypeStruct((BS, PAD), jnp.float32),
            jax.ShapeDtypeStruct((1, 1), jnp.float32),
        ),
        compiler_params=pltpu.CompilerParams(vmem_limit_bytes=64 << 20),
    )(emb2d, ext_mask, active, int_oh, slot_oh,
      params['emb_ln_g'], params['emb_ln_b'],
      params['wqkv'], params['bqkv'], params['wo'], params['bo'],
      params['ln1_g'], params['ln1_b'],
      params['w1'], params['b1'], params['w2'], params['b2'],
      params['ln2_g'], params['ln2_b'],
      params['pool_w'], params['pool_b'],
      params['int_w'], params['int_b'],
      params['slot_w'], params['slot_b'])

    intent_logits = intent_pad[:, :NUM_INTENT_LABELS]
    slot_logits = slot_pad.reshape(B, S, PAD)[:, :, :NUM_SLOT_LABELS]
    return intent_logits, slot_logits, loss[0, 0]


# -------------------------------------------------------------------- main ----
if __name__ == "__main__":
    key = jax.random.PRNGKey(0)
    pkey, ikey, skey = jax.random.split(key, 3)

    params = init_params(pkey)
    input_ids = jax.random.randint(ikey, (B, S), 0, VOCAB, dtype=jnp.int32)
    attention_mask = jnp.ones((B, S), jnp.int32).at[1, S - 4:].set(0)
    token_type_ids = jnp.zeros((B, S), jnp.int32)
    intent_label = jnp.array([1, 4], dtype=jnp.int32)
    slot_labels = jax.random.randint(skey, (B, S), 0, NUM_SLOT_LABELS, dtype=jnp.int32)

    intent_logits, slot_logits, loss = joint_bert_forward(
        params, input_ids, attention_mask, token_type_ids, intent_label, slot_labels)
    jax.block_until_ready((intent_logits, slot_logits, loss))

    assert intent_logits.shape == (B, NUM_INTENT_LABELS)
    assert slot_logits.shape == (B, S, NUM_SLOT_LABELS)
    assert loss.shape == ()
    assert bool(jnp.isfinite(loss))
    print("KERNEL_OK")
</pallas_src>

<mosaic_0001>
module attributes {stable_mosaic.version = 11 : i64} {
  func.func @fused_forward_kernel(%arg0: memref<32x128xf32, #tpu.memory_space<vmem>>, %arg1: memref<2x16xf32, #tpu.memory_space<vmem>>, %arg2: memref<32x1xf32, #tpu.memory_space<vmem>>, %arg3: memref<2x128xf32, #tpu.memory_space<vmem>>, %arg4: memref<32x128xf32, #tpu.memory_space<vmem>>, %arg5: memref<1x128xf32, #tpu.memory_space<vmem>>, %arg6: memref<1x128xf32, #tpu.memory_space<vmem>>, %arg7: memref<2x128x384xbf16, #tpu.memory_space<vmem>>, %arg8: memref<2x1x384xf32, #tpu.memory_space<vmem>>, %arg9: memref<2x128x128xbf16, #tpu.memory_space<vmem>>, %arg10: memref<2x1x128xf32, #tpu.memory_space<vmem>>, %arg11: memref<2x1x128xf32, #tpu.memory_space<vmem>>, %arg12: memref<2x1x128xf32, #tpu.memory_space<vmem>>, %arg13: memref<2x128x256xbf16, #tpu.memory_space<vmem>>, %arg14: memref<2x1x256xf32, #tpu.memory_space<vmem>>, %arg15: memref<2x256x128xbf16, #tpu.memory_space<vmem>>, %arg16: memref<2x1x128xf32, #tpu.memory_space<vmem>>, %arg17: memref<2x1x128xf32, #tpu.memory_space<vmem>>, %arg18: memref<2x1x128xf32, #tpu.memory_space<vmem>>, %arg19: memref<128x128xbf16, #tpu.memory_space<vmem>>, %arg20: memref<1x128xf32, #tpu.memory_space<vmem>>, %arg21: memref<128x128xbf16, #tpu.memory_space<vmem>>, %arg22: memref<1x128xf32, #tpu.memory_space<vmem>>, %arg23: memref<128x128xbf16, #tpu.memory_space<vmem>>, %arg24: memref<1x128xf32, #tpu.memory_space<vmem>>, %arg25: memref<2x128xf32, #tpu.memory_space<vmem>>, %arg26: memref<32x128xf32, #tpu.memory_space<vmem>>, %arg27: memref<1x1xf32, #tpu.memory_space<vmem>>) attributes {dimension_semantics = [], scalar_prefetch = 0 : i64, scratch_operands = 0 : i64, tpu.core_type = #tpu.core_type<tc>} {
    %c0 = arith.constant 0 : index
    %c0_0 = arith.constant 0 : index
    %0 = vector.load %arg0[%c0, %c0_0] : memref<32x128xf32, #tpu.memory_space<vmem>>, vector<32x128xf32>
    %c0_1 = arith.constant 0 : index
    %c0_2 = arith.constant 0 : index
    %1 = vector.load %arg5[%c0_1, %c0_2] : memref<1x128xf32, #tpu.memory_space<vmem>>, vector<1x128xf32>
    %c0_3 = arith.constant 0 : index
    %c0_4 = arith.constant 0 : index
    %2 = vector.load %arg6[%c0_3, %c0_4] : memref<1x128xf32, #tpu.memory_space<vmem>>, vector<1x128xf32>
    %cst = arith.constant dense<0.000000e+00> : vector<32xf32>
    %3 = vector.multi_reduction <add>, %0, %cst [1] : vector<32x128xf32> to vector<32xf32>
    %4 = vector.shape_cast %3 : vector<32xf32> to vector<32x1xf32>
    %cst_5 = arith.constant 1.280000e+02 : f32
    %5 = vector.broadcast %cst_5 : f32 to vector<32x1xf32>
    %6 = arith.divf %4, %5 : vector<32x1xf32>
    %7 = vector.broadcast %6 : vector<32x1xf32> to vector<32x128xf32>
    %8 = arith.subf %0, %7 : vector<32x128xf32>
    %9 = arith.mulf %8, %8 : vector<32x128xf32>
    %cst_6 = arith.constant dense<0.000000e+00> : vector<32xf32>
    %10 = vector.multi_reduction <add>, %9, %cst_6 [1] : vector<32x128xf32> to vector<32xf32>
    %11 = vector.shape_cast %10 : vector<32xf32> to vector<32x1xf32>
    %cst_7 = arith.constant 1.280000e+02 : f32
    %12 = vector.broadcast %cst_7 : f32 to vector<32x1xf32>
    %13 = arith.divf %11, %12 : vector<32x1xf32>
    %14 = vector.broadcast %6 : vector<32x1xf32> to vector<32x128xf32>
    %15 = arith.subf %0, %14 : vector<32x128xf32>
    %cst_8 = arith.constant 9.99999996E-13 : f32
    %16 = vector.broadcast %cst_8 : f32 to vector<32x1xf32>
    %17 = arith.addf %13, %16 : vector<32x1xf32>
    %18 = math.rsqrt %17 : vector<32x1xf32>
    %19 = vector.broadcast %18 : vector<32x1xf32> to vector<32x128xf32>
    %20 = arith.mulf %15, %19 : vector<32x128xf32>
    %21 = vector.broadcast %1 : vector<1x128xf32> to vector<32x128xf32>
    %22 = arith.mulf %20, %21 : vector<32x128xf32>
    %23 = vector.broadcast %2 : vector<1x128xf32> to vector<32x128xf32>
    %24 = arith.addf %22, %23 : vector<32x128xf32>
    %c0_9 = arith.constant 0 : index
    %c0_10 = arith.constant 0 : index
    %25 = vector.load %arg1[%c0_9, %c0_10] : memref<2x16xf32, #tpu.memory_space<vmem>>, vector<2x16xf32>
    %26 = vector.shape_cast %25 : vector<2x16xf32> to vector<2x1x16xf32>
    %27 = arith.truncf %24 : vector<32x128xf32> to vector<32x128xbf16>
    %c0_11 = arith.constant 0 : index
    %c0_12 = arith.constant 0 : index
    %c0_13 = arith.constant 0 : index
    %28 = vector.load %arg7[%c0_11, %c0_12, %c0_13] : memref<2x128x384xbf16, #tpu.memory_space<vmem>>, vector<1x128x384xbf16>
    %29 = vector.shape_cast %28 : vector<1x128x384xbf16> to vector<128x384xbf16>
    %cst_14 = arith.constant dense<0.000000e+00> : vector<32x384xf32>
    %30 = tpu.matmul %27, %29, %cst_14 {dimension_numbers = #tpu.dot_dimension_numbers<[1], [0], [0], [1], [0, 0, 1, 1], [], []>} : vector<32x128xbf16>, vector<128x384xbf16>, vector<32x384xf32> -> vector<32x384xf32>
    %c0_15 = arith.constant 0 : index
    %c0_16 = arith.constant 0 : index
    %c0_17 = arith.constant 0 : index
    %31 = vector.load %arg8[%c0_15, %c0_16, %c0_17] : memref<2x1x384xf32, #tpu.memory_space<vmem>>, vector<1x1x384xf32>
    %32 = vector.shape_cast %31 : vector<1x1x384xf32> to vector<1x384xf32>
    %33 = vector.broadcast %32 : vector<1x384xf32> to vector<32x384xf32>
    %34 = arith.addf %30, %33 : vector<32x384xf32>
    %35 = vector.extract_strided_slice %34 {offsets = [0, 0], sizes = [32, 128], strides = [1, 1]} : vector<32x384xf32> to vector<32x128xf32>
    %36 = vector.shape_cast %35 : vector<32x128xf32> to vector<2x16x128xf32>
    %37 = vector.extract_strided_slice %34 {offsets = [0, 128], sizes = [32, 128], strides = [1, 1]} : vector<32x384xf32> to vector<32x128xf32>
    %38 = vector.shape_cast %37 : vector<32x128xf32> to vector<2x16x128xf32>
    %39 = vector.extract_strided_slice %34 {offsets = [0, 256], sizes = [32, 128], strides = [1, 1]} : vector<32x384xf32> to vector<32x128xf32>
    %40 = vector.shape_cast %39 : vector<32x128xf32> to vector<2x16x128xf32>
    %cst_18 = arith.constant 0.000000e+00 : f32
    %41 = vector.broadcast %cst_18 : f32 to vector<32x128xf32>
    %42 = vector.extract_strided_slice %36 {offsets = [0, 0, 0], sizes = [2, 16, 64], strides = [1, 1, 1]} : vector<2x16x128xf32> to vector<2x16x64xf32>
    %43 = arith.truncf %42 : vector<2x16x64xf32> to vector<2x16x64xbf16>
    %44 = vector.extract_strided_slice %38 {offsets = [0, 0, 0], sizes = [2, 16, 64], strides = [1, 1, 1]} : vector<2x16x128xf32> to vector<2x16x64xf32>
    %45 = arith.truncf %44 : vector<2x16x64xf32> to vector<2x16x64xbf16>
    %46 = vector.extract_strided_slice %40 {offsets = [0, 0, 0], sizes = [2, 16, 64], strides = [1, 1, 1]} : vector<2x16x128xf32> to vector<2x16x64xf32>
    %47 = arith.truncf %46 : vector<2x16x64xf32> to vector<2x16x64xbf16>
    "tpu.trace_start"() <{level = 10 : i32, message = "bqd,bkd->bqk"}> : () -> ()
    %cst_19 = arith.constant dense<0.000000e+00> : vector<2x16x16xf32>
    %48 = tpu.matmul %43, %45, %cst_19 {dimension_numbers = #tpu.dot_dimension_numbers<[2], [2], [1], [1], [0, 0, 0, 1, 1, 1], [0], [0]>} : vector<2x16x64xbf16>, vector<2x16x64xbf16>, vector<2x16x16xf32> -> vector<2x16x16xf32>
    "tpu.trace_stop"() : () -> ()
    %cst_20 = arith.constant 1.250000e-01 : f32
    %49 = vector.broadcast %cst_20 : f32 to vector<2x16x16xf32>
    %50 = arith.mulf %48, %49 : vector<2x16x16xf32>
    %51 = vector.broadcast %26 : vector<2x1x16xf32> to vector<2x16x16xf32>
    %52 = arith.addf %50, %51 : vector<2x16x16xf32>
    %cst_21 = arith.constant dense<0xFF800000> : vector<2x16xf32>
    %53 = vector.multi_reduction <maximumf>, %52, %cst_21 [2] : vector<2x16x16xf32> to vector<2x16xf32>
    %54 = vector.shape_cast %53 : vector<2x16xf32> to vector<2x16x1xf32>
    %55 = vector.broadcast %54 : vector<2x16x1xf32> to vector<2x16x16xf32>
    %56 = arith.subf %52, %55 : vector<2x16x16xf32>
    %57 = math.exp %56 : vector<2x16x16xf32>
    %cst_22 = arith.constant dense<0.000000e+00> : vector<2x16xf32>
    %58 = vector.multi_reduction <add>, %57, %cst_22 [2] : vector<2x16x16xf32> to vector<2x16xf32>
    %59 = vector.shape_cast %58 : vector<2x16xf32> to vector<2x16x1xf32>
    %60 = tpu.reciprocal %59 {approx = true} : vector<2x16x1xf32> -> vector<2x16x1xf32>
    %61 = vector.broadcast %60 : vector<2x16x1xf32> to vector<2x16x16xf32>
    %62 = arith.mulf %57, %61 : vector<2x16x16xf32>
    %63 = arith.truncf %62 : vector<2x16x16xf32> to vector<2x16x16xbf16>
    "tpu.trace_start"() <{level = 10 : i32, message = "bqk,bkd->bqd"}> : () -> ()
    %cst_23 = arith.constant dense<0.000000e+00> : vector<2x16x64xf32>
    %64 = tpu.matmul %63, %47, %cst_23 {dimension_numbers = #tpu.dot_dimension_numbers<[2], [1], [1], [2], [0, 0, 0, 1, 1, 2], [0], [0]>} : vector<2x16x16xbf16>, vector<2x16x64xbf16>, vector<2x16x64xf32> -> vector<2x16x64xf32>
    "tpu.trace_stop"() : () -> ()
    %65 = vector.shape_cast %64 : vector<2x16x64xf32> to vector<32x64xf32>
    %66 = arith.truncf %65 : vector<32x64xf32> to vector<32x64xbf16>
    %c0_24 = arith.constant 0 : index
    %c0_25 = arith.constant 0 : index
    %c0_26 = arith.constant 0 : index
    %67 = vector.load %arg9[%c0_24, %c0_25, %c0_26] : memref<2x128x128xbf16, #tpu.memory_space<vmem>>, vector<1x128x128xbf16>
    %68 = vector.shape_cast %67 : vector<1x128x128xbf16> to vector<128x128xbf16>
    %69 = vector.extract_strided_slice %68 {offsets = [0, 0], sizes = [64, 128], strides = [1, 1]} : vector<128x128xbf16> to vector<64x128xbf16>
    %cst_27 = arith.constant dense<0.000000e+00> : vector<32x128xf32>
    %70 = tpu.matmul %66, %69, %cst_27 {dimension_numbers = #tpu.dot_dimension_numbers<[1], [0], [0], [1], [0, 0, 1, 1], [], []>} : vector<32x64xbf16>, vector<64x128xbf16>, vector<32x128xf32> -> vector<32x128xf32>
    %71 = arith.addf %41, %70 : vector<32x128xf32>
    %72 = vector.extract_strided_slice %36 {offsets = [0, 0, 64], sizes = [2, 16, 64], strides = [1, 1, 1]} : vector<2x16x128xf32> to vector<2x16x64xf32>
    %73 = arith.truncf %72 : vector<2x16x64xf32> to vector<2x16x64xbf16>
    %74 = vector.extract_strided_slice %38 {offsets = [0, 0, 64], sizes = [2, 16, 64], strides = [1, 1, 1]} : vector<2x16x128xf32> to vector<2x16x64xf32>
    %75 = arith.truncf %74 : vector<2x16x64xf32> to vector<2x16x64xbf16>
    %76 = vector.extract_strided_slice %40 {offsets = [0, 0, 64], sizes = [2, 16, 64], strides = [1, 1, 1]} : vector<2x16x128xf32> to vector<2x16x64xf32>
    %77 = arith.truncf %76 : vector<2x16x64xf32> to vector<2x16x64xbf16>
    "tpu.trace_start"() <{level = 10 : i32, message = "bqd,bkd->bqk"}> : () -> ()
    %cst_28 = arith.constant dense<0.000000e+00> : vector<2x16x16xf32>
    %78 = tpu.matmul %73, %75, %cst_28 {dimension_numbers = #tpu.dot_dimension_numbers<[2], [2], [1], [1], [0, 0, 0, 1, 1, 1], [0], [0]>} : vector<2x16x64xbf16>, vector<2x16x64xbf16>, vector<2x16x16xf32> -> vector<2x16x16xf32>
    "tpu.trace_stop"() : () -> ()
    %cst_29 = arith.constant 1.250000e-01 : f32
    %79 = vector.broadcast %cst_29 : f32 to vector<2x16x16xf32>
    %80 = arith.mulf %78, %79 : vector<2x16x16xf32>
    %81 = vector.broadcast %26 : vector<2x1x16xf32> to vector<2x16x16xf32>
    %82 = arith.addf %80, %81 : vector<2x16x16xf32>
    %cst_30 = arith.constant dense<0xFF800000> : vector<2x16xf32>
    %83 = vector.multi_reduction <maximumf>, %82, %cst_30 [2] : vector<2x16x16xf32> to vector<2x16xf32>
    %84 = vector.shape_cast %83 : vector<2x16xf32> to vector<2x16x1xf32>
    %85 = vector.broadcast %84 : vector<2x16x1xf32> to vector<2x16x16xf32>
    %86 = arith.subf %82, %85 : vector<2x16x16xf32>
    %87 = math.exp %86 : vector<2x16x16xf32>
    %cst_31 = arith.constant dense<0.000000e+00> : vector<2x16xf32>
    %88 = vector.multi_reduction <add>, %87, %cst_31 [2] : vector<2x16x16xf32> to vector<2x16xf32>
    %89 = vector.shape_cast %88 : vector<2x16xf32> to vector<2x16x1xf32>
    %90 = tpu.reciprocal %89 {approx = true} : vector<2x16x1xf32> -> vector<2x16x1xf32>
    %91 = vector.broadcast %90 : vector<2x16x1xf32> to vector<2x16x16xf32>
    %92 = arith.mulf %87, %91 : vector<2x16x16xf32>
    %93 = arith.truncf %92 : vector<2x16x16xf32> to vector<2x16x16xbf16>
    "tpu.trace_start"() <{level = 10 : i32, message = "bqk,bkd->bqd"}> : () -> ()
    %cst_32 = arith.constant dense<0.000000e+00> : vector<2x16x64xf32>
    %94 = tpu.matmul %93, %77, %cst_32 {dimension_numbers = #tpu.dot_dimension_numbers<[2], [1], [1], [2], [0, 0, 0, 1, 1, 2], [0], [0]>} : vector<2x16x16xbf16>, vector<2x16x64xbf16>, vector<2x16x64xf32> -> vector<2x16x64xf32>
    "tpu.trace_stop"() : () -> ()
    %95 = vector.shape_cast %94 : vector<2x16x64xf32> to vector<32x64xf32>
    %96 = arith.truncf %95 : vector<32x64xf32> to vector<32x64xbf16>
    %c0_33 = arith.constant 0 : index
    %c0_34 = arith.constant 0 : index
    %c0_35 = arith.constant 0 : index
    %97 = vector.load %arg9[%c0_33, %c0_34, %c0_35] : memref<2x128x128xbf16, #tpu.memory_space<vmem>>, vector<1x128x128xbf16>
    %98 = vector.shape_cast %97 : vector<1x128x128xbf16> to vector<128x128xbf16>
    %99 = vector.extract_strided_slice %98 {offsets = [64, 0], sizes = [64, 128], strides = [1, 1]} : vector<128x128xbf16> to vector<64x128xbf16>
    %cst_36 = arith.constant dense<0.000000e+00> : vector<32x128xf32>
    %100 = tpu.matmul %96, %99, %cst_36 {dimension_numbers = #tpu.dot_dimension_numbers<[1], [0], [0], [1], [0, 0, 1, 1], [], []>} : vector<32x64xbf16>, vector<64x128xbf16>, vector<32x128xf32> -> vector<32x128xf32>
    %101 = arith.addf %71, %100 : vector<32x128xf32>
    %c0_37 = arith.constant 0 : index
    %c0_38 = arith.constant 0 : index
    %c0_39 = arith.constant 0 : index
    %102 = vector.load %arg10[%c0_37, %c0_38, %c0_39] : memref<2x1x128xf32, #tpu.memory_space<vmem>>, vector<1x1x128xf32>
    %103 = vector.shape_cast %102 : vector<1x1x128xf32> to vector<1x128xf32>
    %104 = vector.broadcast %103 : vector<1x128xf32> to vector<32x128xf32>
    %105 = arith.addf %101, %104 : vector<32x128xf32>
    %106 = arith.addf %24, %105 : vector<32x128xf32>
    %c0_40 = arith.constant 0 : index
    %c0_41 = arith.constant 0 : index
    %c0_42 = arith.constant 0 : index
    %107 = vector.load %arg11[%c0_40, %c0_41, %c0_42] : memref<2x1x128xf32, #tpu.memory_space<vmem>>, vector<1x1x128xf32>
    %108 = vector.shape_cast %107 : vector<1x1x128xf32> to vector<1x128xf32>
    %c0_43 = arith.constant 0 : index
    %c0_44 = arith.constant 0 : index
    %c0_45 = arith.constant 0 : index
    %109 = vector.load %arg12[%c0_43, %c0_44, %c0_45] : memref<2x1x128xf32, #tpu.memory_space<vmem>>, vector<1x1x128xf32>
    %110 = vector.shape_cast %109 : vector<1x1x128xf32> to vector<1x128xf32>
    %cst_46 = arith.constant dense<0.000000e+00> : vector<32xf32>
    %111 = vector.multi_reduction <add>, %106, %cst_46 [1] : vector<32x128xf32> to vector<32xf32>
    %112 = vector.shape_cast %111 : vector<32xf32> to vector<32x1xf32>
    %cst_47 = arith.constant 1.280000e+02 : f32
    %113 = vector.broadcast %cst_47 : f32 to vector<32x1xf32>
    %114 = arith.divf %112, %113 : vector<32x1xf32>
    %115 = vector.broadcast %114 : vector<32x1xf32> to vector<32x128xf32>
    %116 = arith.subf %106, %115 : vector<32x128xf32>
    %117 = arith.mulf %116, %116 : vector<32x128xf32>
    %cst_48 = arith.constant dense<0.000000e+00> : vector<32xf32>
    %118 = vector.multi_reduction <add>, %117, %cst_48 [1] : vector<32x128xf32> to vector<32xf32>
    %119 = vector.shape_cast %118 : vector<32xf32> to vector<32x1xf32>
    %cst_49 = arith.constant 1.280000e+02 : f32
    %120 = vector.broadcast %cst_49 : f32 to vector<32x1xf32>
    %121 = arith.divf %119, %120 : vector<32x1xf32>
    %122 = vector.broadcast %114 : vector<32x1xf32> to vector<32x128xf32>
    %123 = arith.subf %106, %122 : vector<32x128xf32>
    %cst_50 = arith.constant 9.99999996E-13 : f32
    %124 = vector.broadcast %cst_50 : f32 to vector<32x1xf32>
    %125 = arith.addf %121, %124 : vector<32x1xf32>
    %126 = math.rsqrt %125 : vector<32x1xf32>
    %127 = vector.broadcast %126 : vector<32x1xf32> to vector<32x128xf32>
    %128 = arith.mulf %123, %127 : vector<32x128xf32>
    %129 = vector.broadcast %108 : vector<1x128xf32> to vector<32x128xf32>
    %130 = arith.mulf %128, %129 : vector<32x128xf32>
    %131 = vector.broadcast %110 : vector<1x128xf32> to vector<32x128xf32>
    %132 = arith.addf %130, %131 : vector<32x128xf32>
    %133 = arith.truncf %132 : vector<32x128xf32> to vector<32x128xbf16>
    %c0_51 = arith.constant 0 : index
    %c0_52 = arith.constant 0 : index
    %c0_53 = arith.constant 0 : index
    %134 = vector.load %arg13[%c0_51, %c0_52, %c0_53] : memref<2x128x256xbf16, #tpu.memory_space<vmem>>, vector<1x128x256xbf16>
    %135 = vector.shape_cast %134 : vector<1x128x256xbf16> to vector<128x256xbf16>
    %cst_54 = arith.constant dense<0.000000e+00> : vector<32x256xf32>
    %136 = tpu.matmul %133, %135, %cst_54 {dimension_numbers = #tpu.dot_dimension_numbers<[1], [0], [0], [1], [0, 0, 1, 1], [], []>} : vector<32x128xbf16>, vector<128x256xbf16>, vector<32x256xf32> -> vector<32x256xf32>
    %c0_55 = arith.constant 0 : index
    %c0_56 = arith.constant 0 : index
    %c0_57 = arith.constant 0 : index
    %137 = vector.load %arg14[%c0_55, %c0_56, %c0_57] : memref<2x1x256xf32, #tpu.memory_space<vmem>>, vector<1x1x256xf32>
    %138 = vector.shape_cast %137 : vector<1x1x256xf32> to vector<1x256xf32>
    %139 = vector.broadcast %138 : vector<1x256xf32> to vector<32x256xf32>
    %140 = arith.addf %136, %139 : vector<32x256xf32>
    %141 = arith.mulf %140, %140 : vector<32x256xf32>
    %142 = arith.mulf %140, %141 : vector<32x256xf32>
    %cst_58 = arith.constant 4.471500e-02 : f32
    %143 = vector.broadcast %cst_58 : f32 to vector<32x256xf32>
    %144 = arith.mulf %143, %142 : vector<32x256xf32>
    %145 = arith.addf %140, %144 : vector<32x256xf32>
    %cst_59 = arith.constant 0.797884583 : f32
    %146 = vector.broadcast %cst_59 : f32 to vector<32x256xf32>
    %147 = arith.mulf %146, %145 : vector<32x256xf32>
    %148 = math.tanh %147 : vector<32x256xf32>
    %cst_60 = arith.constant 1.000000e+00 : f32
    %149 = vector.broadcast %cst_60 : f32 to vector<32x256xf32>
    %150 = arith.addf %149, %148 : vector<32x256xf32>
    %cst_61 = arith.constant 5.000000e-01 : f32
    %151 = vector.broadcast %cst_61 : f32 to vector<32x256xf32>
    %152 = arith.mulf %151, %150 : vector<32x256xf32>
    %153 = arith.mulf %140, %152 : vector<32x256xf32>
    %154 = arith.truncf %153 : vector<32x256xf32> to vector<32x256xbf16>
    %c0_62 = arith.constant 0 : index
    %c0_63 = arith.constant 0 : index
    %c0_64 = arith.constant 0 : index
    %155 = vector.load %arg15[%c0_62, %c0_63, %c0_64] : memref<2x256x128xbf16, #tpu.memory_space<vmem>>, vector<1x256x128xbf16>
    %156 = vector.shape_cast %155 : vector<1x256x128xbf16> to vector<256x128xbf16>
    %cst_65 = arith.constant dense<0.000000e+00> : vector<32x128xf32>
    %157 = tpu.matmul %154, %156, %cst_65 {dimension_numbers = #tpu.dot_dimension_numbers<[1], [0], [0], [1], [0, 0, 1, 1], [], []>} : vector<32x256xbf16>, vector<256x128xbf16>, vector<32x128xf32> -> vector<32x128xf32>
    %c0_66 = arith.constant 0 : index
    %c0_67 = arith.constant 0 : index
    %c0_68 = arith.constant 0 : index
    %158 = vector.load %arg16[%c0_66, %c0_67, %c0_68] : memref<2x1x128xf32, #tpu.memory_space<vmem>>, vector<1x1x128xf32>
    %159 = vector.shape_cast %158 : vector<1x1x128xf32> to vector<1x128xf32>
    %160 = vector.broadcast %159 : vector<1x128xf32> to vector<32x128xf32>
    %161 = arith.addf %157, %160 : vector<32x128xf32>
    %162 = arith.addf %132, %161 : vector<32x128xf32>
    %c0_69 = arith.constant 0 : index
    %c0_70 = arith.constant 0 : index
    %c0_71 = arith.constant 0 : index
    %163 = vector.load %arg17[%c0_69, %c0_70, %c0_71] : memref<2x1x128xf32, #tpu.memory_space<vmem>>, vector<1x1x128xf32>
    %164 = vector.shape_cast %163 : vector<1x1x128xf32> to vector<1x128xf32>
    %c0_72 = arith.constant 0 : index
    %c0_73 = arith.constant 0 : index
    %c0_74 = arith.constant 0 : index
    %165 = vector.load %arg18[%c0_72, %c0_73, %c0_74] : memref<2x1x128xf32, #tpu.memory_space<vmem>>, vector<1x1x128xf32>
    %166 = vector.shape_cast %165 : vector<1x1x128xf32> to vector<1x128xf32>
    %cst_75 = arith.constant dense<0.000000e+00> : vector<32xf32>
    %167 = vector.multi_reduction <add>, %162, %cst_75 [1] : vector<32x128xf32> to vector<32xf32>
    %168 = vector.shape_cast %167 : vector<32xf32> to vector<32x1xf32>
    %cst_76 = arith.constant 1.280000e+02 : f32
    %169 = vector.broadcast %cst_76 : f32 to vector<32x1xf32>
    %170 = arith.divf %168, %169 : vector<32x1xf32>
    %171 = vector.broadcast %170 : vector<32x1xf32> to vector<32x128xf32>
    %172 = arith.subf %162, %171 : vector<32x128xf32>
    %173 = arith.mulf %172, %172 : vector<32x128xf32>
    %cst_77 = arith.constant dense<0.000000e+00> : vector<32xf32>
    %174 = vector.multi_reduction <add>, %173, %cst_77 [1] : vector<32x128xf32> to vector<32xf32>
    %175 = vector.shape_cast %174 : vector<32xf32> to vector<32x1xf32>
    %cst_78 = arith.constant 1.280000e+02 : f32
    %176 = vector.broadcast %cst_78 : f32 to vector<32x1xf32>
    %177 = arith.divf %175, %176 : vector<32x1xf32>
    %178 = vector.broadcast %170 : vector<32x1xf32> to vector<32x128xf32>
    %179 = arith.subf %162, %178 : vector<32x128xf32>
    %cst_79 = arith.constant 9.99999996E-13 : f32
    %180 = vector.broadcast %cst_79 : f32 to vector<32x1xf32>
    %181 = arith.addf %177, %180 : vector<32x1xf32>
    %182 = math.rsqrt %181 : vector<32x1xf32>
    %183 = vector.broadcast %182 : vector<32x1xf32> to vector<32x128xf32>
    %184 = arith.mulf %179, %183 : vector<32x128xf32>
    %185 = vector.broadcast %164 : vector<1x128xf32> to vector<32x128xf32>
    %186 = arith.mulf %184, %185 : vector<32x128xf32>
    %187 = vector.broadcast %166 : vector<1x128xf32> to vector<32x128xf32>
    %188 = arith.addf %186, %187 : vector<32x128xf32>
    %189 = arith.truncf %188 : vector<32x128xf32> to vector<32x128xbf16>
    %c1 = arith.constant 1 : index
    %c0_80 = arith.constant 0 : index
    %c0_81 = arith.constant 0 : index
    %190 = vector.load %arg7[%c1, %c0_80, %c0_81] : memref<2x128x384xbf16, #tpu.memory_space<vmem>>, vector<1x128x384xbf16>
    %191 = vector.shape_cast %190 : vector<1x128x384xbf16> to vector<128x384xbf16>
    %cst_82 = arith.constant dense<0.000000e+00> : vector<32x384xf32>
    %192 = tpu.matmul %189, %191, %cst_82 {dimension_numbers = #tpu.dot_dimension_numbers<[1], [0], [0], [1], [0, 0, 1, 1], [], []>} : vector<32x128xbf16>, vector<128x384xbf16>, vector<32x384xf32> -> vector<32x384xf32>
    %c1_83 = arith.constant 1 : index
    %c0_84 = arith.constant 0 : index
    %c0_85 = arith.constant 0 : index
    %193 = vector.load %arg8[%c1_83, %c0_84, %c0_85] : memref<2x1x384xf32, #tpu.memory_space<vmem>>, vector<1x1x384xf32>
    %194 = vector.shape_cast %193 : vector<1x1x384xf32> to vector<1x384xf32>
    %195 = vector.broadcast %194 : vector<1x384xf32> to vector<32x384xf32>
    %196 = arith.addf %192, %195 : vector<32x384xf32>
    %197 = vector.extract_strided_slice %196 {offsets = [0, 0], sizes = [32, 128], strides = [1, 1]} : vector<32x384xf32> to vector<32x128xf32>
    %198 = vector.shape_cast %197 : vector<32x128xf32> to vector<2x16x128xf32>
    %199 = vector.extract_strided_slice %196 {offsets = [0, 128], sizes = [32, 128], strides = [1, 1]} : vector<32x384xf32> to vector<32x128xf32>
    %200 = vector.shape_cast %199 : vector<32x128xf32> to vector<2x16x128xf32>
    %201 = vector.extract_strided_slice %196 {offsets = [0, 256], sizes = [32, 128], strides = [1, 1]} : vector<32x384xf32> to vector<32x128xf32>
    %202 = vector.shape_cast %201 : vector<32x128xf32> to vector<2x16x128xf32>
    %cst_86 = arith.constant 0.000000e+00 : f32
    %203 = vector.broadcast %cst_86 : f32 to vector<32x128xf32>
    %204 = vector.extract_strided_slice %198 {offsets = [0, 0, 0], sizes = [2, 16, 64], strides = [1, 1, 1]} : vector<2x16x128xf32> to vector<2x16x64xf32>
    %205 = arith.truncf %204 : vector<2x16x64xf32> to vector<2x16x64xbf16>
    %206 = vector.extract_strided_slice %200 {offsets = [0, 0, 0], sizes = [2, 16, 64], strides = [1, 1, 1]} : vector<2x16x128xf32> to vector<2x16x64xf32>
    %207 = arith.truncf %206 : vector<2x16x64xf32> to vector<2x16x64xbf16>
    %208 = vector.extract_strided_slice %202 {offsets = [0, 0, 0], sizes = [2, 16, 64], strides = [1, 1, 1]} : vector<2x16x128xf32> to vector<2x16x64xf32>
    %209 = arith.truncf %208 : vector<2x16x64xf32> to vector<2x16x64xbf16>
    "tpu.trace_start"() <{level = 10 : i32, message = "bqd,bkd->bqk"}> : () -> ()
    %cst_87 = arith.constant dense<0.000000e+00> : vector<2x16x16xf32>
    %210 = tpu.matmul %205, %207, %cst_87 {dimension_numbers = #tpu.dot_dimension_numbers<[2], [2], [1], [1], [0, 0, 0, 1, 1, 1], [0], [0]>} : vector<2x16x64xbf16>, vector<2x16x64xbf16>, vector<2x16x16xf32> -> vector<2x16x16xf32>
    "tpu.trace_stop"() : () -> ()
    %cst_88 = arith.constant 1.250000e-01 : f32
    %211 = vector.broadcast %cst_88 : f32 to vector<2x16x16xf32>
    %212 = arith.mulf %210, %211 : vector<2x16x16xf32>
    %213 = vector.broadcast %26 : vector<2x1x16xf32> to vector<2x16x16xf32>
    %214 = arith.addf %212, %213 : vector<2x16x16xf32>
    %cst_89 = arith.constant dense<0xFF800000> : vector<2x16xf32>
    %215 = vector.multi_reduction <maximumf>, %214, %cst_89 [2] : vector<2x16x16xf32> to vector<2x16xf32>
    %216 = vector.shape_cast %215 : vector<2x16xf32> to vector<2x16x1xf32>
    %217 = vector.broadcast %216 : vector<2x16x1xf32> to vector<2x16x16xf32>
    %218 = arith.subf %214, %217 : vector<2x16x16xf32>
    %219 = math.exp %218 : vector<2x16x16xf32>
    %cst_90 = arith.constant dense<0.000000e+00> : vector<2x16xf32>
    %220 = vector.multi_reduction <add>, %219, %cst_90 [2] : vector<2x16x16xf32> to vector<2x16xf32>
    %221 = vector.shape_cast %220 : vector<2x16xf32> to vector<2x16x1xf32>
    %222 = tpu.reciprocal %221 {approx = true} : vector<2x16x1xf32> -> vector<2x16x1xf32>
    %223 = vector.broadcast %222 : vector<2x16x1xf32> to vector<2x16x16xf32>
    %224 = arith.mulf %219, %223 : vector<2x16x16xf32>
    %225 = arith.truncf %224 : vector<2x16x16xf32> to vector<2x16x16xbf16>
    "tpu.trace_start"() <{level = 10 : i32, message = "bqk,bkd->bqd"}> : () -> ()
    %cst_91 = arith.constant dense<0.000000e+00> : vector<2x16x64xf32>
    %226 = tpu.matmul %225, %209, %cst_91 {dimension_numbers = #tpu.dot_dimension_numbers<[2], [1], [1], [2], [0, 0, 0, 1, 1, 2], [0], [0]>} : vector<2x16x16xbf16>, vector<2x16x64xbf16>, vector<2x16x64xf32> -> vector<2x16x64xf32>
    "tpu.trace_stop"() : () -> ()
    %227 = vector.shape_cast %226 : vector<2x16x64xf32> to vector<32x64xf32>
    %228 = arith.truncf %227 : vector<32x64xf32> to vector<32x64xbf16>
    %c1_92 = arith.constant 1 : index
    %c0_93 = arith.constant 0 : index
    %c0_94 = arith.constant 0 : index
    %229 = vector.load %arg9[%c1_92, %c0_93, %c0_94] : memref<2x128x128xbf16, #tpu.memory_space<vmem>>, vector<1x128x128xbf16>
    %230 = vector.shape_cast %229 : vector<1x128x128xbf16> to vector<128x128xbf16>
    %231 = vector.extract_strided_slice %230 {offsets = [0, 0], sizes = [64, 128], strides = [1, 1]} : vector<128x128xbf16> to vector<64x128xbf16>
    %cst_95 = arith.constant dense<0.000000e+00> : vector<32x128xf32>
    %232 = tpu.matmul %228, %231, %cst_95 {dimension_numbers = #tpu.dot_dimension_numbers<[1], [0], [0], [1], [0, 0, 1, 1], [], []>} : vector<32x64xbf16>, vector<64x128xbf16>, vector<32x128xf32> -> vector<32x128xf32>
    %233 = arith.addf %203, %232 : vector<32x128xf32>
    %234 = vector.extract_strided_slice %198 {offsets = [0, 0, 64], sizes = [2, 16, 64], strides = [1, 1, 1]} : vector<2x16x128xf32> to vector<2x16x64xf32>
    %235 = arith.truncf %234 : vector<2x16x64xf32> to vector<2x16x64xbf16>
    %236 = vector.extract_strided_slice %200 {offsets = [0, 0, 64], sizes = [2, 16, 64], strides = [1, 1, 1]} : vector<2x16x128xf32> to vector<2x16x64xf32>
    %237 = arith.truncf %236 : vector<2x16x64xf32> to vector<2x16x64xbf16>
    %238 = vector.extract_strided_slice %202 {offsets = [0, 0, 64], sizes = [2, 16, 64], strides = [1, 1, 1]} : vector<2x16x128xf32> to vector<2x16x64xf32>
    %239 = arith.truncf %238 : vector<2x16x64xf32> to vector<2x16x64xbf16>
    "tpu.trace_start"() <{level = 10 : i32, message = "bqd,bkd->bqk"}> : () -> ()
    %cst_96 = arith.constant dense<0.000000e+00> : vector<2x16x16xf32>
    %240 = tpu.matmul %235, %237, %cst_96 {dimension_numbers = #tpu.dot_dimension_numbers<[2], [2], [1], [1], [0, 0, 0, 1, 1, 1], [0], [0]>} : vector<2x16x64xbf16>, vector<2x16x64xbf16>, vector<2x16x16xf32> -> vector<2x16x16xf32>
    "tpu.trace_stop"() : () -> ()
    %cst_97 = arith.constant 1.250000e-01 : f32
    %241 = vector.broadcast %cst_97 : f32 to vector<2x16x16xf32>
    %242 = arith.mulf %240, %241 : vector<2x16x16xf32>
    %243 = vector.broadcast %26 : vector<2x1x16xf32> to vector<2x16x16xf32>
    %244 = arith.addf %242, %243 : vector<2x16x16xf32>
    %cst_98 = arith.constant dense<0xFF800000> : vector<2x16xf32>
    %245 = vector.multi_reduction <maximumf>, %244, %cst_98 [2] : vector<2x16x16xf32> to vector<2x16xf32>
    %246 = vector.shape_cast %245 : vector<2x16xf32> to vector<2x16x1xf32>
    %247 = vector.broadcast %246 : vector<2x16x1xf32> to vector<2x16x16xf32>
    %248 = arith.subf %244, %247 : vector<2x16x16xf32>
    %249 = math.exp %248 : vector<2x16x16xf32>
    %cst_99 = arith.constant dense<0.000000e+00> : vector<2x16xf32>
    %250 = vector.multi_reduction <add>, %249, %cst_99 [2] : vector<2x16x16xf32> to vector<2x16xf32>
    %251 = vector.shape_cast %250 : vector<2x16xf32> to vector<2x16x1xf32>
    %252 = tpu.reciprocal %251 {approx = true} : vector<2x16x1xf32> -> vector<2x16x1xf32>
    %253 = vector.broadcast %252 : vector<2x16x1xf32> to vector<2x16x16xf32>
    %254 = arith.mulf %249, %253 : vector<2x16x16xf32>
    %255 = arith.truncf %254 : vector<2x16x16xf32> to vector<2x16x16xbf16>
    "tpu.trace_start"() <{level = 10 : i32, message = "bqk,bkd->bqd"}> : () -> ()
    %cst_100 = arith.constant dense<0.000000e+00> : vector<2x16x64xf32>
    %256 = tpu.matmul %255, %239, %cst_100 {dimension_numbers = #tpu.dot_dimension_numbers<[2], [1], [1], [2], [0, 0, 0, 1, 1, 2], [0], [0]>} : vector<2x16x16xbf16>, vector<2x16x64xbf16>, vector<2x16x64xf32> -> vector<2x16x64xf32>
    "tpu.trace_stop"() : () -> ()
    %257 = vector.shape_cast %256 : vector<2x16x64xf32> to vector<32x64xf32>
    %258 = arith.truncf %257 : vector<32x64xf32> to vector<32x64xbf16>
    %c1_101 = arith.constant 1 : index
    %c0_102 = arith.constant 0 : index
    %c0_103 = arith.constant 0 : index
    %259 = vector.load %arg9[%c1_101, %c0_102, %c0_103] : memref<2x128x128xbf16, #tpu.memory_space<vmem>>, vector<1x128x128xbf16>
    %260 = vector.shape_cast %259 : vector<1x128x128xbf16> to vector<128x128xbf16>
    %261 = vector.extract_strided_slice %260 {offsets = [64, 0], sizes = [64, 128], strides = [1, 1]} : vector<128x128xbf16> to vector<64x128xbf16>
    %cst_104 = arith.constant dense<0.000000e+00> : vector<32x128xf32>
    %262 = tpu.matmul %258, %261, %cst_104 {dimension_numbers = #tpu.dot_dimension_numbers<[1], [0], [0], [1], [0, 0, 1, 1], [], []>} : vector<32x64xbf16>, vector<64x128xbf16>, vector<32x128xf32> -> vector<32x128xf32>
    %263 = arith.addf %233, %262 : vector<32x128xf32>
    %c1_105 = arith.constant 1 : index
    %c0_106 = arith.constant 0 : index
    %c0_107 = arith.constant 0 : index
    %264 = vector.load %arg10[%c1_105, %c0_106, %c0_107] : memref<2x1x128xf32, #tpu.memory_space<vmem>>, vector<1x1x128xf32>
    %265 = vector.shape_cast %264 : vector<1x1x128xf32> to vector<1x128xf32>
    %266 = vector.broadcast %265 : vector<1x128xf32> to vector<32x128xf32>
    %267 = arith.addf %263, %266 : vector<32x128xf32>
    %268 = arith.addf %188, %267 : vector<32x128xf32>
    %c1_108 = arith.constant 1 : index
    %c0_109 = arith.constant 0 : index
    %c0_110 = arith.constant 0 : index
    %269 = vector.load %arg11[%c1_108, %c0_109, %c0_110] : memref<2x1x128xf32, #tpu.memory_space<vmem>>, vector<1x1x128xf32>
    %270 = vector.shape_cast %269 : vector<1x1x128xf32> to vector<1x128xf32>
    %c1_111 = arith.constant 1 : index
    %c0_112 = arith.constant 0 : index
    %c0_113 = arith.constant 0 : index
    %271 = vector.load %arg12[%c1_111, %c0_112, %c0_113] : memref<2x1x128xf32, #tpu.memory_space<vmem>>, vector<1x1x128xf32>
    %272 = vector.shape_cast %271 : vector<1x1x128xf32> to vector<1x128xf32>
    %cst_114 = arith.constant dense<0.000000e+00> : vector<32xf32>
    %273 = vector.multi_reduction <add>, %268, %cst_114 [1] : vector<32x128xf32> to vector<32xf32>
    %274 = vector.shape_cast %273 : vector<32xf32> to vector<32x1xf32>
    %cst_115 = arith.constant 1.280000e+02 : f32
    %275 = vector.broadcast %cst_115 : f32 to vector<32x1xf32>
    %276 = arith.divf %274, %275 : vector<32x1xf32>
    %277 = vector.broadcast %276 : vector<32x1xf32> to vector<32x128xf32>
    %278 = arith.subf %268, %277 : vector<32x128xf32>
    %279 = arith.mulf %278, %278 : vector<32x128xf32>
    %cst_116 = arith.constant dense<0.000000e+00> : vector<32xf32>
    %280 = vector.multi_reduction <add>, %279, %cst_116 [1] : vector<32x128xf32> to vector<32xf32>
    %281 = vector.shape_cast %280 : vector<32xf32> to vector<32x1xf32>
    %cst_117 = arith.constant 1.280000e+02 : f32
    %282 = vector.broadcast %cst_117 : f32 to vector<32x1xf32>
    %283 = arith.divf %281, %282 : vector<32x1xf32>
    %284 = vector.broadcast %276 : vector<32x1xf32> to vector<32x128xf32>
    %285 = arith.subf %268, %284 : vector<32x128xf32>
    %cst_118 = arith.constant 9.99999996E-13 : f32
    %286 = vector.broadcast %cst_118 : f32 to vector<32x1xf32>
    %287 = arith.addf %283, %286 : vector<32x1xf32>
    %288 = math.rsqrt %287 : vector<32x1xf32>
    %289 = vector.broadcast %288 : vector<32x1xf32> to vector<32x128xf32>
    %290 = arith.mulf %285, %289 : vector<32x128xf32>
    %291 = vector.broadcast %270 : vector<1x128xf32> to vector<32x128xf32>
    %292 = arith.mulf %290, %291 : vector<32x128xf32>
    %293 = vector.broadcast %272 : vector<1x128xf32> to vector<32x128xf32>
    %294 = arith.addf %292, %293 : vector<32x128xf32>
    %295 = arith.truncf %294 : vector<32x128xf32> to vector<32x128xbf16>
    %c1_119 = arith.constant 1 : index
    %c0_120 = arith.constant 0 : index
    %c0_121 = arith.constant 0 : index
    %296 = vector.load %arg13[%c1_119, %c0_120, %c0_121] : memref<2x128x256xbf16, #tpu.memory_space<vmem>>, vector<1x128x256xbf16>
    %297 = vector.shape_cast %296 : vector<1x128x256xbf16> to vector<128x256xbf16>
    %cst_122 = arith.constant dense<0.000000e+00> : vector<32x256xf32>
    %298 = tpu.matmul %295, %297, %cst_122 {dimension_numbers = #tpu.dot_dimension_numbers<[1], [0], [0], [1], [0, 0, 1, 1], [], []>} : vector<32x128xbf16>, vector<128x256xbf16>, vector<32x256xf32> -> vector<32x256xf32>
    %c1_123 = arith.constant 1 : index
    %c0_124 = arith.constant 0 : index
    %c0_125 = arith.constant 0 : index
    %299 = vector.load %arg14[%c1_123, %c0_124, %c0_125] : memref<2x1x256xf32, #tpu.memory_space<vmem>>, vector<1x1x256xf32>
    %300 = vector.shape_cast %299 : vector<1x1x256xf32> to vector<1x256xf32>
    %301 = vector.broadcast %300 : vector<1x256xf32> to vector<32x256xf32>
    %302 = arith.addf %298, %301 : vector<32x256xf32>
    %303 = arith.mulf %302, %302 : vector<32x256xf32>
    %304 = arith.mulf %302, %303 : vector<32x256xf32>
    %cst_126 = arith.constant 4.471500e-02 : f32
    %305 = vector.broadcast %cst_126 : f32 to vector<32x256xf32>
    %306 = arith.mulf %305, %304 : vector<32x256xf32>
    %307 = arith.addf %302, %306 : vector<32x256xf32>
    %cst_127 = arith.constant 0.797884583 : f32
    %308 = vector.broadcast %cst_127 : f32 to vector<32x256xf32>
    %309 = arith.mulf %308, %307 : vector<32x256xf32>
    %310 = math.tanh %309 : vector<32x256xf32>
    %cst_128 = arith.constant 1.000000e+00 : f32
    %311 = vector.broadcast %cst_128 : f32 to vector<32x256xf32>
    %312 = arith.addf %311, %310 : vector<32x256xf32>
    %cst_129 = arith.constant 5.000000e-01 : f32
    %313 = vector.broadcast %cst_129 : f32 to vector<32x256xf32>
    %314 = arith.mulf %313, %312 : vector<32x256xf32>
    %315 = arith.mulf %302, %314 : vector<32x256xf32>
    %316 = arith.truncf %315 : vector<32x256xf32> to vector<32x256xbf16>
    %c1_130 = arith.constant 1 : index
    %c0_131 = arith.constant 0 : index
    %c0_132 = arith.constant 0 : index
    %317 = vector.load %arg15[%c1_130, %c0_131, %c0_132] : memref<2x256x128xbf16, #tpu.memory_space<vmem>>, vector<1x256x128xbf16>
    %318 = vector.shape_cast %317 : vector<1x256x128xbf16> to vector<256x128xbf16>
    %cst_133 = arith.constant dense<0.000000e+00> : vector<32x128xf32>
    %319 = tpu.matmul %316, %318, %cst_133 {dimension_numbers = #tpu.dot_dimension_numbers<[1], [0], [0], [1], [0, 0, 1, 1], [], []>} : vector<32x256xbf16>, vector<256x128xbf16>, vector<32x128xf32> -> vector<32x128xf32>
    %c1_134 = arith.constant 1 : index
    %c0_135 = arith.constant 0 : index
    %c0_136 = arith.constant 0 : index
    %320 = vector.load %arg16[%c1_134, %c0_135, %c0_136] : memref<2x1x128xf32, #tpu.memory_space<vmem>>, vector<1x1x128xf32>
    %321 = vector.shape_cast %320 : vector<1x1x128xf32> to vector<1x128xf32>
    %322 = vector.broadcast %321 : vector<1x128xf32> to vector<32x128xf32>
    %323 = arith.addf %319, %322 : vector<32x128xf32>
    %324 = arith.addf %294, %323 : vector<32x128xf32>
    %c1_137 = arith.constant 1 : index
    %c0_138 = arith.constant 0 : index
    %c0_139 = arith.constant 0 : index
    %325 = vector.load %arg17[%c1_137, %c0_138, %c0_139] : memref<2x1x128xf32, #tpu.memory_space<vmem>>, vector<1x1x128xf32>
    %326 = vector.shape_cast %325 : vector<1x1x128xf32> to vector<1x128xf32>
    %c1_140 = arith.constant 1 : index
    %c0_141 = arith.constant 0 : index
    %c0_142 = arith.constant 0 : index
    %327 = vector.load %arg18[%c1_140, %c0_141, %c0_142] : memref<2x1x128xf32, #tpu.memory_space<vmem>>, vector<1x1x128xf32>
    %328 = vector.shape_cast %327 : vector<1x1x128xf32> to vector<1x128xf32>
    %cst_143 = arith.constant dense<0.000000e+00> : vector<32xf32>
    %329 = vector.multi_reduction <add>, %324, %cst_143 [1] : vector<32x128xf32> to vector<32xf32>
    %330 = vector.shape_cast %329 : vector<32xf32> to vector<32x1xf32>
    %cst_144 = arith.constant 1.280000e+02 : f32
    %331 = vector.broadcast %cst_144 : f32 to vector<32x1xf32>
    %332 = arith.divf %330, %331 : vector<32x1xf32>
    %333 = vector.broadcast %332 : vector<32x1xf32> to vector<32x128xf32>
    %334 = arith.subf %324, %333 : vector<32x128xf32>
    %335 = arith.mulf %334, %334 : vector<32x128xf32>
    %cst_145 = arith.constant dense<0.000000e+00> : vector<32xf32>
    %336 = vector.multi_reduction <add>, %335, %cst_145 [1] : vector<32x128xf32> to vector<32xf32>
    %337 = vector.shape_cast %336 : vector<32xf32> to vector<32x1xf32>
    %cst_146 = arith.constant 1.280000e+02 : f32
    %338 = vector.broadcast %cst_146 : f32 to vector<32x1xf32>
    %339 = arith.divf %337, %338 : vector<32x1xf32>
    %340 = vector.broadcast %332 : vector<32x1xf32> to vector<32x128xf32>
    %341 = arith.subf %324, %340 : vector<32x128xf32>
    %cst_147 = arith.constant 9.99999996E-13 : f32
    %342 = vector.broadcast %cst_147 : f32 to vector<32x1xf32>
    %343 = arith.addf %339, %342 : vector<32x1xf32>
    %344 = math.rsqrt %343 : vector<32x1xf32>
    %345 = vector.broadcast %344 : vector<32x1xf32> to vector<32x128xf32>
    %346 = arith.mulf %341, %345 : vector<32x128xf32>
    %347 = vector.broadcast %326 : vector<1x128xf32> to vector<32x128xf32>
    %348 = arith.mulf %346, %347 : vector<32x128xf32>
    %349 = vector.broadcast %328 : vector<1x128xf32> to vector<32x128xf32>
    %350 = arith.addf %348, %349 : vector<32x128xf32>
    %351 = vector.shape_cast %350 : vector<32x128xf32> to vector<2x16x128xf32>
    %352 = vector.extract_strided_slice %351 {offsets = [0, 0, 0], sizes = [2, 1, 128], strides = [1, 1, 1]} : vector<2x16x128xf32> to vector<2x1x128xf32>
    %353 = vector.shape_cast %352 : vector<2x1x128xf32> to vector<2x128xf32>
    %354 = arith.truncf %353 : vector<2x128xf32> to vector<2x128xbf16>
    %c0_148 = arith.constant 0 : index
    %c0_149 = arith.constant 0 : index
    %355 = vector.load %arg19[%c0_148, %c0_149] : memref<128x128xbf16, #tpu.memory_space<vmem>>, vector<128x128xbf16>
    %cst_150 = arith.constant dense<0.000000e+00> : vector<2x128xf32>
    %356 = tpu.matmul %354, %355, %cst_150 {dimension_numbers = #tpu.dot_dimension_numbers<[1], [0], [0], [1], [0, 0, 1, 1], [], []>} : vector<2x128xbf16>, vector<128x128xbf16>, vector<2x128xf32> -> vector<2x128xf32>
    %c0_151 = arith.constant 0 : index
    %c0_152 = arith.constant 0 : index
    %357 = vector.load %arg20[%c0_151, %c0_152] : memref<1x128xf32, #tpu.memory_space<vmem>>, vector<1x128xf32>
    %358 = vector.broadcast %357 : vector<1x128xf32> to vector<2x128xf32>
    %359 = arith.addf %356, %358 : vector<2x128xf32>
    %360 = math.tanh %359 : vector<2x128xf32>
    %361 = arith.truncf %360 : vector<2x128xf32> to vector<2x128xbf16>
    %c0_153 = arith.constant 0 : index
    %c0_154 = arith.constant 0 : index
    %362 = vector.load %arg21[%c0_153, %c0_154] : memref<128x128xbf16, #tpu.memory_space<vmem>>, vector<128x128xbf16>
    %cst_155 = arith.constant dense<0.000000e+00> : vector<2x128xf32>
    %363 = tpu.matmul %361, %362, %cst_155 {dimension_numbers = #tpu.dot_dimension_numbers<[1], [0], [0], [1], [0, 0, 1, 1], [], []>} : vector<2x128xbf16>, vector<128x128xbf16>, vector<2x128xf32> -> vector<2x128xf32>
    %c0_156 = arith.constant 0 : index
    %c0_157 = arith.constant 0 : index
    %364 = vector.load %arg22[%c0_156, %c0_157] : memref<1x128xf32, #tpu.memory_space<vmem>>, vector<1x128xf32>
    %365 = vector.broadcast %364 : vector<1x128xf32> to vector<2x128xf32>
    %366 = arith.addf %363, %365 : vector<2x128xf32>
    %c0_158 = arith.constant 0 : index
    %c0_159 = arith.constant 0 : index
    %367 = vector.load %arg25[%c0_158, %c0_159] : memref<2x128xf32, #tpu.memory_space<vmem>>, vector<2x128xf32>
    tpu.vector_store %arg25[%c0_158, %c0_159], %366 {strides = array<i32>} : memref<2x128xf32, #tpu.memory_space<vmem>>, vector<2x128xf32>,
    %368 = arith.truncf %350 : vector<32x128xf32> to vector<32x128xbf16>
    %c0_160 = arith.constant 0 : index
    %c0_161 = arith.constant 0 : index
    %369 = vector.load %arg23[%c0_160, %c0_161] : memref<128x128xbf16, #tpu.memory_space<vmem>>, vector<128x128xbf16>
    %cst_162 = arith.constant dense<0.000000e+00> : vector<32x128xf32>
    %370 = tpu.matmul %368, %369, %cst_162 {dimension_numbers = #tpu.dot_dimension_numbers<[1], [0], [0], [1], [0, 0, 1, 1], [], []>} : vector<32x128xbf16>, vector<128x128xbf16>, vector<32x128xf32> -> vector<32x128xf32>
    %c0_163 = arith.constant 0 : index
    %c0_164 = arith.constant 0 : index
    %371 = vector.load %arg24[%c0_163, %c0_164] : memref<1x128xf32, #tpu.memory_space<vmem>>, vector<1x128xf32>
    %372 = vector.broadcast %371 : vector<1x128xf32> to vector<32x128xf32>
    %373 = arith.addf %370, %372 : vector<32x128xf32>
    %c0_165 = arith.constant 0 : index
    %c0_166 = arith.constant 0 : index
    %374 = vector.load %arg26[%c0_165, %c0_166] : memref<32x128xf32, #tpu.memory_space<vmem>>, vector<32x128xf32>
    tpu.vector_store %arg26[%c0_165, %c0_166], %373 {strides = array<i32>} : memref<32x128xf32, #tpu.memory_space<vmem>>, vector<32x128xf32>,
    %375 = tpu.iota {dimensions = array<i32: 1>} : vector<2x128xi32>
    %c7_i32 = arith.constant 7 : i32
    %376 = vector.broadcast %c7_i32 : i32 to vector<2x128xi32>
    %377 = arith.cmpi slt, %375, %376 : vector<2x128xi32>
    %cst_167 = arith.constant -1.000000e+30 : f32
    %378 = vector.broadcast %cst_167 : f32 to vector<2x128xf32>
    %379 = arith.select %377, %366, %378 : vector<2x128xi1>, vector<2x128xf32>
    %cst_168 = arith.constant dense<0xFF800000> : vector<2xf32>
    %380 = vector.multi_reduction <maximumf>, %379, %cst_168 [1] : vector<2x128xf32> to vector<2xf32>
    %381 = vector.shape_cast %380 : vector<2xf32> to vector<2x1xf32>
    %382 = vector.broadcast %381 : vector<2x1xf32> to vector<2x128xf32>
    %383 = arith.subf %379, %382 : vector<2x128xf32>
    %384 = math.exp %383 : vector<2x128xf32>
    %cst_169 = arith.constant dense<0.000000e+00> : vector<2xf32>
    %385 = vector.multi_reduction <add>, %384, %cst_169 [1] : vector<2x128xf32> to vector<2xf32>
    %386 = vector.shape_cast %385 : vector<2xf32> to vector<2x1xf32>
    %387 = math.log %386 : vector<2x1xf32>
    %388 = arith.addf %381, %387 : vector<2x1xf32>
    %c0_170 = arith.constant 0 : index
    %c0_171 = arith.constant 0 : index
    %389 = vector.load %arg3[%c0_170, %c0_171] : memref<2x128xf32, #tpu.memory_space<vmem>>, vector<2x128xf32>
    %390 = arith.mulf %366, %389 : vector<2x128xf32>
    %cst_172 = arith.constant dense<0.000000e+00> : vector<2xf32>
    %391 = vector.multi_reduction <add>, %390, %cst_172 [1] : vector<2x128xf32> to vector<2xf32>
    %392 = vector.shape_cast %391 : vector<2xf32> to vector<2x1xf32>
    %393 = arith.subf %388, %392 : vector<2x1xf32>
    %394 = vector.shape_cast %393 : vector<2x1xf32> to vector<1x2x1xf32>
    %cst_173 = arith.constant dense<0.000000e+00> : vector<1xf32>
    %395 = vector.multi_reduction <add>, %394, %cst_173 [1, 2] : vector<1x2x1xf32> to vector<1xf32>
    %396 = vector.shape_cast %395 : vector<1xf32> to vector<1x1x1xf32>
    %397 = vector.extract %396[0, 0, 0] : f32 from vector<1x1x1xf32>
    %cst_174 = arith.constant 2.000000e+00 : f32
    %398 = arith.divf %397, %cst_174 : f32
    %399 = tpu.iota {dimensions = array<i32: 1>} : vector<32x128xi32>
    %c9_i32 = arith.constant 9 : i32
    %400 = vector.broadcast %c9_i32 : i32 to vector<32x128xi32>
    %401 = arith.cmpi slt, %399, %400 : vector<32x128xi32>
    %cst_175 = arith.constant -1.000000e+30 : f32
    %402 = vector.broadcast %cst_175 : f32 to vector<32x128xf32>
    %403 = arith.select %401, %373, %402 : vector<32x128xi1>, vector<32x128xf32>
    %cst_176 = arith.constant dense<0xFF800000> : vector<32xf32>
    %404 = vector.multi_reduction <maximumf>, %403, %cst_176 [1] : vector<32x128xf32> to vector<32xf32>
    %405 = vector.shape_cast %404 : vector<32xf32> to vector<32x1xf32>
    %406 = vector.broadcast %405 : vector<32x1xf32> to vector<32x128xf32>
    %407 = arith.subf %403, %406 : vector<32x128xf32>
    %408 = math.exp %407 : vector<32x128xf32>
    %cst_177 = arith.constant dense<0.000000e+00> : vector<32xf32>
    %409 = vector.multi_reduction <add>, %408, %cst_177 [1] : vector<32x128xf32> to vector<32xf32>
    %410 = vector.shape_cast %409 : vector<32xf32> to vector<32x1xf32>
    %411 = math.log %410 : vector<32x1xf32>
    %412 = arith.addf %405, %411 : vector<32x1xf32>
    %c0_178 = arith.constant 0 : index
    %c0_179 = arith.constant 0 : index
    %413 = vector.load %arg4[%c0_178, %c0_179] : memref<32x128xf32, #tpu.memory_space<vmem>>, vector<32x128xf32>
    %414 = arith.mulf %373, %413 : vector<32x128xf32>
    %cst_180 = arith.constant dense<0.000000e+00> : vector<32xf32>
    %415 = vector.multi_reduction <add>, %414, %cst_180 [1] : vector<32x128xf32> to vector<32xf32>
    %416 = vector.shape_cast %415 : vector<32xf32> to vector<32x1xf32>
    %c0_181 = arith.constant 0 : index
    %c0_182 = arith.constant 0 : index
    %417 = vector.load %arg2[%c0_181, %c0_182] : memref<32x1xf32, #tpu.memory_space<vmem>>, vector<32x1xf32>
    %418 = arith.subf %412, %416 : vector<32x1xf32>
    %419 = arith.mulf %417, %418 : vector<32x1xf32>
    %420 = vector.shape_cast %419 : vector<32x1xf32> to vector<1x32x1xf32>
    %cst_183 = arith.constant dense<0.000000e+00> : vector<1xf32>
    %421 = vector.multi_reduction <add>, %420, %cst_183 [1, 2] : vector<1x32x1xf32> to vector<1xf32>
    %422 = vector.shape_cast %421 : vector<1xf32> to vector<1x1x1xf32>
    %423 = vector.extract %422[0, 0, 0] : f32 from vector<1x1x1xf32>
    %424 = vector.shape_cast %417 : vector<32x1xf32> to vector<1x32x1xf32>
    %cst_184 = arith.constant dense<0.000000e+00> : vector<1xf32>
    %425 = vector.multi_reduction <add>, %424, %cst_184 [1, 2] : vector<1x32x1xf32> to vector<1xf32>
    %426 = vector.shape_cast %425 : vector<1xf32> to vector<1x1x1xf32>
    %427 = vector.extract %426[0, 0, 0] : f32 from vector<1x1x1xf32>
    %428 = arith.divf %423, %427 : f32
    %429 = arith.addf %398, %428 : f32
    %430 = vector.broadcast %429 : f32 to vector<1x1xf32>
    %c0_185 = arith.constant 0 : index
    %c0_186 = arith.constant 0 : index
    %431 = vector.load %arg27[%c0_185, %c0_186] : memref<1x1xf32, #tpu.memory_space<vmem>>, vector<1x1xf32>
    tpu.vector_store %arg27[%c0_185, %c0_186], %430 {strides = array<i32>} : memref<1x1xf32, #tpu.memory_space<vmem>>, vector<1x1xf32>,
    return
  }
}

</mosaic_0001>

<llo_original>
// kernel: eq.15
$region0: #{eq.15}
  %s0 = inlined_call_operand.vmem [shape: s32[2,16], index: 0, kind: input, shape index: {}]
  %s1 = inlined_call_operand.vmem [shape: s32[32], index: 1, kind: output, shape index: {}]
  $region1: #{eq.15} parent=0
    #allocation0 [shape = 'u8[4096]{0}', space=vmem, size = 0x1000, scoped, tag = 'scoped mem for output reshape']
    #allocation1 [shape = 'u8[4096]{0}', space=vmem, size = 0x1000, scoped, tag = 'scoped mem for input reshape']
    %s3 = sshll.u32 1, 2
    %s4 = ssub.s32 %s3, 1
    %v5 = vld [vmem:[%s0] sm:%s4]
    %6 = vst [vmem:[#allocation1] sm:%s4] %v5
    %v7 = vld [vmem:[#allocation1] sm:$0x1]
    %vm8 = vcmask 130048
    %9 = vst.msk [vmem:[#allocation0] sm:$0x1] %vm8, %v7
    %s10 = scalar_lea.vmem [#allocation1], 1
    %v11 = vld [vmem:[%s10] sm:$0x1]
    %12 = vrot.lane.b32.xlu0 %v11, 16
    %v13 = vpop.permute.xlu0 %12
    %vm14 = vcmask 261248
    %15 = vst.msk [vmem:[#allocation0] sm:$0x1] %vm14, %v13
    %s17 = sshll.u32 1, 1
    %s18 = ssub.s32 %s17, 1
    %v20 = vld [vmem:[#allocation0] sm:%s18]
    %s21 = sshll.u32 1, 1
    %s22 = ssub.s32 %s21, 1
    %23 = vst [vmem:[%s1] sm:%s22] %v20

// kernel: joint_bert_forward.1
$region0: #{joint_bert_forward.1}
  #allocation0 [shape = 'u32[]', space=smem, size = 0x4, offset = 0x4, fixed_abs, tag = 'smem constant byte address 0x4 - core index']
  #allocation1 [shape = 'u32[144,128]{1,0:T(1,128)}', space=vmem, size = 0x12000, scoped, tag = 'internal scratch']
  %s0 = inlined_call_operand.vmem [shape: f32[32,128], index: 0, kind: input, shape index: {}]
  %s1 = inlined_call_operand.vmem [shape: f32[2,16], index: 1, kind: input, shape index: {}]
  %s2 = inlined_call_operand.vmem [shape: f32[32,1], index: 2, kind: input, shape index: {}]
  %s3 = inlined_call_operand.vmem [shape: f32[2,128], index: 3, kind: input, shape index: {}]
  %s4 = inlined_call_operand.vmem [shape: f32[32,128], index: 4, kind: input, shape index: {}]
  %s5 = inlined_call_operand.vmem [shape: f32[1,128], index: 5, kind: input, shape index: {}]
  %s6 = inlined_call_operand.hbm [shape: f32[1,128], index: 6, kind: input, shape index: {}]
  %s7 = inlined_call_operand.vmem [shape: bf16[2,128,384], index: 7, kind: input, shape index: {}]
  %s8 = inlined_call_operand.vmem [shape: f32[2,1,384], index: 8, kind: input, shape index: {}]
  %s9 = inlined_call_operand.hbm [shape: bf16[2,128,128], index: 9, kind: input, shape index: {}]
  %s10 = inlined_call_operand.vmem [shape: f32[2,1,128], index: 10, kind: input, shape index: {}]
  %s11 = inlined_call_operand.vmem [shape: f32[2,1,128], index: 11, kind: input, shape index: {}]
  %s12 = inlined_call_operand.vmem [shape: f32[2,1,128], index: 12, kind: input, shape index: {}]
  %s13 = inlined_call_operand.vmem [shape: bf16[2,128,256], index: 13, kind: input, shape index: {}]
  %s14 = inlined_call_operand.vmem [shape: f32[2,1,256], index: 14, kind: input, shape index: {}]
  %s15 = inlined_call_operand.vmem [shape: bf16[2,256,128], index: 15, kind: input, shape index: {}]
  %s16 = inlined_call_operand.vmem [shape: f32[2,1,128], index: 16, kind: input, shape index: {}]
  %s17 = inlined_call_operand.vmem [shape: f32[2,1,128], index: 17, kind: input, shape index: {}]
  %s18 = inlined_call_operand.vmem [shape: f32[2,1,128], index: 18, kind: input, shape index: {}]
  %s19 = inlined_call_operand.hbm [shape: bf16[128,128], index: 19, kind: input, shape index: {}]
  %s20 = inlined_call_operand.hbm [shape: f32[1,128], index: 20, kind: input, shape index: {}]
  %s21 = inlined_call_operand.hbm [shape: bf16[128,128], index: 21, kind: input, shape index: {}]
  %s22 = inlined_call_operand.hbm [shape: f32[1,128], index: 22, kind: input, shape index: {}]
  %s23 = inlined_call_operand.hbm [shape: bf16[128,128], index: 23, kind: input, shape index: {}]
  %s24 = inlined_call_operand.hbm [shape: f32[1,128], index: 24, kind: input, shape index: {}]
  %s25 = inlined_call_operand.hbm [shape: f32[2,128], index: 25, kind: output, shape index: {0}]
  %s26 = inlined_call_operand.vmem [shape: f32[32,128], index: 26, kind: output, shape index: {1}]
  %s27 = inlined_call_operand.hbm [shape: f32[1,1], index: 27, kind: output, shape index: {2}]
  %28 = xla_tuple %s25, %s26, %s27
  %s29 = sld [smem:[#allocation0]]
  $region158: #{joint_bert_forward.1} parent=0
    _
  %s31 = ssub.s32 1, %s29
  %s32 = scalar_select 0, %s31, %s29
  $region1: #{joint_bert_forward.1} parent=0
    #allocation2 [shape = 'u8[512]{0}', space=vmem, size = 0x400, scoped, tag = 'input window, operand 6, single buffered']
    #allocation3 [shape = 's32[1]{0}', space=sflag, size = 0x4, scoped, tag = 'scoped memory for joint_bert_forward.1']
    #allocation4 [shape = 's32[1]{0}', space=sflag, size = 0x4, scoped, tag = 'scoped memory for joint_bert_forward.1']
    #allocation5 [shape = 'u8[65536]{0}', space=vmem, size = 0x10000, scoped, tag = 'input window, operand 9, single buffered']
    #allocation6 [shape = 's32[1]{0}', space=sflag, size = 0x4, scoped, tag = 'scoped memory for joint_bert_forward.1']
    #allocation7 [shape = 'u8[32768]{0}', space=vmem, size = 0x8000, scoped, tag = 'input window, operand 19, single buffered']
    #allocation8 [shape = 'u8[512]{0}', space=vmem, size = 0x400, scoped, tag = 'input window, operand 20, single buffered']
    #allocation9 [shape = 's32[1]{0}', space=sflag, size = 0x4, scoped, tag = 'scoped memory for joint_bert_forward.1']
    #allocation10 [shape = 'u8[32768]{0}', space=vmem, size = 0x8000, scoped, tag = 'input window, operand 21, single buffered']
    #allocation11 [shape = 'u8[512]{0}', space=vmem, size = 0x400, scoped, tag = 'input window, operand 22, single buffered']
    #allocation12 [shape = 's32[1]{0}', space=sflag, size = 0x4, scoped, tag = 'scoped memory for joint_bert_forward.1']
    #allocation13 [shape = 'u8[32768]{0}', space=vmem, size = 0x8000, scoped, tag = 'input window, operand 23, single buffered']
    #allocation14 [shape = 'u8[512]{0}', space=vmem, size = 0x400, scoped, tag = 'input window, operand 24, single buffered']
    #allocation15 [shape = 's32[1]{0}', space=sflag, size = 0x4, scoped, tag = 'scoped memory for joint_bert_forward.1']
    #allocation16 [shape = 'u8[1024]{0}', space=vmem, size = 0x400, scoped, tag = 'output window, operand 0, single buffered']
    #allocation17 [shape = 'u8[512]{0}', space=vmem, size = 0x400, scoped, tag = 'output window, operand 2, single buffered']
    #allocation18 [shape = 's32[1]{0}', space=sflag, size = 0x4, scoped, tag = 'scoped memory for joint_bert_forward.1']
    %33 = vsyncpa [#allocation3], 0
    %34 = vsyncpa [#allocation6], 0
    %35 = vsyncpa [#allocation9], 0
    %36 = vsyncpa [#allocation12], 0
    %37 = vsyncpa [#allocation15], 0
    %38 = vsyncpa [#allocation4], 0
    %39 = vsyncpa [#allocation18], 0
    // Predicated region
    $region2: #{joint_bert_forward.1} parent=1 // pred_check
      _
    $region3: #{joint_bert_forward.1} parent=1 // pred_check_branch
      %41 = sbr.rel (0) target = $region5
    $region4: #{joint_bert_forward.1} parent=1 // pred_region
      _
    $region5: #{joint_bert_forward.1} parent=1 // pred_fallthru
      _
    // Predicated region
    $region6: #{joint_bert_forward.1} parent=1 // pred_check
      _
    $region7: #{joint_bert_forward.1} parent=1 // pred_check_branch
      %43 = sbr.rel (0) target = $region9
    $region8: #{joint_bert_forward.1} parent=1 // pred_region
      _
    $region9: #{joint_bert_forward.1} parent=1 // pred_fallthru
      _
    // Predicated region
    $region10: #{joint_bert_forward.1} parent=1 // pred_check
      _
    $region11: #{joint_bert_forward.1} parent=1 // pred_check_branch
      %45 = sbr.rel (0) target = $region13
    $region12: #{joint_bert_forward.1} parent=1 // pred_region
      _
    $region13: #{joint_bert_forward.1} parent=1 // pred_fallthru
      _
    // Predicated region
    $region14: #{joint_bert_forward.1} parent=1 // pred_check
      _
    $region15: #{joint_bert_forward.1} parent=1 // pred_check_branch
      %47 = sbr.rel (0) target = $region17
    $region16: #{joint_bert_forward.1} parent=1 // pred_region
      _
    $region17: #{joint_bert_forward.1} parent=1 // pred_fallthru
      _
    // Predicated region
    $region18: #{joint_bert_forward.1} parent=1 // pred_check
      _
    $region19: #{joint_bert_forward.1} parent=1 // pred_check_branch
      %49 = sbr.rel (0) target = $region21
    $region20: #{joint_bert_forward.1} parent=1 // pred_region
      _
    $region21: #{joint_bert_forward.1} parent=1 // pred_fallthru
      _
    // Predicated region
    $region22: #{joint_bert_forward.1} parent=1 // pred_check
      _
    $region23: #{joint_bert_forward.1} parent=1 // pred_check_branch
      %51 = sbr.rel (0) target = $region25
    $region24: #{joint_bert_forward.1} parent=1 // pred_region
      _
    $region25: #{joint_bert_forward.1} parent=1 // pred_fallthru
      _
    // Predicated region
    $region26: #{joint_bert_forward.1} parent=1 // pred_check
      _
    $region27: #{joint_bert_forward.1} parent=1 // pred_check_branch
      %53 = sbr.rel (0) target = $region29
    $region28: #{joint_bert_forward.1} parent=1 // pred_region
      %s55 = ssub.s32 16, 16
      %56 = vsyncadd [#allocation3], %s55
      %s58 = sshll.u32 [#allocation2], 4
      %s59 = int_to_ptr.vmem [resolvable:$true] %s58
      %61 = dma.hbm_to_vmem [thread:$0]  %s6, 16, %s59, [#allocation3]
    $region29: #{joint_bert_forward.1} parent=1 // pred_fallthru
      _
    // Predicated region
    $region30: #{joint_bert_forward.1} parent=1 // pred_check
      _
    $region31: #{joint_bert_forward.1} parent=1 // pred_check_branch
      %63 = sbr.rel (0) target = $region33
    $region32: #{joint_bert_forward.1} parent=1 // pred_region
      _
    $region33: #{joint_bert_forward.1} parent=1 // pred_fallthru
      _
    // Predicated region
    $region34: #{joint_bert_forward.1} parent=1 // pred_check
      _
    $region35: #{joint_bert_forward.1} parent=1 // pred_check_branch
      %65 = sbr.rel (0) target = $region37
    $region36: #{joint_bert_forward.1} parent=1 // pred_region
      _
    $region37: #{joint_bert_forward.1} parent=1 // pred_fallthru
      _
    // Predicated region
    $region38: #{joint_bert_forward.1} parent=1 // pred_check
      _
    $region39: #{joint_bert_forward.1} parent=1 // pred_check_branch
      %67 = sbr.rel (0) target = $region41
    $region40: #{joint_bert_forward.1} parent=1 // pred_region
      %s69 = ssub.s32 2048, 2048
      %70 = vsyncadd [#allocation6], %s69
      %s71 = sshll.u32 [#allocation5], 4
      %s72 = int_to_ptr.vmem [resolvable:$true] %s71
      %77 = dma.hbm_to_vmem [thread:$0]  %s9, 2048, %s72, [#allocation6], 64, 64, 4
    $region41: #{joint_bert_forward.1} parent=1 // pred_fallthru
      _
    // Predicated region
    $region42: #{joint_bert_forward.1} parent=1 // pred_check
      _
    $region43: #{joint_bert_forward.1} parent=1 // pred_check_branch
      %79 = sbr.rel (0) target = $region45
    $region44: #{joint_bert_forward.1} parent=1 // pred_region
      _
    $region45: #{joint_bert_forward.1} parent=1 // pred_fallthru
      _
    // Predicated region
    $region46: #{joint_bert_forward.1} parent=1 // pred_check
      _
    $region47: #{joint_bert_forward.1} parent=1 // pred_check_branch
      %81 = sbr.rel (0) target = $region49
    $region48: #{joint_bert_forward.1} parent=1 // pred_region
      _
    $region49: #{joint_bert_forward.1} parent=1 // pred_fallthru
      _
    // Predicated region
    $region50: #{joint_bert_forward.1} parent=1 // pred_check
      _
    $region51: #{joint_bert_forward.1} parent=1 // pred_check_branch
      %83 = sbr.rel (0) target = $region53
    $region52: #{joint_bert_forward.1} parent=1 // pred_region
      _
    $region53: #{joint_bert_forward.1} parent=1 // pred_fallthru
      _
    // Predicated region
    $region54: #{joint_bert_forward.1} parent=1 // pred_check
      _
    $region55: #{joint_bert_forward.1} parent=1 // pred_check_branch
      %85 = sbr.rel (0) target = $region57
    $region56: #{joint_bert_forward.1} parent=1 // pred_region
      _
    $region57: #{joint_bert_forward.1} parent=1 // pred_fallthru
      _
    // Predicated region
    $region58: #{joint_bert_forward.1} parent=1 // pred_check
      _
    $region59: #{joint_bert_forward.1} parent=1 // pred_check_branch
      %87 = sbr.rel (0) target = $region61
    $region60: #{joint_bert_forward.1} parent=1 // pred_region
      _
    $region61: #{joint_bert_forward.1} parent=1 // pred_fallthru
      _
    // Predicated region
    $region62: #{joint_bert_forward.1} parent=1 // pred_check
      _
    $region63: #{joint_bert_forward.1} parent=1 // pred_check_branch
      %89 = sbr.rel (0) target = $region65
    $region64: #{joint_bert_forward.1} parent=1 // pred_region
      _
    $region65: #{joint_bert_forward.1} parent=1 // pred_fallthru
      _
    // Predicated region
    $region66: #{joint_bert_forward.1} parent=1 // pred_check
      _
    $region67: #{joint_bert_forward.1} parent=1 // pred_check_branch
      %91 = sbr.rel (0) target = $region69
    $region68: #{joint_bert_forward.1} parent=1 // pred_region
      _
    $region69: #{joint_bert_forward.1} parent=1 // pred_fallthru
      _
    // Predicated region
    $region70: #{joint_bert_forward.1} parent=1 // pred_check
      _
    $region71: #{joint_bert_forward.1} parent=1 // pred_check_branch
      %93 = sbr.rel (0) target = $region73
    $region72: #{joint_bert_forward.1} parent=1 // pred_region
      _
    $region73: #{joint_bert_forward.1} parent=1 // pred_fallthru
      _
    // Predicated region
    $region74: #{joint_bert_forward.1} parent=1 // pred_check
      _
    $region75: #{joint_bert_forward.1} parent=1 // pred_check_branch
      %95 = sbr.rel (0) target = $region77
    $region76: #{joint_bert_forward.1} parent=1 // pred_region
      _
    $region77: #{joint_bert_forward.1} parent=1 // pred_fallthru
      _
    // Predicated region
    $region78: #{joint_bert_forward.1} parent=1 // pred_check
      _
    $region79: #{joint_bert_forward.1} parent=1 // pred_check_branch
      %97 = sbr.rel (0) target = $region81
    $region80: #{joint_bert_forward.1} parent=1 // pred_region
      %s99 = ssub.s32 1024, 1024
      %100 = vsyncadd [#allocation6], %s99
      %s101 = sshll.u32 [#allocation7], 4
      %s102 = int_to_ptr.vmem [resolvable:$true] %s101
      %107 = dma.hbm_to_vmem [thread:$0]  %s19, 1024, %s102, [#allocation6], 64, 64, 4
    $region81: #{joint_bert_forward.1} parent=1 // pred_fallthru
      _
    // Predicated region
    $region82: #{joint_bert_forward.1} parent=1 // pred_check
      _
    $region83: #{joint_bert_forward.1} parent=1 // pred_check_branch
      %109 = sbr.rel (0) target = $region85
    $region84: #{joint_bert_forward.1} parent=1 // pred_region
      %s111 = ssub.s32 16, 16
      %112 = vsyncadd [#allocation9], %s111
      %s114 = sshll.u32 [#allocation8], 4
      %s115 = int_to_ptr.vmem [resolvable:$true] %s114
      %117 = dma.hbm_to_vmem [thread:$0]  %s20, 16, %s115, [#allocation9]
    $region85: #{joint_bert_forward.1} parent=1 // pred_fallthru
      _
    // Predicated region
    $region86: #{joint_bert_forward.1} parent=1 // pred_check
      _
    $region87: #{joint_bert_forward.1} parent=1 // pred_check_branch
      %119 = sbr.rel (0) target = $region89
    $region88: #{joint_bert_forward.1} parent=1 // pred_region
      %s121 = ssub.s32 1024, 1024
      %122 = vsyncadd [#allocation9], %s121
      %s123 = sshll.u32 [#allocation10], 4
      %s124 = int_to_ptr.vmem [resolvable:$true] %s123
      %129 = dma.hbm_to_vmem [thread:$0]  %s21, 1024, %s124, [#allocation9], 64, 64, 4
    $region89: #{joint_bert_forward.1} parent=1 // pred_fallthru
      _
    // Predicated region
    $region90: #{joint_bert_forward.1} parent=1 // pred_check
      _
    $region91: #{joint_bert_forward.1} parent=1 // pred_check_branch
      %131 = sbr.rel (0) target = $region93
    $region92: #{joint_bert_forward.1} parent=1 // pred_region
      %s133 = ssub.s32 16, 16
      %134 = vsyncadd [#allocation12], %s133
      %s136 = sshll.u32 [#allocation11], 4
      %s137 = int_to_ptr.vmem [resolvable:$true] %s136
      %139 = dma.hbm_to_vmem [thread:$0]  %s22, 16, %s137, [#allocation12]
    $region93: #{joint_bert_forward.1} parent=1 // pred_fallthru
      _
    // Predicated region
    $region94: #{joint_bert_forward.1} parent=1 // pred_check
      _
    $region95: #{joint_bert_forward.1} parent=1 // pred_check_branch
      %141 = sbr.rel (0) target = $region97
    $region96: #{joint_bert_forward.1} parent=1 // pred_region
      %s143 = ssub.s32 1024, 1024
      %144 = vsyncadd [#allocation12], %s143
      %s145 = sshll.u32 [#allocation13], 4
      %s146 = int_to_ptr.vmem [resolvable:$true] %s145
      %151 = dma.hbm_to_vmem [thread:$0]  %s23, 1024, %s146, [#allocation12], 64, 64, 4
    $region97: #{joint_bert_forward.1} parent=1 // pred_fallthru
      _
    // Predicated region
    $region98: #{joint_bert_forward.1} parent=1 // pred_check
      _
    $region99: #{joint_bert_forward.1} parent=1 // pred_check_branch
      %153 = sbr.rel (0) target = $region101
    $region100: #{joint_bert_forward.1} parent=1 // pred_region
      %s155 = ssub.s32 16, 16
      %156 = vsyncadd [#allocation15], %s155
      %s158 = sshll.u32 [#allocation14], 4
      %s159 = int_to_ptr.vmem [resolvable:$true] %s158
      %161 = dma.hbm_to_vmem [thread:$0]  %s24, 16, %s159, [#allocation15]
    $region101: #{joint_bert_forward.1} parent=1 // pred_fallthru
      _
    // Predicated region
    $region102: #{joint_bert_forward.1} parent=1 // pred_check
      _
    $region103: #{joint_bert_forward.1} parent=1 // pred_check_branch
      %163 = sbr.rel (0) target = $region105
    $region104: #{joint_bert_forward.1} parent=1 // pred_region
      %164 = dma.done [#allocation3], 16
    $region105: #{joint_bert_forward.1} parent=1 // pred_fallthru
      _
    // Predicated region
    $region106: #{joint_bert_forward.1} parent=1 // pred_check
      _
    $region107: #{joint_bert_forward.1} parent=1 // pred_check_branch
      %166 = sbr.rel (0) target = $region109
    $region108: #{joint_bert_forward.1} parent=1 // pred_region
      %167 = dma.done [#allocation6], 2048
    $region109: #{joint_bert_forward.1} parent=1 // pred_fallthru
      _
    // Predicated region
    $region110: #{joint_bert_forward.1} parent=1 // pred_check
      _
    $region111: #{joint_bert_forward.1} parent=1 // pred_check_branch
      %169 = sbr.rel (0) target = $region113
    $region112: #{joint_bert_forward.1} parent=1 // pred_region
      %170 = dma.done [#allocation6], 1024
    $region113: #{joint_bert_forward.1} parent=1 // pred_fallthru
      _
    // Predicated region
    $region114: #{joint_bert_forward.1} parent=1 // pred_check
      _
    $region115: #{joint_bert_forward.1} parent=1 // pred_check_branch
      %172 = sbr.rel (0) target = $region117
    $region116: #{joint_bert_forward.1} parent=1 // pred_region
      %173 = dma.done [#allocation9], 16
    $region117: #{joint_bert_forward.1} parent=1 // pred_fallthru
      _
    // Predicated region
    $region118: #{joint_bert_forward.1} parent=1 // pred_check
      _
    $region119: #{joint_bert_forward.1} parent=1 // pred_check_branch
      %175 = sbr.rel (0) target = $region121
    $region120: #{joint_bert_forward.1} parent=1 // pred_region
      %176 = dma.done [#allocation9], 1024
    $region121: #{joint_bert_forward.1} parent=1 // pred_fallthru
      _
    // Predicated region
    $region122: #{joint_bert_forward.1} parent=1 // pred_check
      _
    $region123: #{joint_bert_forward.1} parent=1 // pred_check_branch
      %178 = sbr.rel (0) target = $region125
    $region124: #{joint_bert_forward.1} parent=1 // pred_region
      %179 = dma.done [#allocation12], 16
    $region125: #{joint_bert_forward.1} parent=1 // pred_fallthru
      _
    // Predicated region
    $region126: #{joint_bert_forward.1} parent=1 // pred_check
      _
    $region127: #{joint_bert_forward.1} parent=1 // pred_check_branch
      %181 = sbr.rel (0) target = $region129
    $region128: #{joint_bert_forward.1} parent=1 // pred_region
      %182 = dma.done [#allocation12], 1024
    $region129: #{joint_bert_forward.1} parent=1 // pred_fallthru
      _
    // Predicated region
    $region130: #{joint_bert_forward.1} parent=1 // pred_check
      _
    $region131: #{joint_bert_forward.1} parent=1 // pred_check_branch
      %184 = sbr.rel (0) target = $region133
    $region132: #{joint_bert_forward.1} parent=1 // pred_region
      %185 = dma.done [#allocation15], 16
    $region133: #{joint_bert_forward.1} parent=1 // pred_fallthru
      _
    %v187 = vld [vmem:[%s0] sm:$0xff]
    %v188 = vld [vmem:[%s0 + $0x8] sm:$0xff]
    %v189 = vld [vmem:[%s0 + $0x10] sm:$0xff]
    %v190 = vld [vmem:[%s0 + $0x18] sm:$0xff]
    %v191 = vld [vmem:[%s5] sm:$0x1]
    %v192 = vld [vmem:[#allocation2] sm:$0x1]
    %193 = vadd.xlane.f32.xlu0 %v187
    %v194 = vpop.xlane.xlu0 %193
    %195 = vadd.xlane.f32.xlu0 %v188
    %v196 = vpop.xlane.xlu0 %195
    %197 = vadd.xlane.f32.xlu0 %v189
    %v198 = vpop.xlane.xlu0 %197
    %199 = vadd.xlane.f32.xlu0 %v190
    %v200 = vpop.xlane.xlu0 %199
    %v201 = vrcp.pop 128.0
    %v202 = vmul.f32 %v194, %v201
    %v203 = vmul.f32 %v196, %v201
    %v204 = vmul.f32 %v198, %v201
    %v205 = vmul.f32 %v200, %v201
    %v206 = vsub.f32 %v187, %v202
    %v207 = vsub.f32 %v188, %v203
    %v208 = vsub.f32 %v189, %v204
    %v209 = vsub.f32 %v190, %v205
    %v210 = vmul.f32 %v206, %v206
    %v211 = vmul.f32 %v207, %v207
    %v212 = vmul.f32 %v208, %v208
    %v213 = vmul.f32 %v209, %v209
    %214 = vadd.xlane.f32.xlu0 %v210
    %v215 = vpop.xlane.xlu0 %214
    %216 = vadd.xlane.f32.xlu0 %v211
    %v217 = vpop.xlane.xlu0 %216
    %218 = vadd.xlane.f32.xlu0 %v212
    %v219 = vpop.xlane.xlu0 %218
    %220 = vadd.xlane.f32.xlu0 %v213
    %v221 = vpop.xlane.xlu0 %220
    %v222 = vmul.f32 %v215, %v201
    %v223 = vmul.f32 %v217, %v201
    %v224 = vmul.f32 %v219, %v201
    %v225 = vmul.f32 %v221, %v201
    %v226 = vadd.f32 %v222, 1e-12
    %v227 = vadd.f32 %v223, 1e-12
    %v228 = vadd.f32 %v224, 1e-12
    %v229 = vadd.f32 %v225, 1e-12
    %v230 = vrsqrt.pop %v226
    %v231 = vrsqrt.pop %v227
    %v232 = vrsqrt.pop %v228
    %v233 = vrsqrt.pop %v229
    %v234 = vmul.f32 %v206, %v230
    %v235 = vmul.f32 %v207, %v231
    %v236 = vmul.f32 %v208, %v232
    %v237 = vmul.f32 %v209, %v233
    %v239 = vlaneseq
    %v240 = vshrl.u32 %v239, 7
    %v241 = vsub.s32 0, %v240
    %v242 = vrot.slane %v191, %v241
    %v244 = vmul.f32 %v234, %v242
    %v245 = vmul.f32 %v235, %v242
    %v246 = vmul.f32 %v236, %v242
    %v247 = vmul.f32 %v237, %v242
    %v249 = vlaneseq
    %v250 = vshrl.u32 %v249, 7
    %v251 = vsub.s32 0, %v250
    %v252 = vrot.slane %v192, %v251
    %v254 = vadd.f32 %v244, %v252
    %v255 = vadd.f32 %v245, %v252
    %v256 = vadd.f32 %v246, %v252
    %v257 = vadd.f32 %v247, %v252
    %v258 = vld [vmem:[%s1] sm:$0x3]
    %v261 = vunpack.c.l.s4 1966171168
    %v262 = vunpack.c.0.s8 %v261
    %v263 = vlaneseq
    %v264 = vshrl.u32 %v263, 7
    %v265 = vsub.s32 %v262, %v264
    %v266 = vrot.slane %v258, %v265
    %v267 = vcombine.high %v266, %v266
    %v269 = vunpack.c.l.s4 1966171168
    %v270 = vunpack.c.0.s8 %v269
    %v271 = vlaneseq
    %v272 = vshrl.u32 %v271, 7
    %v273 = vsub.s32 %v270, %v272
    %v274 = vrot.slane %v266, %v273
    %v276 = vunpack.c.l.s4 1966171168
    %v277 = vunpack.c.0.s8 %v276
    %v278 = vlaneseq
    %v279 = vshrl.u32 %v278, 7
    %v280 = vsub.s32 %v277, %v279
    %v281 = vrot.slane %v267, %v280
    %v282 = vpack.c.bf16 %v255, %v254
    %v283 = vpack.c.bf16 %v257, %v256
    %v284 = vld [vmem:[%s7] sm:$0xff]
    %v285 = vld [vmem:[%s7 + $0x8] sm:$0xf]
    %v286 = vld [vmem:[%s7 + $0xc] sm:$0xff]
    %v287 = vld [vmem:[%s7 + $0x14] sm:$0xf]
    %v288 = vld [vmem:[%s7 + $0x18] sm:$0xff]
    %v289 = vld [vmem:[%s7 + $0x20] sm:$0xf]
    %v290 = vld [vmem:[%s7 + $0x24] sm:$0xff]
    %v291 = vld [vmem:[%s7 + $0x2c] sm:$0xf]
    %v292 = vld [vmem:[%s7 + $0x30] sm:$0xff]
    %v293 = vld [vmem:[%s7 + $0x38] sm:$0xf]
    %v294 = vld [vmem:[%s7 + $0x3c] sm:$0xff]
    %v295 = vld [vmem:[%s7 + $0x44] sm:$0xf]
    %v296 = vld [vmem:[%s7 + $0x48] sm:$0xff]
    %v297 = vld [vmem:[%s7 + $0x50] sm:$0xf]
    %v298 = vld [vmem:[%s7 + $0x54] sm:$0xff]
    %v299 = vld [vmem:[%s7 + $0x5c] sm:$0xf]
    %v300 = vld [vmem:[%s7 + $0x60] sm:$0xff]
    %v301 = vld [vmem:[%s7 + $0x68] sm:$0xf]
    %v302 = vld [vmem:[%s7 + $0x6c] sm:$0xff]
    %v303 = vld [vmem:[%s7 + $0x74] sm:$0xf]
    %v304 = vld [vmem:[%s7 + $0x78] sm:$0xff]
    %v305 = vld [vmem:[%s7 + $0x80] sm:$0xf]
    %v306 = vld [vmem:[%s7 + $0x84] sm:$0xff]
    %v307 = vld [vmem:[%s7 + $0x8c] sm:$0xf]
    %v308 = vld [vmem:[%s7 + $0x90] sm:$0xff]
    %v309 = vld [vmem:[%s7 + $0x98] sm:$0xf]
    %v310 = vld [vmem:[%s7 + $0x9c] sm:$0xff]
    %v311 = vld [vmem:[%s7 + $0xa4] sm:$0xf]
    %v312 = vld [vmem:[%s7 + $0xa8] sm:$0xff]
    %v313 = vld [vmem:[%s7 + $0xb0] sm:$0xf]
    %v314 = vld [vmem:[%s7 + $0xb4] sm:$0xff]
    %v315 = vld [vmem:[%s7 + $0xbc] sm:$0xf]
    %v316 = vld [vmem:[%s8] sm:$0x7]
    %v318 = vlaneseq
    %v319 = vshrl.u32 %v318, 7
    %v320 = vsub.s32 0, %v319
    %v321 = vrot.slane %v316, %v320
    %v322 = vlaneseq
    %v323 = vshrl.u32 %v322, 7
    %v324 = vsub.s32 1, %v323
    %v325 = vrot.slane %v316, %v324
    %v326 = vlaneseq
    %v327 = vshrl.u32 %v326, 7
    %v328 = vsub.s32 2, %v327
    %v329 = vrot.slane %v316, %v328
    %v365 = vunpack.c.l.b16 %v284
    %v366 = vunpack.c.h.b16 %v284
    %v367 = vunpack.c.l.b16 %v285
    %v368 = vunpack.c.l.b16 %v286
    %v369 = vunpack.c.h.b16 %v286
    %v370 = vunpack.c.l.b16 %v287
    %v371 = vunpack.c.l.b16 %v288
    %v372 = vunpack.c.h.b16 %v288
    %v373 = vunpack.c.l.b16 %v289
    %v374 = vunpack.c.l.b16 %v290
    %v375 = vunpack.c.h.b16 %v290
    %v376 = vunpack.c.l.b16 %v291
    %v377 = vunpack.c.l.b16 %v292
    %v378 = vunpack.c.h.b16 %v292
    %v379 = vunpack.c.l.b16 %v293
    %v380 = vunpack.c.l.b16 %v294
    %v381 = vunpack.c.h.b16 %v294
    %v382 = vunpack.c.l.b16 %v295
    %v383 = vunpack.c.l.b16 %v296
    %v384 = vunpack.c.h.b16 %v296
    %v385 = vunpack.c.l.b16 %v297
    %v386 = vunpack.c.l.b16 %v298
    %v387 = vunpack.c.h.b16 %v298
    %v388 = vunpack.c.l.b16 %v299
    %v389 = vunpack.c.l.b16 %v300
    %v390 = vunpack.c.h.b16 %v300
    %v391 = vunpack.c.l.b16 %v301
    %v392 = vunpack.c.l.b16 %v302
    %v393 = vunpack.c.h.b16 %v302
    %v394 = vunpack.c.l.b16 %v303
    %v395 = vunpack.c.l.b16 %v304
    %v396 = vunpack.c.h.b16 %v304
    %v397 = vunpack.c.l.b16 %v305
    %v398 = vunpack.c.l.b16 %v306
    %v399 = vunpack.c.h.b16 %v306
    %v400 = vunpack.c.l.b16 %v307
    %v401 = vunpack.c.l.b16 %v308
    %v402 = vunpack.c.h.b16 %v308
    %v403 = vunpack.c.l.b16 %v309
    %v404 = vunpack.c.l.b16 %v310
    %v405 = vunpack.c.h.b16 %v310
    %v406 = vunpack.c.l.b16 %v311
    %v407 = vunpack.c.l.b16 %v312
    %v408 = vunpack.c.h.b16 %v312
    %v409 = vunpack.c.l.b16 %v313
    %v410 = vunpack.c.l.b16 %v314
    %v411 = vunpack.c.h.b16 %v314
    %v412 = vunpack.c.l.b16 %v315
    %v413 = vpack.c.b16 %v368, %v365
    %v414 = vpack.c.b16 %v369, %v366
    %v415 = vpack.c.b16 %v370, %v367
    %v416 = vpack.c.b16 %v374, %v371
    %v417 = vpack.c.b16 %v375, %v372
    %v418 = vpack.c.b16 %v376, %v373
    %v419 = vpack.c.b16 %v380, %v377
    %v420 = vpack.c.b16 %v381, %v378
    %v421 = vpack.c.b16 %v382, %v379
    %v422 = vpack.c.b16 %v386, %v383
    %v423 = vpack.c.b16 %v387, %v384
    %v424 = vpack.c.b16 %v388, %v385
    %v425 = vpack.c.b16 %v392, %v389
    %v426 = vpack.c.b16 %v393, %v390
    %v427 = vpack.c.b16 %v394, %v391
    %v428 = vpack.c.b16 %v398, %v395
    %v429 = vpack.c.b16 %v399, %v396
    %v430 = vpack.c.b16 %v400, %v397
    %v431 = vpack.c.b16 %v404, %v401
    %v432 = vpack.c.b16 %v405, %v402
    %v433 = vpack.c.b16 %v406, %v403
    %v434 = vpack.c.b16 %v410, %v407
    %v435 = vpack.c.b16 %v411, %v408
    %v436 = vpack.c.b16 %v412, %v409
    %461 = vmatprep.subr.bf16.mxu0 %v435
    %462 = vmatpush1.bf16.msra.mxu0 %v434
    %463 = vmatprep.subr.bf16.mxu0 %v432
    %464 = vmatpush1.bf16.msra.mxu0 %v431
    %465 = vmatprep.subr.bf16.mxu0 %v429
    %466 = vmatpush1.bf16.msra.mxu0 %v428
    %467 = vmatprep.subr.bf16.mxu0 %v426
    %468 = vmatpush1.bf16.msra.mxu0 %v425
    %469 = vmatprep.subr.bf16.mxu0 %v423
    %470 = vmatpush1.bf16.msra.mxu0 %v422
    %471 = vmatprep.subr.bf16.mxu0 %v420
    %472 = vmatpush1.bf16.msra.mxu0 %v419
    %473 = vmatprep.subr.bf16.mxu0 %v417
    %474 = vmatpush1.bf16.msra.mxu0 %v416
    %475 = vmatprep.subr.bf16.mxu0 %v414
    %476 = vmatpush1.bf16.msra.mxu0 %v413
    %477 = vmatprep.subr.bf16.mxu0 0
    %478 = vmatpush2.bf16.msra.mxu0 0
    %479 = vmatprep.subr.bf16.mxu0 0
    %480 = vmatpush2.bf16.msra.mxu0 0
    %481 = vmatprep.subr.bf16.mxu0 0
    %482 = vmatpush2.bf16.msra.mxu0 0
    %483 = vmatprep.subr.bf16.mxu0 0
    %484 = vmatpush2.bf16.msra.mxu0 0
    %485 = vmatprep.subr.bf16.mxu0 0
    %486 = vmatpush2.bf16.msra.mxu0 0
    %487 = vmatprep.subr.bf16.mxu0 0
    %488 = vmatpush2.bf16.msra.mxu0 0
    %489 = vmatprep.subr.bf16.mxu0 0
    %490 = vmatpush2.bf16.msra.mxu0 0
    %491 = vmatprep.subr.bf16.mxu0 0
    %492 = vmatpush2.bf16.msra.mxu0 0
    %493 = vmatprep.mubr.bf16.mxu0 0
    %494 = vmatmul.mubr.bf16.gmra.mxu0 %v282
    %v495 = vpop.f32.mrf.mxu0
    %v496 = vadd.f32 %v321, %v495
    %v497 = vpop.f32.mrf.mxu0
    %v498 = vadd.f32 %v325, %v497
    %v499 = vpop.f32.mrf.mxu0
    %v500 = vadd.f32 %v321, %v499
    %v501 = vpop.f32.mrf.mxu0
    %v502 = vadd.f32 %v325, %v501
    %503 = vmatprep.mubr.bf16.mxu0 0
    %504 = vmatmul.mubr.bf16.gmra.mxu0 %v283
    %v505 = vpop.f32.mrf.mxu0
    %v506 = vadd.f32 %v321, %v505
    %v507 = vpop.f32.mrf.mxu0
    %v508 = vadd.f32 %v325, %v507
    %v509 = vpop.f32.mrf.mxu0
    %v510 = vadd.f32 %v321, %v509
    %v511 = vpop.f32.mrf.mxu0
    %v512 = vadd.f32 %v325, %v511
    %513 = vdwg.mxu0
    %514 = vmatprep.subr.bf16.mxu0 0
    %515 = vmatpush1.bf16.msra.mxu0 %v436
    %516 = vmatprep.subr.bf16.mxu0 0
    %517 = vmatpush1.bf16.msra.mxu0 %v433
    %518 = vmatprep.subr.bf16.mxu0 0
    %519 = vmatpush1.bf16.msra.mxu0 %v430
    %520 = vmatprep.subr.bf16.mxu0 0
    %521 = vmatpush1.bf16.msra.mxu0 %v427
    %522 = vmatprep.subr.bf16.mxu0 0
    %523 = vmatpush1.bf16.msra.mxu0 %v424
    %524 = vmatprep.subr.bf16.mxu0 0
    %525 = vmatpush1.bf16.msra.mxu0 %v421
    %526 = vmatprep.subr.bf16.mxu0 0
    %527 = vmatpush1.bf16.msra.mxu0 %v418
    %528 = vmatprep.subr.bf16.mxu0 0
    %529 = vmatpush1.bf16.msra.mxu0 %v415
    %530 = vmatprep.subr.bf16.mxu0 0
    %531 = vmatpush2.bf16.msra.mxu0 0
    %532 = vmatprep.subr.bf16.mxu0 0
    %533 = vmatpush2.bf16.msra.mxu0 0
    %534 = vmatprep.subr.bf16.mxu0 0
    %535 = vmatpush2.bf16.msra.mxu0 0
    %536 = vmatprep.subr.bf16.mxu0 0
    %537 = vmatpush2.bf16.msra.mxu0 0
    %538 = vmatprep.subr.bf16.mxu0 0
    %539 = vmatpush2.bf16.msra.mxu0 0
    %540 = vmatprep.subr.bf16.mxu0 0
    %541 = vmatpush2.bf16.msra.mxu0 0
    %542 = vmatprep.subr.bf16.mxu0 0
    %543 = vmatpush2.bf16.msra.mxu0 0
    %544 = vmatprep.subr.bf16.mxu0 0
    %545 = vmatpush2.bf16.msra.mxu0 0
    %546 = vmatprep.mubr.bf16.mxu0 0
    %547 = vmatmul.mubr.bf16.gmra.mxu0 %v282
    %v548 = vpop.f32.mrf.mxu0
    %v549 = vadd.f32 %v329, %v548
    %v550 = vpop.f32.mrf.mxu0
    %v551 = vpop.f32.mrf.mxu0
    %v552 = vadd.f32 %v329, %v551
    %v553 = vpop.f32.mrf.mxu0
    %554 = vmatprep.mubr.bf16.mxu0 0
    %555 = vmatmul.mubr.bf16.gmra.mxu0 %v283
    %v556 = vpop.f32.mrf.mxu0
    %v557 = vadd.f32 %v329, %v556
    %v558 = vpop.f32.mrf.mxu0
    %v559 = vpop.f32.mrf.mxu0
    %v560 = vadd.f32 %v329, %v559
    %v561 = vpop.f32.mrf.mxu0
    %562 = vdwg.mxu0
    %v563 = vpack.c.bf16 %v500, %v496
    %v564 = vpack.c.bf16 %v510, %v506
    %v565 = vpack.c.bf16 %v502, %v498
    %v566 = vpack.c.bf16 %v512, %v508
    %v567 = vpack.c.bf16 %v552, %v549
    %v568 = vpack.c.bf16 %v560, %v557
    %vm569 = vcmask 523264
    %v571 = vsel %vm569, %v563, 0
    %v574 = vsel %vm569, %v565, 0
    %576 = vmatprep.subr.bf16.mxu0 0
    %577 = vmatpush1.bf16.xpose.msra.mxu0 0
    %578 = vmatprep.subr.bf16.mxu0 0
    %579 = vmatpush1.bf16.xpose.msra.mxu0 0
    %580 = vmatprep.subr.bf16.mxu0 0
    %581 = vmatpush1.bf16.xpose.msra.mxu0 0
    %582 = vmatprep.subr.bf16.mxu0 0
    %583 = vmatpush1.bf16.xpose.msra.mxu0 0
    %584 = vmatprep.subr.bf16.mxu0 0
    %585 = vmatpush1.bf16.xpose.msra.mxu0 0
    %586 = vmatprep.subr.bf16.mxu0 0
    %587 = vmatpush1.bf16.xpose.msra.mxu0 0
    %588 = vmatprep.subr.bf16.mxu0 0
    %589 = vmatpush1.bf16.xpose.msra.mxu0 0
    %590 = vmatprep.subr.bf16.mxu0 0
    %591 = vmatpush1.bf16.xpose.msra.mxu0 %v574
    %592 = vmatprep.subr.bf16.mxu0 0
    %593 = vmatpush2.bf16.xpose.msra.mxu0 0
    %594 = vmatprep.subr.bf16.mxu0 0
    %595 = vmatpush2.bf16.xpose.msra.mxu0 0
    %596 = vmatprep.subr.bf16.mxu0 0
    %597 = vmatpush2.bf16.xpose.msra.mxu0 0
    %598 = vmatprep.subr.bf16.mxu0 0
    %599 = vmatpush2.bf16.xpose.msra.mxu0 0
    %600 = vmatprep.subr.bf16.mxu0 0
    %601 = vmatpush2.bf16.xpose.msra.mxu0 0
    %602 = vmatprep.subr.bf16.mxu0 0
    %603 = vmatpush2.bf16.xpose.msra.mxu0 0
    %604 = vmatprep.subr.bf16.mxu0 0
    %605 = vmatpush2.bf16.xpose.msra.mxu0 0
    %606 = vmatprep.subr.bf16.mxu0 0
    %607 = vmatpush2.bf16.xpose.msra.mxu0 0
    %608 = vmatprep.mubr.bf16.mxu0 0
    %609 = vmatmul.mubr.bf16.gmra.mxu0 %v571
    %v610 = vpop.f32.mrf.mxu0
    %v611 = vadd.f32 0.0, %v610
    %v612 = vpop.f32.mrf.mxu0
    %v613 = vpop.f32.mrf.mxu0
    %v614 = vadd.f32 0.0, %v613
    %v615 = vpop.f32.mrf.mxu0
    %616 = vdwg.mxu0
    %v618 = vsel %vm569, %v564, 0
    %v621 = vsel %vm569, %v566, 0
    %623 = vmatprep.subr.bf16.mxu0 0
    %624 = vmatpush1.bf16.xpose.msra.mxu0 0
    %625 = vmatprep.subr.bf16.mxu0 0
    %626 = vmatpush1.bf16.xpose.msra.mxu0 0
    %627 = vmatprep.subr.bf16.mxu0 0
    %628 = vmatpush1.bf16.xpose.msra.mxu0 0
    %629 = vmatprep.subr.bf16.mxu0 0
    %630 = vmatpush1.bf16.xpose.msra.mxu0 0
    %631 = vmatprep.subr.bf16.mxu0 0
    %632 = vmatpush1.bf16.xpose.msra.mxu0 0
    %633 = vmatprep.subr.bf16.mxu0 0
    %634 = vmatpush1.bf16.xpose.msra.mxu0 0
    %635 = vmatprep.subr.bf16.mxu0 0
    %636 = vmatpush1.bf16.xpose.msra.mxu0 0
    %637 = vmatprep.subr.bf16.mxu0 0
    %638 = vmatpush1.bf16.xpose.msra.mxu0 %v621
    %639 = vmatprep.subr.bf16.mxu0 0
    %640 = vmatpush2.bf16.xpose.msra.mxu0 0
    %641 = vmatprep.subr.bf16.mxu0 0
    %642 = vmatpush2.bf16.xpose.msra.mxu0 0
    %643 = vmatprep.subr.bf16.mxu0 0
    %644 = vmatpush2.bf16.xpose.msra.mxu0 0
    %645 = vmatprep.subr.bf16.mxu0 0
    %646 = vmatpush2.bf16.xpose.msra.mxu0 0
    %647 = vmatprep.subr.bf16.mxu0 0
    %648 = vmatpush2.bf16.xpose.msra.mxu0 0
    %649 = vmatprep.subr.bf16.mxu0 0
    %650 = vmatpush2.bf16.xpose.msra.mxu0 0
    %651 = vmatprep.subr.bf16.mxu0 0
    %652 = vmatpush2.bf16.xpose.msra.mxu0 0
    %653 = vmatprep.subr.bf16.mxu0 0
    %654 = vmatpush2.bf16.xpose.msra.mxu0 0
    %655 = vmatprep.mubr.bf16.mxu0 0
    %656 = vmatmul.mubr.bf16.gmra.mxu0 %v618
    %v657 = vpop.f32.mrf.mxu0
    %v658 = vadd.f32 0.0, %v657
    %v659 = vpop.f32.mrf.mxu0
    %v660 = vpop.f32.mrf.mxu0
    %v661 = vadd.f32 0.0, %v660
    %v662 = vpop.f32.mrf.mxu0
    %663 = vdwg.mxu0
    %v664 = vmul.f32 %v611, 0.125
    %v665 = vmul.f32 %v614, 0.125
    %v666 = vmul.f32 %v658, 0.125
    %v667 = vmul.f32 %v661, 0.125
    %v668 = vlaneseq
    %v669 = vshrl.u32 %v668, 7
    %v670 = vsub.s32 0, %v669
    %v671 = vrot.slane %v274, %v670
    %v672 = vlaneseq
    %v673 = vshrl.u32 %v672, 7
    %v674 = vsub.s32 0, %v673
    %v675 = vrot.slane %v281, %v674
    %v678 = vadd.f32 %v664, %v671
    %v679 = vadd.f32 %v665, %v671
    %v680 = vadd.f32 %v666, %v675
    %v681 = vadd.f32 %v667, %v675
    %vm682 = vcmask 130048
    %v683 = vsel %vm682, %v678, -inf
    %684 = vmax.xlane.f32.xlu0 %v683
    %v685 = vpop.xlane.xlu0 %684
    %v686 = vsel %vm682, %v679, -inf
    %687 = vmax.xlane.f32.xlu0 %v686
    %v688 = vpop.xlane.xlu0 %687
    %v689 = vsel %vm682, %v680, -inf
    %690 = vmax.xlane.f32.xlu0 %v689
    %v691 = vpop.xlane.xlu0 %690
    %v692 = vsel %vm682, %v681, -inf
    %693 = vmax.xlane.f32.xlu0 %v692
    %v694 = vpop.xlane.xlu0 %693
    %v695 = vsub.f32 %v678, %v685
    %v696 = vsub.f32 %v679, %v688
    %v697 = vsub.f32 %v680, %v691
    %v698 = vsub.f32 %v681, %v694
    %v699 = vmul.f32 %v695, 1.442695
    %v700 = vpow.pop %v699
    %v701 = vmul.f32 %v696, 1.442695
    %v702 = vpow.pop %v701
    %v703 = vmul.f32 %v697, 1.442695
    %v704 = vpow.pop %v703
    %v705 = vmul.f32 %v698, 1.442695
    %v706 = vpow.pop %v705
    %v707 = vsel %vm682, %v700, 0.0
    %708 = vadd.xlane.f32.xlu0 %v707
    %v709 = vpop.xlane.xlu0 %708
    %v710 = vsel %vm682, %v702, 0.0
    %711 = vadd.xlane.f32.xlu0 %v710
    %v712 = vpop.xlane.xlu0 %711
    %v713 = vsel %vm682, %v704, 0.0
    %714 = vadd.xlane.f32.xlu0 %v713
    %v715 = vpop.xlane.xlu0 %714
    %v716 = vsel %vm682, %v706, 0.0
    %717 = vadd.xlane.f32.xlu0 %v716
    %v718 = vpop.xlane.xlu0 %717
    %v719 = vrcp.pop %v709
    %v720 = vrcp.pop %v712
    %v721 = vrcp.pop %v715
    %v722 = vrcp.pop %v718
    %v723 = vmul.f32 %v700, %v719
    %v724 = vmul.f32 %v702, %v720
    %v725 = vmul.f32 %v704, %v721
    %v726 = vmul.f32 %v706, %v722
    %v727 = vpack.c.bf16 %v724, %v723
    %v728 = vpack.c.bf16 %v726, %v725
    %v730 = vsel %vm682, %v727, 0
    %732 = vmatprep.subr.bf16.mxu0 0
    %733 = vmatpush1.bf16.msra.mxu0 0
    %734 = vmatprep.subr.bf16.mxu0 0
    %735 = vmatpush1.bf16.msra.mxu0 0
    %736 = vmatprep.subr.bf16.mxu0 0
    %737 = vmatpush1.bf16.msra.mxu0 0
    %738 = vmatprep.subr.bf16.mxu0 0
    %739 = vmatpush1.bf16.msra.mxu0 0
    %740 = vmatprep.subr.bf16.mxu0 0
    %741 = vmatpush1.bf16.msra.mxu0 0
    %742 = vmatprep.subr.bf16.mxu0 0
    %743 = vmatpush1.bf16.msra.mxu0 0
    %744 = vmatprep.subr.bf16.mxu0 0
    %745 = vmatpush1.bf16.msra.mxu0 0
    %746 = vmatprep.subr.bf16.mxu0 0
    %747 = vmatpush1.bf16.msra.mxu0 %v567
    %748 = vmatprep.subr.bf16.mxu0 0
    %749 = vmatpush2.bf16.msra.mxu0 0
    %750 = vmatprep.subr.bf16.mxu0 0
    %751 = vmatpush2.bf16.msra.mxu0 0
    %752 = vmatprep.subr.bf16.mxu0 0
    %753 = vmatpush2.bf16.msra.mxu0 0
    %754 = vmatprep.subr.bf16.mxu0 0
    %755 = vmatpush2.bf16.msra.mxu0 0
    %756 = vmatprep.subr.bf16.mxu0 0
    %757 = vmatpush2.bf16.msra.mxu0 0
    %758 = vmatprep.subr.bf16.mxu0 0
    %759 = vmatpush2.bf16.msra.mxu0 0
    %760 = vmatprep.subr.bf16.mxu0 0
    %761 = vmatpush2.bf16.msra.mxu0 0
    %762 = vmatprep.subr.bf16.mxu0 0
    %763 = vmatpush2.bf16.msra.mxu0 0
    %764 = vmatprep.mubr.bf16.mxu0 0
    %765 = vmatmul.mubr.bf16.gmra.mxu0 %v730
    %v766 = vpop.f32.mrf.mxu0
    %v767 = vadd.f32 0.0, %v766
    %v768 = vpop.f32.mrf.mxu0
    %v769 = vpop.f32.mrf.mxu0
    %v770 = vadd.f32 0.0, %v769
    %v771 = vpop.f32.mrf.mxu0
    %772 = vdwg.mxu0
    %v774 = vsel %vm682, %v728, 0
    %776 = vmatprep.subr.bf16.mxu0 0
    %777 = vmatpush1.bf16.msra.mxu0 0
    %778 = vmatprep.subr.bf16.mxu0 0
    %779 = vmatpush1.bf16.msra.mxu0 0
    %780 = vmatprep.subr.bf16.mxu0 0
    %781 = vmatpush1.bf16.msra.mxu0 0
    %782 = vmatprep.subr.bf16.mxu0 0
    %783 = vmatpush1.bf16.msra.mxu0 0
    %784 = vmatprep.subr.bf16.mxu0 0
    %785 = vmatpush1.bf16.msra.mxu0 0
    %786 = vmatprep.subr.bf16.mxu0 0
    %787 = vmatpush1.bf16.msra.mxu0 0
    %788 = vmatprep.subr.bf16.mxu0 0
    %789 = vmatpush1.bf16.msra.mxu0 0
    %790 = vmatprep.subr.bf16.mxu0 0
    %791 = vmatpush1.bf16.msra.mxu0 %v568
    %792 = vmatprep.subr.bf16.mxu0 0
    %793 = vmatpush2.bf16.msra.mxu0 0
    %794 = vmatprep.subr.bf16.mxu0 0
    %795 = vmatpush2.bf16.msra.mxu0 0
    %796 = vmatprep.subr.bf16.mxu0 0
    %797 = vmatpush2.bf16.msra.mxu0 0
    %798 = vmatprep.subr.bf16.mxu0 0
    %799 = vmatpush2.bf16.msra.mxu0 0
    %800 = vmatprep.subr.bf16.mxu0 0
    %801 = vmatpush2.bf16.msra.mxu0 0
    %802 = vmatprep.subr.bf16.mxu0 0
    %803 = vmatpush2.bf16.msra.mxu0 0
    %804 = vmatprep.subr.bf16.mxu0 0
    %805 = vmatpush2.bf16.msra.mxu0 0
    %806 = vmatprep.subr.bf16.mxu0 0
    %807 = vmatpush2.bf16.msra.mxu0 0
    %808 = vmatprep.mubr.bf16.mxu0 0
    %809 = vmatmul.mubr.bf16.gmra.mxu0 %v774
    %v810 = vpop.f32.mrf.mxu0
    %v811 = vadd.f32 0.0, %v810
    %v812 = vpop.f32.mrf.mxu0
    %v813 = vpop.f32.mrf.mxu0
    %v814 = vadd.f32 0.0, %v813
    %v815 = vpop.f32.mrf.mxu0
    %816 = vdwg.mxu0
    %v817 = vpack.c.bf16 %v770, %v767
    %v818 = vpack.c.bf16 %v814, %v811
    %v819 = vld [vmem:[#allocation5] sm:$0xf]
    %v820 = vld [vmem:[#allocation5 + $0x4] sm:$0xf]
    %v821 = vld [vmem:[#allocation5 + $0x8] sm:$0xf]
    %v822 = vld [vmem:[#allocation5 + $0xc] sm:$0xf]
    %v823 = vld [vmem:[#allocation5 + $0x10] sm:$0xf]
    %v824 = vld [vmem:[#allocation5 + $0x14] sm:$0xf]
    %v825 = vld [vmem:[#allocation5 + $0x18] sm:$0xf]
    %v826 = vld [vmem:[#allocation5 + $0x1c] sm:$0xf]
    %828 = vrot.lane.b32.xlu0 %v563, 64
    %v829 = vpop.permute.xlu0 %828
    %831 = vrot.lane.b32.xlu0 %v565, 64
    %v832 = vpop.permute.xlu0 %831
    %v834 = vsel %vm569, %v829, 0
    %v837 = vsel %vm569, %v832, 0
    %839 = vmatprep.subr.bf16.mxu0 0
    %840 = vmatpush1.bf16.xpose.msra.mxu0 0
    %841 = vmatprep.subr.bf16.mxu0 0
    %842 = vmatpush1.bf16.xpose.msra.mxu0 0
    %843 = vmatprep.subr.bf16.mxu0 0
    %844 = vmatpush1.bf16.xpose.msra.mxu0 0
    %845 = vmatprep.subr.bf16.mxu0 0
    %846 = vmatpush1.bf16.xpose.msra.mxu0 0
    %847 = vmatprep.subr.bf16.mxu0 0
    %848 = vmatpush1.bf16.xpose.msra.mxu0 0
    %849 = vmatprep.subr.bf16.mxu0 0
    %850 = vmatpush1.bf16.xpose.msra.mxu0 0
    %851 = vmatprep.subr.bf16.mxu0 0
    %852 = vmatpush1.bf16.xpose.msra.mxu0 0
    %853 = vmatprep.subr.bf16.mxu0 0
    %854 = vmatpush1.bf16.xpose.msra.mxu0 %v837
    %855 = vmatprep.subr.bf16.mxu0 0
    %856 = vmatpush2.bf16.xpose.msra.mxu0 0
    %857 = vmatprep.subr.bf16.mxu0 0
    %858 = vmatpush2.bf16.xpose.msra.mxu0 0
    %859 = vmatprep.subr.bf16.mxu0 0
    %860 = vmatpush2.bf16.xpose.msra.mxu0 0
    %861 = vmatprep.subr.bf16.mxu0 0
    %862 = vmatpush2.bf16.xpose.msra.mxu0 0
    %863 = vmatprep.subr.bf16.mxu0 0
    %864 = vmatpush2.bf16.xpose.msra.mxu0 0
    %865 = vmatprep.subr.bf16.mxu0 0
    %866 = vmatpush2.bf16.xpose.msra.mxu0 0
    %867 = vmatprep.subr.bf16.mxu0 0
    %868 = vmatpush2.bf16.xpose.msra.mxu0 0
    %869 = vmatprep.subr.bf16.mxu0 0
    %870 = vmatpush2.bf16.xpose.msra.mxu0 0
    %871 = vmatprep.mubr.bf16.mxu0 0
    %872 = vmatmul.mubr.bf16.gmra.mxu0 %v834
    %v873 = vpop.f32.mrf.mxu0
    %v874 = vadd.f32 0.0, %v873
    %v875 = vpop.f32.mrf.mxu0
    %v876 = vpop.f32.mrf.mxu0
    %v877 = vadd.f32 0.0, %v876
    %v878 = vpop.f32.mrf.mxu0
    %879 = vdwg.mxu0
    %881 = vrot.lane.b32.xlu0 %v564, 64
    %v882 = vpop.permute.xlu0 %881
    %884 = vrot.lane.b32.xlu0 %v566, 64
    %v885 = vpop.permute.xlu0 %884
    %v887 = vsel %vm569, %v882, 0
    %v890 = vsel %vm569, %v885, 0
    %892 = vmatprep.subr.bf16.mxu0 0
    %893 = vmatpush1.bf16.xpose.msra.mxu0 0
    %894 = vmatprep.subr.bf16.mxu0 0
    %895 = vmatpush1.bf16.xpose.msra.mxu0 0
    %896 = vmatprep.subr.bf16.mxu0 0
    %897 = vmatpush1.bf16.xpose.msra.mxu0 0
    %898 = vmatprep.subr.bf16.mxu0 0
    %899 = vmatpush1.bf16.xpose.msra.mxu0 0
    %900 = vmatprep.subr.bf16.mxu0 0
    %901 = vmatpush1.bf16.xpose.msra.mxu0 0
    %902 = vmatprep.subr.bf16.mxu0 0
    %903 = vmatpush1.bf16.xpose.msra.mxu0 0
    %904 = vmatprep.subr.bf16.mxu0 0
    %905 = vmatpush1.bf16.xpose.msra.mxu0 0
    %906 = vmatprep.subr.bf16.mxu0 0
    %907 = vmatpush1.bf16.xpose.msra.mxu0 %v890
    %908 = vmatprep.subr.bf16.mxu0 0
    %909 = vmatpush2.bf16.xpose.msra.mxu0 0
    %910 = vmatprep.subr.bf16.mxu0 0
    %911 = vmatpush2.bf16.xpose.msra.mxu0 0
    %912 = vmatprep.subr.bf16.mxu0 0
    %913 = vmatpush2.bf16.xpose.msra.mxu0 0
    %914 = vmatprep.subr.bf16.mxu0 0
    %915 = vmatpush2.bf16.xpose.msra.mxu0 0
    %916 = vmatprep.subr.bf16.mxu0 0
    %917 = vmatpush2.bf16.xpose.msra.mxu0 0
    %918 = vmatprep.subr.bf16.mxu0 0
    %919 = vmatpush2.bf16.xpose.msra.mxu0 0
    %920 = vmatprep.subr.bf16.mxu0 0
    %921 = vmatpush2.bf16.xpose.msra.mxu0 0
    %922 = vmatprep.subr.bf16.mxu0 0
    %923 = vmatpush2.bf16.xpose.msra.mxu0 0
    %924 = vmatprep.mubr.bf16.mxu0 0
    %925 = vmatmul.mubr.bf16.gmra.mxu0 %v887
    %v926 = vpop.f32.mrf.mxu0
    %v927 = vadd.f32 0.0, %v926
    %v928 = vpop.f32.mrf.mxu0
    %v929 = vpop.f32.mrf.mxu0
    %v930 = vadd.f32 0.0, %v929
    %v931 = vpop.f32.mrf.mxu0
    %932 = vdwg.mxu0
    %v933 = vmul.f32 %v874, 0.125
    %v934 = vmul.f32 %v877, 0.125
    %v935 = vmul.f32 %v927, 0.125
    %v936 = vmul.f32 %v930, 0.125
    %v937 = vadd.f32 %v933, %v671
    %v938 = vadd.f32 %v934, %v671
    %v939 = vadd.f32 %v935, %v675
    %v940 = vadd.f32 %v936, %v675
    %v941 = vsel %vm682, %v937, -inf
    %942 = vmax.xlane.f32.xlu0 %v941
    %v943 = vpop.xlane.xlu0 %942
    %v944 = vsel %vm682, %v938, -inf
    %945 = vmax.xlane.f32.xlu0 %v944
    %v946 = vpop.xlane.xlu0 %945
    %v947 = vsel %vm682, %v939, -inf
    %948 = vmax.xlane.f32.xlu0 %v947
    %v949 = vpop.xlane.xlu0 %948
    %v950 = vsel %vm682, %v940, -inf
    %951 = vmax.xlane.f32.xlu0 %v950
    %v952 = vpop.xlane.xlu0 %951
    %v953 = vsub.f32 %v937, %v943
    %v954 = vsub.f32 %v938, %v946
    %v955 = vsub.f32 %v939, %v949
    %v956 = vsub.f32 %v940, %v952
    %v957 = vmul.f32 %v953, 1.442695
    %v958 = vpow.pop %v957
    %v959 = vmul.f32 %v954, 1.442695
    %v960 = vpow.pop %v959
    %v961 = vmul.f32 %v955, 1.442695
    %v962 = vpow.pop %v961
    %v963 = vmul.f32 %v956, 1.442695
    %v964 = vpow.pop %v963
    %v965 = vsel %vm682, %v958, 0.0
    %966 = vadd.xlane.f32.xlu0 %v965
    %v967 = vpop.xlane.xlu0 %966
    %v968 = vsel %vm682, %v960, 0.0
    %969 = vadd.xlane.f32.xlu0 %v968
    %v970 = vpop.xlane.xlu0 %969
    %v971 = vsel %vm682, %v962, 0.0
    %972 = vadd.xlane.f32.xlu0 %v971
    %v973 = vpop.xlane.xlu0 %972
    %v974 = vsel %vm682, %v964, 0.0
    %975 = vadd.xlane.f32.xlu0 %v974
    %v976 = vpop.xlane.xlu0 %975
    %v977 = vrcp.pop %v967
    %v978 = vrcp.pop %v970
    %v979 = vrcp.pop %v973
    %v980 = vrcp.pop %v976
    %v981 = vmul.f32 %v958, %v977
    %v982 = vmul.f32 %v960, %v978
    %v983 = vmul.f32 %v962, %v979
    %v984 = vmul.f32 %v964, %v980
    %v985 = vpack.c.bf16 %v982, %v981
    %v986 = vpack.c.bf16 %v984, %v983
    %988 = vrot.lane.b32.xlu0 %v567, 64
    %v989 = vpop.permute.xlu0 %988
    %v992 = vsel %vm682, %v985, 0
    %994 = vmatprep.subr.bf16.mxu0 0
    %995 = vmatpush1.bf16.msra.mxu0 0
    %996 = vmatprep.subr.bf16.mxu0 0
    %997 = vmatpush1.bf16.msra.mxu0 0
    %998 = vmatprep.subr.bf16.mxu0 0
    %999 = vmatpush1.bf16.msra.mxu0 0
    %1000 = vmatprep.subr.bf16.mxu0 0
    %1001 = vmatpush1.bf16.msra.mxu0 0
    %1002 = vmatprep.subr.bf16.mxu0 0
    %1003 = vmatpush1.bf16.msra.mxu0 0
    %1004 = vmatprep.subr.bf16.mxu0 0
    %1005 = vmatpush1.bf16.msra.mxu0 0
    %1006 = vmatprep.subr.bf16.mxu0 0
    %1007 = vmatpush1.bf16.msra.mxu0 0
    %1008 = vmatprep.subr.bf16.mxu0 0
    %1009 = vmatpush1.bf16.msra.mxu0 %v989
    %1010 = vmatprep.subr.bf16.mxu0 0
    %1011 = vmatpush2.bf16.msra.mxu0 0
    %1012 = vmatprep.subr.bf16.mxu0 0
    %1013 = vmatpush2.bf16.msra.mxu0 0
    %1014 = vmatprep.subr.bf16.mxu0 0
    %1015 = vmatpush2.bf16.msra.mxu0 0
    %1016 = vmatprep.subr.bf16.mxu0 0
    %1017 = vmatpush2.bf16.msra.mxu0 0
    %1018 = vmatprep.subr.bf16.mxu0 0
    %1019 = vmatpush2.bf16.msra.mxu0 0
    %1020 = vmatprep.subr.bf16.mxu0 0
    %1021 = vmatpush2.bf16.msra.mxu0 0
    %1022 = vmatprep.subr.bf16.mxu0 0
    %1023 = vmatpush2.bf16.msra.mxu0 0
    %1024 = vmatprep.subr.bf16.mxu0 0
    %1025 = vmatpush2.bf16.msra.mxu0 0
    %1026 = vmatprep.mubr.bf16.mxu0 0
    %1027 = vmatmul.mubr.bf16.gmra.mxu0 %v992
    %v1028 = vpop.f32.mrf.mxu0
    %v1029 = vadd.f32 0.0, %v1028
    %v1030 = vpop.f32.mrf.mxu0
    %v1031 = vpop.f32.mrf.mxu0
    %v1032 = vadd.f32 0.0, %v1031
    %v1033 = vpop.f32.mrf.mxu0
    %1034 = vdwg.mxu0
    %1036 = vrot.lane.b32.xlu0 %v568, 64
    %v1037 = vpop.permute.xlu0 %1036
    %v1040 = vsel %vm682, %v986, 0
    %1042 = vmatprep.subr.bf16.mxu0 0
    %1043 = vmatpush1.bf16.msra.mxu0 0
    %1044 = vmatprep.subr.bf16.mxu0 0
    %1045 = vmatpush1.bf16.msra.mxu0 0
    %1046 = vmatprep.subr.bf16.mxu0 0
    %1047 = vmatpush1.bf16.msra.mxu0 0
    %1048 = vmatprep.subr.bf16.mxu0 0
    %1049 = vmatpush1.bf16.msra.mxu0 0
    %1050 = vmatprep.subr.bf16.mxu0 0
    %1051 = vmatpush1.bf16.msra.mxu0 0
    %1052 = vmatprep.subr.bf16.mxu0 0
    %1053 = vmatpush1.bf16.msra.mxu0 0
    %1054 = vmatprep.subr.bf16.mxu0 0
    %1055 = vmatpush1.bf16.msra.mxu0 0
    %1056 = vmatprep.subr.bf16.mxu0 0
    %1057 = vmatpush1.bf16.msra.mxu0 %v1037
    %1058 = vmatprep.subr.bf16.mxu0 0
    %1059 = vmatpush2.bf16.msra.mxu0 0
    %1060 = vmatprep.subr.bf16.mxu0 0
    %1061 = vmatpush2.bf16.msra.mxu0 0
    %1062 = vmatprep.subr.bf16.mxu0 0
    %1063 = vmatpush2.bf16.msra.mxu0 0
    %1064 = vmatprep.subr.bf16.mxu0 0
    %1065 = vmatpush2.bf16.msra.mxu0 0
    %1066 = vmatprep.subr.bf16.mxu0 0
    %1067 = vmatpush2.bf16.msra.mxu0 0
    %1068 = vmatprep.subr.bf16.mxu0 0
    %1069 = vmatpush2.bf16.msra.mxu0 0
    %1070 = vmatprep.subr.bf16.mxu0 0
    %1071 = vmatpush2.bf16.msra.mxu0 0
    %1072 = vmatprep.subr.bf16.mxu0 0
    %1073 = vmatpush2.bf16.msra.mxu0 0
    %1074 = vmatprep.mubr.bf16.mxu0 0
    %1075 = vmatmul.mubr.bf16.gmra.mxu0 %v1040
    %v1076 = vpop.f32.mrf.mxu0
    %v1077 = vadd.f32 0.0, %v1076
    %v1078 = vpop.f32.mrf.mxu0
    %v1079 = vpop.f32.mrf.mxu0
    %v1080 = vadd.f32 0.0, %v1079
    %v1081 = vpop.f32.mrf.mxu0
    %1082 = vdwg.mxu0
    %v1083 = vpack.c.bf16 %v1032, %v1029
    %v1084 = vpack.c.bf16 %v1080, %v1077
    %v1085 = vld [vmem:[#allocation5 + $0x20] sm:$0xf]
    %v1086 = vld [vmem:[#allocation5 + $0x24] sm:$0xf]
    %v1087 = vld [vmem:[#allocation5 + $0x28] sm:$0xf]
    %v1088 = vld [vmem:[#allocation5 + $0x2c] sm:$0xf]
    %v1089 = vld [vmem:[#allocation5 + $0x30] sm:$0xf]
    %v1090 = vld [vmem:[#allocation5 + $0x34] sm:$0xf]
    %v1091 = vld [vmem:[#allocation5 + $0x38] sm:$0xf]
    %v1092 = vld [vmem:[#allocation5 + $0x3c] sm:$0xf]
    %v1101 = vunpack.c.l.b16 %v1085
    %v1102 = vunpack.c.l.b16 %v1086
    %v1103 = vunpack.c.l.b16 %v1087
    %v1104 = vunpack.c.l.b16 %v1088
    %v1105 = vunpack.c.l.b16 %v1089
    %v1106 = vunpack.c.l.b16 %v1090
    %v1107 = vunpack.c.l.b16 %v1091
    %v1108 = vunpack.c.l.b16 %v1092
    %v1109 = vpack.c.b16 %v1102, %v1101
    %v1110 = vpack.c.b16 %v1104, %v1103
    %v1111 = vpack.c.b16 %v1106, %v1105
    %v1112 = vpack.c.b16 %v1108, %v1107
    %v1118 = vsel %vm569, %v1083, 0
    %v1121 = vsel %vm569, %v1084, 0
    %1123 = vmatprep.subr.bf16.mxu0 0
    %1124 = vmatpush1.bf16.msra.mxu0 0
    %1125 = vmatprep.subr.bf16.mxu0 0
    %1126 = vmatpush1.bf16.msra.mxu0 0
    %1127 = vmatprep.subr.bf16.mxu0 0
    %1128 = vmatpush1.bf16.msra.mxu0 0
    %1129 = vmatprep.subr.bf16.mxu0 0
    %1130 = vmatpush1.bf16.msra.mxu0 0
    %1131 = vmatprep.subr.bf16.mxu0 0
    %1132 = vmatpush1.bf16.msra.mxu0 %v1112
    %1133 = vmatprep.subr.bf16.mxu0 0
    %1134 = vmatpush1.bf16.msra.mxu0 %v1111
    %1135 = vmatprep.subr.bf16.mxu0 0
    %1136 = vmatpush1.bf16.msra.mxu0 %v1110
    %1137 = vmatprep.subr.bf16.mxu0 0
    %1138 = vmatpush1.bf16.msra.mxu0 %v1109
    %1139 = vmatprep.subr.bf16.mxu0 0
    %1140 = vmatpush2.bf16.msra.mxu0 0
    %1141 = vmatprep.subr.bf16.mxu0 0
    %1142 = vmatpush2.bf16.msra.mxu0 0
    %1143 = vmatprep.subr.bf16.mxu0 0
    %1144 = vmatpush2.bf16.msra.mxu0 0
    %1145 = vmatprep.subr.bf16.mxu0 0
    %1146 = vmatpush2.bf16.msra.mxu0 0
    %1147 = vmatprep.subr.bf16.mxu0 0
    %1148 = vmatpush2.bf16.msra.mxu0 0
    %1149 = vmatprep.subr.bf16.mxu0 0
    %1150 = vmatpush2.bf16.msra.mxu0 0
    %1151 = vmatprep.subr.bf16.mxu0 0
    %1152 = vmatpush2.bf16.msra.mxu0 0
    %1153 = vmatprep.subr.bf16.mxu0 0
    %1154 = vmatpush2.bf16.msra.mxu0 0
    %1155 = vmatprep.mubr.bf16.mxu0 0
    %1156 = vmatmul.mubr.bf16.gmra.mxu0 %v1118
    %v1157 = vpop.f32.mrf.mxu0
    %v1158 = vadd.f32 0.0, %v1157
    %v1159 = vpop.f32.mrf.mxu0
    %v1160 = vpop.f32.mrf.mxu0
    %v1161 = vadd.f32 0.0, %v1160
    %v1162 = vpop.f32.mrf.mxu0
    %1163 = vmatprep.mubr.bf16.mxu0 0
    %1164 = vmatmul.mubr.bf16.gmra.mxu0 %v1121
    %v1165 = vpop.f32.mrf.mxu0
    %v1166 = vadd.f32 0.0, %v1165
    %v1167 = vpop.f32.mrf.mxu0
    %v1168 = vpop.f32.mrf.mxu0
    %v1169 = vadd.f32 0.0, %v1168
    %v1170 = vpop.f32.mrf.mxu0
    %1171 = vdwg.mxu0
    %v1180 = vunpack.c.l.b16 %v819
    %v1181 = vunpack.c.l.b16 %v820
    %v1182 = vunpack.c.l.b16 %v821
    %v1183 = vunpack.c.l.b16 %v822
    %v1184 = vunpack.c.l.b16 %v823
    %v1185 = vunpack.c.l.b16 %v824
    %v1186 = vunpack.c.l.b16 %v825
    %v1187 = vunpack.c.l.b16 %v826
    %v1188 = vpack.c.b16 %v1181, %v1180
    %v1189 = vpack.c.b16 %v1183, %v1182
    %v1190 = vpack.c.b16 %v1185, %v1184
    %v1191 = vpack.c.b16 %v1187, %v1186
    %v1197 = vsel %vm569, %v817, 0
    %v1200 = vsel %vm569, %v818, 0
    %1202 = vmatprep.subr.bf16.mxu0 0
    %1203 = vmatpush1.bf16.msra.mxu0 0
    %1204 = vmatprep.subr.bf16.mxu0 0
    %1205 = vmatpush1.bf16.msra.mxu0 0
    %1206 = vmatprep.subr.bf16.mxu0 0
    %1207 = vmatpush1.bf16.msra.mxu0 0
    %1208 = vmatprep.subr.bf16.mxu0 0
    %1209 = vmatpush1.bf16.msra.mxu0 0
    %1210 = vmatprep.subr.bf16.mxu0 0
    %1211 = vmatpush1.bf16.msra.mxu0 %v1191
    %1212 = vmatprep.subr.bf16.mxu0 0
    %1213 = vmatpush1.bf16.msra.mxu0 %v1190
    %1214 = vmatprep.subr.bf16.mxu0 0
    %1215 = vmatpush1.bf16.msra.mxu0 %v1189
    %1216 = vmatprep.subr.bf16.mxu0 0
    %1217 = vmatpush1.bf16.msra.mxu0 %v1188
    %1218 = vmatprep.subr.bf16.mxu0 0
    %1219 = vmatpush2.bf16.msra.mxu0 0
    %1220 = vmatprep.subr.bf16.mxu0 0
    %1221 = vmatpush2.bf16.msra.mxu0 0
    %1222 = vmatprep.subr.bf16.mxu0 0
    %1223 = vmatpush2.bf16.msra.mxu0 0
    %1224 = vmatprep.subr.bf16.mxu0 0
    %1225 = vmatpush2.bf16.msra.mxu0 0
    %1226 = vmatprep.subr.bf16.mxu0 0
    %1227 = vmatpush2.bf16.msra.mxu0 0
    %1228 = vmatprep.subr.bf16.mxu0 0
    %1229 = vmatpush2.bf16.msra.mxu0 0
    %1230 = vmatprep.subr.bf16.mxu0 0
    %1231 = vmatpush2.bf16.msra.mxu0 0
    %1232 = vmatprep.subr.bf16.mxu0 0
    %1233 = vmatpush2.bf16.msra.mxu0 0
    %1234 = vmatprep.mubr.bf16.mxu0 0
    %1235 = vmatmul.mubr.bf16.gmra.mxu0 %v1197
    %v1236 = vpop.f32.mrf.mxu0
    %v1237 = vadd.f32 %v1158, %v1236
    %v1238 = vpop.f32.mrf.mxu0
    %v1239 = vpop.f32.mrf.mxu0
    %v1240 = vadd.f32 %v1161, %v1239
    %v1241 = vpop.f32.mrf.mxu0
    %1242 = vmatprep.mubr.bf16.mxu0 0
    %1243 = vmatmul.mubr.bf16.gmra.mxu0 %v1200
    %v1244 = vpop.f32.mrf.mxu0
    %v1245 = vadd.f32 %v1166, %v1244
    %v1246 = vpop.f32.mrf.mxu0
    %v1247 = vpop.f32.mrf.mxu0
    %v1248 = vadd.f32 %v1169, %v1247
    %v1249 = vpop.f32.mrf.mxu0
    %1250 = vdwg.mxu0
    %v1251 = vld [vmem:[%s10] sm:$0x1]
    %v1253 = vlaneseq
    %v1254 = vshrl.u32 %v1253, 7
    %v1255 = vsub.s32 0, %v1254
    %v1256 = vrot.slane %v1251, %v1255
    %v1258 = vadd.f32 %v1237, %v1256
    %v1259 = vadd.f32 %v1240, %v1256
    %v1260 = vadd.f32 %v1245, %v1256
    %v1261 = vadd.f32 %v1248, %v1256
    %v1262 = vadd.f32 %v254, %v1258
    %v1263 = vadd.f32 %v255, %v1259
    %v1264 = vadd.f32 %v256, %v1260
    %v1265 = vadd.f32 %v257, %v1261
    %v1266 = vld [vmem:[%s11] sm:$0x1]
    %v1267 = vld [vmem:[%s12] sm:$0x1]
    %1268 = vadd.xlane.f32.xlu0 %v1262
    %v1269 = vpop.xlane.xlu0 %1268
    %1270 = vadd.xlane.f32.xlu0 %v1263
    %v1271 = vpop.xlane.xlu0 %1270
    %1272 = vadd.xlane.f32.xlu0 %v1264
    %v1273 = vpop.xlane.xlu0 %1272
    %1274 = vadd.xlane.f32.xlu0 %v1265
    %v1275 = vpop.xlane.xlu0 %1274
    %v1276 = vmul.f32 %v1269, %v201
    %v1277 = vmul.f32 %v1271, %v201
    %v1278 = vmul.f32 %v1273, %v201
    %v1279 = vmul.f32 %v1275, %v201
    %v1280 = vsub.f32 %v1262, %v1276
    %v1281 = vsub.f32 %v1263, %v1277
    %v1282 = vsub.f32 %v1264, %v1278
    %v1283 = vsub.f32 %v1265, %v1279
    %v1284 = vmul.f32 %v1280, %v1280
    %v1285 = vmul.f32 %v1281, %v1281
    %v1286 = vmul.f32 %v1282, %v1282
    %v1287 = vmul.f32 %v1283, %v1283
    %1288 = vadd.xlane.f32.xlu0 %v1284
    %v1289 = vpop.xlane.xlu0 %1288
    %1290 = vadd.xlane.f32.xlu0 %v1285
    %v1291 = vpop.xlane.xlu0 %1290
    %1292 = vadd.xlane.f32.xlu0 %v1286
    %v1293 = vpop.xlane.xlu0 %1292
    %1294 = vadd.xlane.f32.xlu0 %v1287
    %v1295 = vpop.xlane.xlu0 %1294
    %v1296 = vmul.f32 %v1289, %v201
    %v1297 = vmul.f32 %v1291, %v201
    %v1298 = vmul.f32 %v1293, %v201
    %v1299 = vmul.f32 %v1295, %v201
    %v1300 = vadd.f32 %v1296, 1e-12
    %v1301 = vadd.f32 %v1297, 1e-12
    %v1302 = vadd.f32 %v1298, 1e-12
    %v1303 = vadd.f32 %v1299, 1e-12
    %v1304 = vrsqrt.pop %v1300
    %v1305 = vrsqrt.pop %v1301
    %v1306 = vrsqrt.pop %v1302
    %v1307 = vrsqrt.pop %v1303
    %v1308 = vmul.f32 %v1280, %v1304
    %v1309 = vmul.f32 %v1281, %v1305
    %v1310 = vmul.f32 %v1282, %v1306
    %v1311 = vmul.f32 %v1283, %v1307
    %v1313 = vlaneseq
    %v1314 = vshrl.u32 %v1313, 7
    %v1315 = vsub.s32 0, %v1314
    %v1316 = vrot.slane %v1266, %v1315
    %v1318 = vmul.f32 %v1308, %v1316
    %v1319 = vmul.f32 %v1309, %v1316
    %v1320 = vmul.f32 %v1310, %v1316
    %v1321 = vmul.f32 %v1311, %v1316
    %v1323 = vlaneseq
    %v1324 = vshrl.u32 %v1323, 7
    %v1325 = vsub.s32 0, %v1324
    %v1326 = vrot.slane %v1267, %v1325
    %v1328 = vadd.f32 %v1318, %v1326
    %v1329 = vadd.f32 %v1319, %v1326
    %v1330 = vadd.f32 %v1320, %v1326
    %v1331 = vadd.f32 %v1321, %v1326
    %v1332 = vpack.c.bf16 %v1329, %v1328
    %v1333 = vpack.c.bf16 %v1331, %v1330
    %v1334 = vld [vmem:[%s13] sm:$0xff]
    %v1335 = vld [vmem:[%s13 + $0x8] sm:$0xff]
    %v1336 = vld [vmem:[%s13 + $0x10] sm:$0xff]
    %v1337 = vld [vmem:[%s13 + $0x18] sm:$0xff]
    %v1338 = vld [vmem:[%s13 + $0x20] sm:$0xff]
    %v1339 = vld [vmem:[%s13 + $0x28] sm:$0xff]
    %v1340 = vld [vmem:[%s13 + $0x30] sm:$0xff]
    %v1341 = vld [vmem:[%s13 + $0x38] sm:$0xff]
    %v1342 = vld [vmem:[%s13 + $0x40] sm:$0xff]
    %v1343 = vld [vmem:[%s13 + $0x48] sm:$0xff]
    %v1344 = vld [vmem:[%s13 + $0x50] sm:$0xff]
    %v1345 = vld [vmem:[%s13 + $0x58] sm:$0xff]
    %v1346 = vld [vmem:[%s13 + $0x60] sm:$0xff]
    %v1347 = vld [vmem:[%s13 + $0x68] sm:$0xff]
    %v1348 = vld [vmem:[%s13 + $0x70] sm:$0xff]
    %v1349 = vld [vmem:[%s13 + $0x78] sm:$0xff]
    %v1350 = vld [vmem:[%s14] sm:$0x3]
    %v1352 = vlaneseq
    %v1353 = vshrl.u32 %v1352, 7
    %v1354 = vsub.s32 0, %v1353
    %v1355 = vrot.slane %v1350, %v1354
    %v1356 = vlaneseq
    %v1357 = vshrl.u32 %v1356, 7
    %v1358 = vsub.s32 1, %v1357
    %v1359 = vrot.slane %v1350, %v1358
    %v1378 = vunpack.c.l.b16 %v1334
    %v1379 = vunpack.c.h.b16 %v1334
    %v1380 = vunpack.c.l.b16 %v1335
    %v1381 = vunpack.c.h.b16 %v1335
    %v1382 = vunpack.c.l.b16 %v1336
    %v1383 = vunpack.c.h.b16 %v1336
    %v1384 = vunpack.c.l.b16 %v1337
    %v1385 = vunpack.c.h.b16 %v1337
    %v1386 = vunpack.c.l.b16 %v1338
    %v1387 = vunpack.c.h.b16 %v1338
    %v1388 = vunpack.c.l.b16 %v1339
    %v1389 = vunpack.c.h.b16 %v1339
    %v1390 = vunpack.c.l.b16 %v1340
    %v1391 = vunpack.c.h.b16 %v1340
    %v1392 = vunpack.c.l.b16 %v1341
    %v1393 = vunpack.c.h.b16 %v1341
    %v1394 = vunpack.c.l.b16 %v1342
    %v1395 = vunpack.c.h.b16 %v1342
    %v1396 = vunpack.c.l.b16 %v1343
    %v1397 = vunpack.c.h.b16 %v1343
    %v1398 = vunpack.c.l.b16 %v1344
    %v1399 = vunpack.c.h.b16 %v1344
    %v1400 = vunpack.c.l.b16 %v1345
    %v1401 = vunpack.c.h.b16 %v1345
    %v1402 = vunpack.c.l.b16 %v1346
    %v1403 = vunpack.c.h.b16 %v1346
    %v1404 = vunpack.c.l.b16 %v1347
    %v1405 = vunpack.c.h.b16 %v1347
    %v1406 = vunpack.c.l.b16 %v1348
    %v1407 = vunpack.c.h.b16 %v1348
    %v1408 = vunpack.c.l.b16 %v1349
    %v1409 = vunpack.c.h.b16 %v1349
    %v1410 = vpack.c.b16 %v1380, %v1378
    %v1411 = vpack.c.b16 %v1381, %v1379
    %v1412 = vpack.c.b16 %v1384, %v1382
    %v1413 = vpack.c.b16 %v1385, %v1383
    %v1414 = vpack.c.b16 %v1388, %v1386
    %v1415 = vpack.c.b16 %v1389, %v1387
    %v1416 = vpack.c.b16 %v1392, %v1390
    %v1417 = vpack.c.b16 %v1393, %v1391
    %v1418 = vpack.c.b16 %v1396, %v1394
    %v1419 = vpack.c.b16 %v1397, %v1395
    %v1420 = vpack.c.b16 %v1400, %v1398
    %v1421 = vpack.c.b16 %v1401, %v1399
    %v1422 = vpack.c.b16 %v1404, %v1402
    %v1423 = vpack.c.b16 %v1405, %v1403
    %v1424 = vpack.c.b16 %v1408, %v1406
    %v1425 = vpack.c.b16 %v1409, %v1407
    %1442 = vmatprep.subr.bf16.mxu0 %v1425
    %1443 = vmatpush1.bf16.msra.mxu0 %v1424
    %1444 = vmatprep.subr.bf16.mxu0 %v1423
    %1445 = vmatpush1.bf16.msra.mxu0 %v1422
    %1446 = vmatprep.subr.bf16.mxu0 %v1421
    %1447 = vmatpush1.bf16.msra.mxu0 %v1420
    %1448 = vmatprep.subr.bf16.mxu0 %v1419
    %1449 = vmatpush1.bf16.msra.mxu0 %v1418
    %1450 = vmatprep.subr.bf16.mxu0 %v1417
    %1451 = vmatpush1.bf16.msra.mxu0 %v1416
    %1452 = vmatprep.subr.bf16.mxu0 %v1415
    %1453 = vmatpush1.bf16.msra.mxu0 %v1414
    %1454 = vmatprep.subr.bf16.mxu0 %v1413
    %1455 = vmatpush1.bf16.msra.mxu0 %v1412
    %1456 = vmatprep.subr.bf16.mxu0 %v1411
    %1457 = vmatpush1.bf16.msra.mxu0 %v1410
    %1458 = vmatprep.subr.bf16.mxu0 0
    %1459 = vmatpush2.bf16.msra.mxu0 0
    %1460 = vmatprep.subr.bf16.mxu0 0
    %1461 = vmatpush2.bf16.msra.mxu0 0
    %1462 = vmatprep.subr.bf16.mxu0 0
    %1463 = vmatpush2.bf16.msra.mxu0 0
    %1464 = vmatprep.subr.bf16.mxu0 0
    %1465 = vmatpush2.bf16.msra.mxu0 0
    %1466 = vmatprep.subr.bf16.mxu0 0
    %1467 = vmatpush2.bf16.msra.mxu0 0
    %1468 = vmatprep.subr.bf16.mxu0 0
    %1469 = vmatpush2.bf16.msra.mxu0 0
    %1470 = vmatprep.subr.bf16.mxu0 0
    %1471 = vmatpush2.bf16.msra.mxu0 0
    %1472 = vmatprep.subr.bf16.mxu0 0
    %1473 = vmatpush2.bf16.msra.mxu0 0
    %1474 = vmatprep.mubr.bf16.mxu0 0
    %1475 = vmatmul.mubr.bf16.gmra.mxu0 %v1332
    %v1476 = vpop.f32.mrf.mxu0
    %v1477 = vadd.f32 %v1355, %v1476
    %v1478 = vpop.f32.mrf.mxu0
    %v1479 = vadd.f32 %v1359, %v1478
    %v1480 = vpop.f32.mrf.mxu0
    %v1481 = vadd.f32 %v1355, %v1480
    %v1482 = vpop.f32.mrf.mxu0
    %v1483 = vadd.f32 %v1359, %v1482
    %1484 = vmatprep.mubr.bf16.mxu0 0
    %1485 = vmatmul.mubr.bf16.gmra.mxu0 %v1333
    %v1486 = vpop.f32.mrf.mxu0
    %v1487 = vadd.f32 %v1355, %v1486
    %v1488 = vpop.f32.mrf.mxu0
    %v1489 = vadd.f32 %v1359, %v1488
    %v1490 = vpop.f32.mrf.mxu0
    %v1491 = vadd.f32 %v1355, %v1490
    %v1492 = vpop.f32.mrf.mxu0
    %v1493 = vadd.f32 %v1359, %v1492
    %1494 = vdwg.mxu0
    %v1495 = vmul.f32 %v1477, %v1477
    %v1496 = vmul.f32 %v1479, %v1479
    %v1497 = vmul.f32 %v1481, %v1481
    %v1498 = vmul.f32 %v1483, %v1483
    %v1499 = vmul.f32 %v1487, %v1487
    %v1500 = vmul.f32 %v1489, %v1489
    %v1501 = vmul.f32 %v1491, %v1491
    %v1502 = vmul.f32 %v1493, %v1493
    %v1503 = vmul.f32 %v1477, %v1495
    %v1504 = vmul.f32 %v1479, %v1496
    %v1505 = vmul.f32 %v1481, %v1497
    %v1506 = vmul.f32 %v1483, %v1498
    %v1507 = vmul.f32 %v1487, %v1499
    %v1508 = vmul.f32 %v1489, %v1500
    %v1509 = vmul.f32 %v1491, %v1501
    %v1510 = vmul.f32 %v1493, %v1502
    %v1511 = vmul.f32 %v1503, 0.044715
    %v1512 = vmul.f32 %v1504, 0.044715
    %v1513 = vmul.f32 %v1505, 0.044715
    %v1514 = vmul.f32 %v1506, 0.044715
    %v1515 = vmul.f32 %v1507, 0.044715
    %v1516 = vmul.f32 %v1508, 0.044715
    %v1517 = vmul.f32 %v1509, 0.044715
    %v1518 = vmul.f32 %v1510, 0.044715
    %v1519 = vadd.f32 %v1477, %v1511
    %v1520 = vadd.f32 %v1479, %v1512
    %v1521 = vadd.f32 %v1481, %v1513
    %v1522 = vadd.f32 %v1483, %v1514
    %v1523 = vadd.f32 %v1487, %v1515
    %v1524 = vadd.f32 %v1489, %v1516
    %v1525 = vadd.f32 %v1491, %v1517
    %v1526 = vadd.f32 %v1493, %v1518
    %v1527 = vmul.f32 %v1519, 0.7978846
    %v1528 = vmul.f32 %v1520, 0.7978846
    %v1529 = vmul.f32 %v1521, 0.7978846
    %v1530 = vmul.f32 %v1522, 0.7978846
    %v1531 = vmul.f32 %v1523, 0.7978846
    %v1532 = vmul.f32 %v1524, 0.7978846
    %v1533 = vmul.f32 %v1525, 0.7978846
    %v1534 = vmul.f32 %v1526, 0.7978846
    %v1535 = vtanh.pop %v1527
    %v1536 = vtanh.pop %v1528
    %v1537 = vtanh.pop %v1529
    %v1538 = vtanh.pop %v1530
    %v1539 = vtanh.pop %v1531
    %v1540 = vtanh.pop %v1532
    %v1541 = vtanh.pop %v1533
    %v1542 = vtanh.pop %v1534
    %v1543 = vadd.f32 %v1535, 1.0
    %v1544 = vadd.f32 %v1536, 1.0
    %v1545 = vadd.f32 %v1537, 1.0
    %v1546 = vadd.f32 %v1538, 1.0
    %v1547 = vadd.f32 %v1539, 1.0
    %v1548 = vadd.f32 %v1540, 1.0
    %v1549 = vadd.f32 %v1541, 1.0
    %v1550 = vadd.f32 %v1542, 1.0
    %v1551 = vmul.f32 %v1543, 0.5
    %v1552 = vmul.f32 %v1544, 0.5
    %v1553 = vmul.f32 %v1545, 0.5
    %v1554 = vmul.f32 %v1546, 0.5
    %v1555 = vmul.f32 %v1547, 0.5
    %v1556 = vmul.f32 %v1548, 0.5
    %v1557 = vmul.f32 %v1549, 0.5
    %v1558 = vmul.f32 %v1550, 0.5
    %v1559 = vmul.f32 %v1477, %v1551
    %v1560 = vmul.f32 %v1479, %v1552
    %v1561 = vmul.f32 %v1481, %v1553
    %v1562 = vmul.f32 %v1483, %v1554
    %v1563 = vmul.f32 %v1487, %v1555
    %v1564 = vmul.f32 %v1489, %v1556
    %v1565 = vmul.f32 %v1491, %v1557
    %v1566 = vmul.f32 %v1493, %v1558
    %v1567 = vpack.c.bf16 %v1561, %v1559
    %v1568 = vpack.c.bf16 %v1562, %v1560
    %v1569 = vpack.c.bf16 %v1565, %v1563
    %v1570 = vpack.c.bf16 %v1566, %v1564
    %v1571 = vld [vmem:[%s15] sm:$0xf]
    %v1572 = vld [vmem:[%s15 + $0x4] sm:$0xf]
    %v1573 = vld [vmem:[%s15 + $0x8] sm:$0xf]
    %v1574 = vld [vmem:[%s15 + $0xc] sm:$0xf]
    %v1575 = vld [vmem:[%s15 + $0x10] sm:$0xf]
    %v1576 = vld [vmem:[%s15 + $0x14] sm:$0xf]
    %v1577 = vld [vmem:[%s15 + $0x18] sm:$0xf]
    %v1578 = vld [vmem:[%s15 + $0x1c] sm:$0xf]
    %v1579 = vld [vmem:[%s15 + $0x20] sm:$0xf]
    %v1580 = vld [vmem:[%s15 + $0x24] sm:$0xf]
    %v1581 = vld [vmem:[%s15 + $0x28] sm:$0xf]
    %v1582 = vld [vmem:[%s15 + $0x2c] sm:$0xf]
    %v1583 = vld [vmem:[%s15 + $0x30] sm:$0xf]
    %v1584 = vld [vmem:[%s15 + $0x34] sm:$0xf]
    %v1585 = vld [vmem:[%s15 + $0x38] sm:$0xf]
    %v1586 = vld [vmem:[%s15 + $0x3c] sm:$0xf]
    %v1587 = vld [vmem:[%s15 + $0x40] sm:$0xf]
    %v1588 = vld [vmem:[%s15 + $0x44] sm:$0xf]
    %v1589 = vld [vmem:[%s15 + $0x48] sm:$0xf]
    %v1590 = vld [vmem:[%s15 + $0x4c] sm:$0xf]
    %v1591 = vld [vmem:[%s15 + $0x50] sm:$0xf]
    %v1592 = vld [vmem:[%s15 + $0x54] sm:$0xf]
    %v1593 = vld [vmem:[%s15 + $0x58] sm:$0xf]
    %v1594 = vld [vmem:[%s15 + $0x5c] sm:$0xf]
    %v1595 = vld [vmem:[%s15 + $0x60] sm:$0xf]
    %v1596 = vld [vmem:[%s15 + $0x64] sm:$0xf]
    %v1597 = vld [vmem:[%s15 + $0x68] sm:$0xf]
    %v1598 = vld [vmem:[%s15 + $0x6c] sm:$0xf]
    %v1599 = vld [vmem:[%s15 + $0x70] sm:$0xf]
    %v1600 = vld [vmem:[%s15 + $0x74] sm:$0xf]
    %v1601 = vld [vmem:[%s15 + $0x78] sm:$0xf]
    %v1602 = vld [vmem:[%s15 + $0x7c] sm:$0xf]
    %v1603 = vld [vmem:[%s16] sm:$0x1]
    %v1605 = vlaneseq
    %v1606 = vshrl.u32 %v1605, 7
    %v1607 = vsub.s32 0, %v1606
    %v1608 = vrot.slane %v1603, %v1607
    %v1642 = vunpack.c.l.b16 %v1571
    %v1643 = vunpack.c.l.b16 %v1572
    %v1644 = vunpack.c.l.b16 %v1573
    %v1645 = vunpack.c.l.b16 %v1574
    %v1646 = vunpack.c.l.b16 %v1575
    %v1647 = vunpack.c.l.b16 %v1576
    %v1648 = vunpack.c.l.b16 %v1577
    %v1649 = vunpack.c.l.b16 %v1578
    %v1650 = vunpack.c.l.b16 %v1579
    %v1651 = vunpack.c.l.b16 %v1580
    %v1652 = vunpack.c.l.b16 %v1581
    %v1653 = vunpack.c.l.b16 %v1582
    %v1654 = vunpack.c.l.b16 %v1583
    %v1655 = vunpack.c.l.b16 %v1584
    %v1656 = vunpack.c.l.b16 %v1585
    %v1657 = vunpack.c.l.b16 %v1586
    %v1658 = vunpack.c.l.b16 %v1587
    %v1659 = vunpack.c.l.b16 %v1588
    %v1660 = vunpack.c.l.b16 %v1589
    %v1661 = vunpack.c.l.b16 %v1590
    %v1662 = vunpack.c.l.b16 %v1591
    %v1663 = vunpack.c.l.b16 %v1592
    %v1664 = vunpack.c.l.b16 %v1593
    %v1665 = vunpack.c.l.b16 %v1594
    %v1666 = vunpack.c.l.b16 %v1595
    %v1667 = vunpack.c.l.b16 %v1596
    %v1668 = vunpack.c.l.b16 %v1597
    %v1669 = vunpack.c.l.b16 %v1598
    %v1670 = vunpack.c.l.b16 %v1599
    %v1671 = vunpack.c.l.b16 %v1600
    %v1672 = vunpack.c.l.b16 %v1601
    %v1673 = vunpack.c.l.b16 %v1602
    %v1674 = vpack.c.b16 %v1643, %v1642
    %v1675 = vpack.c.b16 %v1645, %v1644
    %v1676 = vpack.c.b16 %v1647, %v1646
    %v1677 = vpack.c.b16 %v1649, %v1648
    %v1678 = vpack.c.b16 %v1651, %v1650
    %v1679 = vpack.c.b16 %v1653, %v1652
    %v1680 = vpack.c.b16 %v1655, %v1654
    %v1681 = vpack.c.b16 %v1657, %v1656
    %v1682 = vpack.c.b16 %v1659, %v1658
    %v1683 = vpack.c.b16 %v1661, %v1660
    %v1684 = vpack.c.b16 %v1663, %v1662
    %v1685 = vpack.c.b16 %v1665, %v1664
    %v1686 = vpack.c.b16 %v1667, %v1666
    %v1687 = vpack.c.b16 %v1669, %v1668
    %v1688 = vpack.c.b16 %v1671, %v1670
    %v1689 = vpack.c.b16 %v1673, %v1672
    %1706 = vmatprep.subr.bf16.mxu0 0
    %1707 = vmatpush1.bf16.msra.mxu0 %v1681
    %1708 = vmatprep.subr.bf16.mxu0 0
    %1709 = vmatpush1.bf16.msra.mxu0 %v1680
    %1710 = vmatprep.subr.bf16.mxu0 0
    %1711 = vmatpush1.bf16.msra.mxu0 %v1679
    %1712 = vmatprep.subr.bf16.mxu0 0
    %1713 = vmatpush1.bf16.msra.mxu0 %v1678
    %1714 = vmatprep.subr.bf16.mxu0 0
    %1715 = vmatpush1.bf16.msra.mxu0 %v1677
    %1716 = vmatprep.subr.bf16.mxu0 0
    %1717 = vmatpush1.bf16.msra.mxu0 %v1676
    %1718 = vmatprep.subr.bf16.mxu0 0
    %1719 = vmatpush1.bf16.msra.mxu0 %v1675
    %1720 = vmatprep.subr.bf16.mxu0 0
    %1721 = vmatpush1.bf16.msra.mxu0 %v1674
    %1722 = vmatprep.subr.bf16.mxu0 0
    %1723 = vmatpush2.bf16.msra.mxu0 %v1689
    %1724 = vmatprep.subr.bf16.mxu0 0
    %1725 = vmatpush2.bf16.msra.mxu0 %v1688
    %1726 = vmatprep.subr.bf16.mxu0 0
    %1727 = vmatpush2.bf16.msra.mxu0 %v1687
    %1728 = vmatprep.subr.bf16.mxu0 0
    %1729 = vmatpush2.bf16.msra.mxu0 %v1686
    %1730 = vmatprep.subr.bf16.mxu0 0
    %1731 = vmatpush2.bf16.msra.mxu0 %v1685
    %1732 = vmatprep.subr.bf16.mxu0 0
    %1733 = vmatpush2.bf16.msra.mxu0 %v1684
    %1734 = vmatprep.subr.bf16.mxu0 0
    %1735 = vmatpush2.bf16.msra.mxu0 %v1683
    %1736 = vmatprep.subr.bf16.mxu0 0
    %1737 = vmatpush2.bf16.msra.mxu0 %v1682
    %1738 = vmatprep.mubr.bf16.mxu0 %v1568
    %1739 = vmatmul.mubr.bf16.gmra.mxu0 %v1567
    %v1740 = vpop.f32.mrf.mxu0
    %v1741 = vadd.f32 %v1608, %v1740
    %v1742 = vpop.f32.mrf.mxu0
    %v1743 = vpop.f32.mrf.mxu0
    %v1744 = vadd.f32 %v1608, %v1743
    %v1745 = vpop.f32.mrf.mxu0
    %1746 = vmatprep.mubr.bf16.mxu0 %v1570
    %1747 = vmatmul.mubr.bf16.gmra.mxu0 %v1569
    %v1748 = vpop.f32.mrf.mxu0
    %v1749 = vadd.f32 %v1608, %v1748
    %v1750 = vpop.f32.mrf.mxu0
    %v1751 = vpop.f32.mrf.mxu0
    %v1752 = vadd.f32 %v1608, %v1751
    %v1753 = vpop.f32.mrf.mxu0
    %1754 = vdwg.mxu0
    %v1755 = vadd.f32 %v1328, %v1741
    %v1756 = vadd.f32 %v1329, %v1744
    %v1757 = vadd.f32 %v1330, %v1749
    %v1758 = vadd.f32 %v1331, %v1752
    %v1759 = vld [vmem:[%s17] sm:$0x1]
    %v1760 = vld [vmem:[%s18] sm:$0x1]
    %1761 = vadd.xlane.f32.xlu0 %v1755
    %v1762 = vpop.xlane.xlu0 %1761
    %1763 = vadd.xlane.f32.xlu0 %v1756
    %v1764 = vpop.xlane.xlu0 %1763
    %1765 = vadd.xlane.f32.xlu0 %v1757
    %v1766 = vpop.xlane.xlu0 %1765
    %1767 = vadd.xlane.f32.xlu0 %v1758
    %v1768 = vpop.xlane.xlu0 %1767
    %v1769 = vmul.f32 %v1762, %v201
    %v1770 = vmul.f32 %v1764, %v201
    %v1771 = vmul.f32 %v1766, %v201
    %v1772 = vmul.f32 %v1768, %v201
    %v1773 = vsub.f32 %v1755, %v1769
    %v1774 = vsub.f32 %v1756, %v1770
    %v1775 = vsub.f32 %v1757, %v1771
    %v1776 = vsub.f32 %v1758, %v1772
    %v1777 = vmul.f32 %v1773, %v1773
    %v1778 = vmul.f32 %v1774, %v1774
    %v1779 = vmul.f32 %v1775, %v1775
    %v1780 = vmul.f32 %v1776, %v1776
    %1781 = vadd.xlane.f32.xlu0 %v1777
    %v1782 = vpop.xlane.xlu0 %1781
    %1783 = vadd.xlane.f32.xlu0 %v1778
    %v1784 = vpop.xlane.xlu0 %1783
    %1785 = vadd.xlane.f32.xlu0 %v1779
    %v1786 = vpop.xlane.xlu0 %1785
    %1787 = vadd.xlane.f32.xlu0 %v1780
    %v1788 = vpop.xlane.xlu0 %1787
    %v1789 = vmul.f32 %v1782, %v201
    %v1790 = vmul.f32 %v1784, %v201
    %v1791 = vmul.f32 %v1786, %v201
    %v1792 = vmul.f32 %v1788, %v201
    %v1793 = vadd.f32 %v1789, 1e-12
    %v1794 = vadd.f32 %v1790, 1e-12
    %v1795 = vadd.f32 %v1791, 1e-12
    %v1796 = vadd.f32 %v1792, 1e-12
    %v1797 = vrsqrt.pop %v1793
    %v1798 = vrsqrt.pop %v1794
    %v1799 = vrsqrt.pop %v1795
    %v1800 = vrsqrt.pop %v1796
    %v1801 = vmul.f32 %v1773, %v1797
    %v1802 = vmul.f32 %v1774, %v1798
    %v1803 = vmul.f32 %v1775, %v1799
    %v1804 = vmul.f32 %v1776, %v1800
    %v1806 = vlaneseq
    %v1807 = vshrl.u32 %v1806, 7
    %v1808 = vsub.s32 0, %v1807
    %v1809 = vrot.slane %v1759, %v1808
    %v1811 = vmul.f32 %v1801, %v1809
    %v1812 = vmul.f32 %v1802, %v1809
    %v1813 = vmul.f32 %v1803, %v1809
    %v1814 = vmul.f32 %v1804, %v1809
    %v1816 = vlaneseq
    %v1817 = vshrl.u32 %v1816, 7
    %v1818 = vsub.s32 0, %v1817
    %v1819 = vrot.slane %v1760, %v1818
    %v1821 = vadd.f32 %v1811, %v1819
    %v1822 = vadd.f32 %v1812, %v1819
    %v1823 = vadd.f32 %v1813, %v1819
    %v1824 = vadd.f32 %v1814, %v1819
    %v1825 = vpack.c.bf16 %v1822, %v1821
    %v1826 = vpack.c.bf16 %v1824, %v1823
    %s1827 = scalar_lea.vmem %s7, 192
    %v1828 = vld [vmem:[%s1827] sm:$0xff]
    %v1829 = vld [vmem:[%s1827 + $0x8] sm:$0xf]
    %v1830 = vld [vmem:[%s1827 + $0xc] sm:$0xff]
    %v1831 = vld [vmem:[%s1827 + $0x14] sm:$0xf]
    %v1832 = vld [vmem:[%s1827 + $0x18] sm:$0xff]
    %v1833 = vld [vmem:[%s1827 + $0x20] sm:$0xf]
    %v1834 = vld [vmem:[%s1827 + $0x24] sm:$0xff]
    %v1835 = vld [vmem:[%s1827 + $0x2c] sm:$0xf]
    %v1836 = vld [vmem:[%s1827 + $0x30] sm:$0xff]
    %v1837 = vld [vmem:[%s1827 + $0x38] sm:$0xf]
    %v1838 = vld [vmem:[%s1827 + $0x3c] sm:$0xff]
    %v1839 = vld [vmem:[%s1827 + $0x44] sm:$0xf]
    %v1840 = vld [vmem:[%s1827 + $0x48] sm:$0xff]
    %v1841 = vld [vmem:[%s1827 + $0x50] sm:$0xf]
    %v1842 = vld [vmem:[%s1827 + $0x54] sm:$0xff]
    %v1843 = vld [vmem:[%s1827 + $0x5c] sm:$0xf]
    %v1844 = vld [vmem:[%s1827 + $0x60] sm:$0xff]
    %v1845 = vld [vmem:[%s1827 + $0x68] sm:$0xf]
    %v1846 = vld [vmem:[%s1827 + $0x6c] sm:$0xff]
    %v1847 = vld [vmem:[%s1827 + $0x74] sm:$0xf]
    %v1848 = vld [vmem:[%s1827 + $0x78] sm:$0xff]
    %v1849 = vld [vmem:[%s1827 + $0x80] sm:$0xf]
    %v1850 = vld [vmem:[%s1827 + $0x84] sm:$0xff]
    %v1851 = vld [vmem:[%s1827 + $0x8c] sm:$0xf]
    %v1852 = vld [vmem:[%s1827 + $0x90] sm:$0xff]
    %v1853 = vld [vmem:[%s1827 + $0x98] sm:$0xf]
    %v1854 = vld [vmem:[%s1827 + $0x9c] sm:$0xff]
    %v1855 = vld [vmem:[%s1827 + $0xa4] sm:$0xf]
    %v1856 = vld [vmem:[%s1827 + $0xa8] sm:$0xff]
    %v1857 = vld [vmem:[%s1827 + $0xb0] sm:$0xf]
    %v1858 = vld [vmem:[%s1827 + $0xb4] sm:$0xff]
    %v1859 = vld [vmem:[%s1827 + $0xbc] sm:$0xf]
    %s1860 = scalar_lea.vmem %s8, 3
    %v1861 = vld [vmem:[%s1860] sm:$0x7]
    %v1863 = vlaneseq
    %v1864 = vshrl.u32 %v1863, 7
    %v1865 = vsub.s32 0, %v1864
    %v1866 = vrot.slane %v1861, %v1865
    %v1867 = vlaneseq
    %v1868 = vshrl.u32 %v1867, 7
    %v1869 = vsub.s32 1, %v1868
    %v1870 = vrot.slane %v1861, %v1869
    %v1871 = vlaneseq
    %v1872 = vshrl.u32 %v1871, 7
    %v1873 = vsub.s32 2, %v1872
    %v1874 = vrot.slane %v1861, %v1873
    %v1910 = vunpack.c.l.b16 %v1828
    %v1911 = vunpack.c.h.b16 %v1828
    %v1912 = vunpack.c.l.b16 %v1829
    %v1913 = vunpack.c.l.b16 %v1830
    %v1914 = vunpack.c.h.b16 %v1830
    %v1915 = vunpack.c.l.b16 %v1831
    %v1916 = vunpack.c.l.b16 %v1832
    %v1917 = vunpack.c.h.b16 %v1832
    %v1918 = vunpack.c.l.b16 %v1833
    %v1919 = vunpack.c.l.b16 %v1834
    %v1920 = vunpack.c.h.b16 %v1834
    %v1921 = vunpack.c.l.b16 %v1835
    %v1922 = vunpack.c.l.b16 %v1836
    %v1923 = vunpack.c.h.b16 %v1836
    %v1924 = vunpack.c.l.b16 %v1837
    %v1925 = vunpack.c.l.b16 %v1838
    %v1926 = vunpack.c.h.b16 %v1838
    %v1927 = vunpack.c.l.b16 %v1839
    %v1928 = vunpack.c.l.b16 %v1840
    %v1929 = vunpack.c.h.b16 %v1840
    %v1930 = vunpack.c.l.b16 %v1841
    %v1931 = vunpack.c.l.b16 %v1842
    %v1932 = vunpack.c.h.b16 %v1842
    %v1933 = vunpack.c.l.b16 %v1843
    %v1934 = vunpack.c.l.b16 %v1844
    %v1935 = vunpack.c.h.b16 %v1844
    %v1936 = vunpack.c.l.b16 %v1845
    %v1937 = vunpack.c.l.b16 %v1846
    %v1938 = vunpack.c.h.b16 %v1846
    %v1939 = vunpack.c.l.b16 %v1847
    %v1940 = vunpack.c.l.b16 %v1848
    %v1941 = vunpack.c.h.b16 %v1848
    %v1942 = vunpack.c.l.b16 %v1849
    %v1943 = vunpack.c.l.b16 %v1850
    %v1944 = vunpack.c.h.b16 %v1850
    %v1945 = vunpack.c.l.b16 %v1851
    %v1946 = vunpack.c.l.b16 %v1852
    %v1947 = vunpack.c.h.b16 %v1852
    %v1948 = vunpack.c.l.b16 %v1853
    %v1949 = vunpack.c.l.b16 %v1854
    %v1950 = vunpack.c.h.b16 %v1854
    %v1951 = vunpack.c.l.b16 %v1855
    %v1952 = vunpack.c.l.b16 %v1856
    %v1953 = vunpack.c.h.b16 %v1856
    %v1954 = vunpack.c.l.b16 %v1857
    %v1955 = vunpack.c.l.b16 %v1858
    %v1956 = vunpack.c.h.b16 %v1858
    %v1957 = vunpack.c.l.b16 %v1859
    %v1958 = vpack.c.b16 %v1913, %v1910
    %v1959 = vpack.c.b16 %v1914, %v1911
    %v1960 = vpack.c.b16 %v1915, %v1912
    %v1961 = vpack.c.b16 %v1919, %v1916
    %v1962 = vpack.c.b16 %v1920, %v1917
    %v1963 = vpack.c.b16 %v1921, %v1918
    %v1964 = vpack.c.b16 %v1925, %v1922
    %v1965 = vpack.c.b16 %v1926, %v1923
    %v1966 = vpack.c.b16 %v1927, %v1924
    %v1967 = vpack.c.b16 %v1931, %v1928
    %v1968 = vpack.c.b16 %v1932, %v1929
    %v1969 = vpack.c.b16 %v1933, %v1930
    %v1970 = vpack.c.b16 %v1937, %v1934
    %v1971 = vpack.c.b16 %v1938, %v1935
    %v1972 = vpack.c.b16 %v1939, %v1936
    %v1973 = vpack.c.b16 %v1943, %v1940
    %v1974 = vpack.c.b16 %v1944, %v1941
    %v1975 = vpack.c.b16 %v1945, %v1942
    %v1976 = vpack.c.b16 %v1949, %v1946
    %v1977 = vpack.c.b16 %v1950, %v1947
    %v1978 = vpack.c.b16 %v1951, %v1948
    %v1979 = vpack.c.b16 %v1955, %v1952
    %v1980 = vpack.c.b16 %v1956, %v1953
    %v1981 = vpack.c.b16 %v1957, %v1954
    %2006 = vmatprep.subr.bf16.mxu0 %v1980
    %2007 = vmatpush1.bf16.msra.mxu0 %v1979
    %2008 = vmatprep.subr.bf16.mxu0 %v1977
    %2009 = vmatpush1.bf16.msra.mxu0 %v1976
    %2010 = vmatprep.subr.bf16.mxu0 %v1974
    %2011 = vmatpush1.bf16.msra.mxu0 %v1973
    %2012 = vmatprep.subr.bf16.mxu0 %v1971
    %2013 = vmatpush1.bf16.msra.mxu0 %v1970
    %2014 = vmatprep.subr.bf16.mxu0 %v1968
    %2015 = vmatpush1.bf16.msra.mxu0 %v1967
    %2016 = vmatprep.subr.bf16.mxu0 %v1965
    %2017 = vmatpush1.bf16.msra.mxu0 %v1964
    %2018 = vmatprep.subr.bf16.mxu0 %v1962
    %2019 = vmatpush1.bf16.msra.mxu0 %v1961
    %2020 = vmatprep.subr.bf16.mxu0 %v1959
    %2021 = vmatpush1.bf16.msra.mxu0 %v1958
    %2022 = vmatprep.subr.bf16.mxu0 0
    %2023 = vmatpush2.bf16.msra.mxu0 0
    %2024 = vmatprep.subr.bf16.mxu0 0
    %2025 = vmatpush2.bf16.msra.mxu0 0
    %2026 = vmatprep.subr.bf16.mxu0 0
    %2027 = vmatpush2.bf16.msra.mxu0 0
    %2028 = vmatprep.subr.bf16.mxu0 0
    %2029 = vmatpush2.bf16.msra.mxu0 0
    %2030 = vmatprep.subr.bf16.mxu0 0
    %2031 = vmatpush2.bf16.msra.mxu0 0
    %2032 = vmatprep.subr.bf16.mxu0 0
    %2033 = vmatpush2.bf16.msra.mxu0 0
    %2034 = vmatprep.subr.bf16.mxu0 0
    %2035 = vmatpush2.bf16.msra.mxu0 0
    %2036 = vmatprep.subr.bf16.mxu0 0
    %2037 = vmatpush2.bf16.msra.mxu0 0
    %2038 = vmatprep.mubr.bf16.mxu0 0
    %2039 = vmatmul.mubr.bf16.gmra.mxu0 %v1825
    %v2040 = vpop.f32.mrf.mxu0
    %v2041 = vadd.f32 %v1866, %v2040
    %v2042 = vpop.f32.mrf.mxu0
    %v2043 = vadd.f32 %v1870, %v2042
    %v2044 = vpop.f32.mrf.mxu0
    %v2045 = vadd.f32 %v1866, %v2044
    %v2046 = vpop.f32.mrf.mxu0
    %v2047 = vadd.f32 %v1870, %v2046
    %2048 = vmatprep.mubr.bf16.mxu0 0
    %2049 = vmatmul.mubr.bf16.gmra.mxu0 %v1826
    %v2050 = vpop.f32.mrf.mxu0
    %v2051 = vadd.f32 %v1866, %v2050
    %v2052 = vpop.f32.mrf.mxu0
    %v2053 = vadd.f32 %v1870, %v2052
    %v2054 = vpop.f32.mrf.mxu0
    %v2055 = vadd.f32 %v1866, %v2054
    %v2056 = vpop.f32.mrf.mxu0
    %v2057 = vadd.f32 %v1870, %v2056
    %2058 = vdwg.mxu0
    %2059 = vmatprep.subr.bf16.mxu0 0
    %2060 = vmatpush1.bf16.msra.mxu0 %v1981
    %2061 = vmatprep.subr.bf16.mxu0 0
    %2062 = vmatpush1.bf16.msra.mxu0 %v1978
    %2063 = vmatprep.subr.bf16.mxu0 0
    %2064 = vmatpush1.bf16.msra.mxu0 %v1975
    %2065 = vmatprep.subr.bf16.mxu0 0
    %2066 = vmatpush1.bf16.msra.mxu0 %v1972
    %2067 = vmatprep.subr.bf16.mxu0 0
    %2068 = vmatpush1.bf16.msra.mxu0 %v1969
    %2069 = vmatprep.subr.bf16.mxu0 0
    %2070 = vmatpush1.bf16.msra.mxu0 %v1966
    %2071 = vmatprep.subr.bf16.mxu0 0
    %2072 = vmatpush1.bf16.msra.mxu0 %v1963
    %2073 = vmatprep.subr.bf16.mxu0 0
    %2074 = vmatpush1.bf16.msra.mxu0 %v1960
    %2075 = vmatprep.subr.bf16.mxu0 0
    %2076 = vmatpush2.bf16.msra.mxu0 0
    %2077 = vmatprep.subr.bf16.mxu0 0
    %2078 = vmatpush2.bf16.msra.mxu0 0
    %2079 = vmatprep.subr.bf16.mxu0 0
    %2080 = vmatpush2.bf16.msra.mxu0 0
    %2081 = vmatprep.subr.bf16.mxu0 0
    %2082 = vmatpush2.bf16.msra.mxu0 0
    %2083 = vmatprep.subr.bf16.mxu0 0
    %2084 = vmatpush2.bf16.msra.mxu0 0
    %2085 = vmatprep.subr.bf16.mxu0 0
    %2086 = vmatpush2.bf16.msra.mxu0 0
    %2087 = vmatprep.subr.bf16.mxu0 0
    %2088 = vmatpush2.bf16.msra.mxu0 0
    %2089 = vmatprep.subr.bf16.mxu0 0
    %2090 = vmatpush2.bf16.msra.mxu0 0
    %2091 = vmatprep.mubr.bf16.mxu0 0
    %2092 = vmatmul.mubr.bf16.gmra.mxu0 %v1825
    %v2093 = vpop.f32.mrf.mxu0
    %v2094 = vadd.f32 %v1874, %v2093
    %v2095 = vpop.f32.mrf.mxu0
    %v2096 = vpop.f32.mrf.mxu0
    %v2097 = vadd.f32 %v1874, %v2096
    %v2098 = vpop.f32.mrf.mxu0
    %2099 = vmatprep.mubr.bf16.mxu0 0
    %2100 = vmatmul.mubr.bf16.gmra.mxu0 %v1826
    %v2101 = vpop.f32.mrf.mxu0
    %v2102 = vadd.f32 %v1874, %v2101
    %v2103 = vpop.f32.mrf.mxu0
    %v2104 = vpop.f32.mrf.mxu0
    %v2105 = vadd.f32 %v1874, %v2104
    %v2106 = vpop.f32.mrf.mxu0
    %2107 = vdwg.mxu0
    %v2108 = vpack.c.bf16 %v2045, %v2041
    %v2109 = vpack.c.bf16 %v2055, %v2051
    %v2110 = vpack.c.bf16 %v2047, %v2043
    %v2111 = vpack.c.bf16 %v2057, %v2053
    %v2112 = vpack.c.bf16 %v2097, %v2094
    %v2113 = vpack.c.bf16 %v2105, %v2102
    %v2115 = vsel %vm569, %v2108, 0
    %v2118 = vsel %vm569, %v2110, 0
    %2120 = vmatprep.subr.bf16.mxu0 0
    %2121 = vmatpush1.bf16.xpose.msra.mxu0 0
    %2122 = vmatprep.subr.bf16.mxu0 0
    %2123 = vmatpush1.bf16.xpose.msra.mxu0 0
    %2124 = vmatprep.subr.bf16.mxu0 0
    %2125 = vmatpush1.bf16.xpose.msra.mxu0 0
    %2126 = vmatprep.subr.bf16.mxu0 0
    %2127 = vmatpush1.bf16.xpose.msra.mxu0 0
    %2128 = vmatprep.subr.bf16.mxu0 0
    %2129 = vmatpush1.bf16.xpose.msra.mxu0 0
    %2130 = vmatprep.subr.bf16.mxu0 0
    %2131 = vmatpush1.bf16.xpose.msra.mxu0 0
    %2132 = vmatprep.subr.bf16.mxu0 0
    %2133 = vmatpush1.bf16.xpose.msra.mxu0 0
    %2134 = vmatprep.subr.bf16.mxu0 0
    %2135 = vmatpush1.bf16.xpose.msra.mxu0 %v2118
    %2136 = vmatprep.subr.bf16.mxu0 0
    %2137 = vmatpush2.bf16.xpose.msra.mxu0 0
    %2138 = vmatprep.subr.bf16.mxu0 0
    %2139 = vmatpush2.bf16.xpose.msra.mxu0 0
    %2140 = vmatprep.subr.bf16.mxu0 0
    %2141 = vmatpush2.bf16.xpose.msra.mxu0 0
    %2142 = vmatprep.subr.bf16.mxu0 0
    %2143 = vmatpush2.bf16.xpose.msra.mxu0 0
    %2144 = vmatprep.subr.bf16.mxu0 0
    %2145 = vmatpush2.bf16.xpose.msra.mxu0 0
    %2146 = vmatprep.subr.bf16.mxu0 0
    %2147 = vmatpush2.bf16.xpose.msra.mxu0 0
    %2148 = vmatprep.subr.bf16.mxu0 0
    %2149 = vmatpush2.bf16.xpose.msra.mxu0 0
    %2150 = vmatprep.subr.bf16.mxu0 0
    %2151 = vmatpush2.bf16.xpose.msra.mxu0 0
    %2152 = vmatprep.mubr.bf16.mxu0 0
    %2153 = vmatmul.mubr.bf16.gmra.mxu0 %v2115
    %v2154 = vpop.f32.mrf.mxu0
    %v2155 = vadd.f32 0.0, %v2154
    %v2156 = vpop.f32.mrf.mxu0
    %v2157 = vpop.f32.mrf.mxu0
    %v2158 = vadd.f32 0.0, %v2157
    %v2159 = vpop.f32.mrf.mxu0
    %2160 = vdwg.mxu0
    %v2162 = vsel %vm569, %v2109, 0
    %v2165 = vsel %vm569, %v2111, 0
    %2167 = vmatprep.subr.bf16.mxu0 0
    %2168 = vmatpush1.bf16.xpose.msra.mxu0 0
    %2169 = vmatprep.subr.bf16.mxu0 0
    %2170 = vmatpush1.bf16.xpose.msra.mxu0 0
    %2171 = vmatprep.subr.bf16.mxu0 0
    %2172 = vmatpush1.bf16.xpose.msra.mxu0 0
    %2173 = vmatprep.subr.bf16.mxu0 0
    %2174 = vmatpush1.bf16.xpose.msra.mxu0 0
    %2175 = vmatprep.subr.bf16.mxu0 0
    %2176 = vmatpush1.bf16.xpose.msra.mxu0 0
    %2177 = vmatprep.subr.bf16.mxu0 0
    %2178 = vmatpush1.bf16.xpose.msra.mxu0 0
    %2179 = vmatprep.subr.bf16.mxu0 0
    %2180 = vmatpush1.bf16.xpose.msra.mxu0 0
    %2181 = vmatprep.subr.bf16.mxu0 0
    %2182 = vmatpush1.bf16.xpose.msra.mxu0 %v2165
    %2183 = vmatprep.subr.bf16.mxu0 0
    %2184 = vmatpush2.bf16.xpose.msra.mxu0 0
    %2185 = vmatprep.subr.bf16.mxu0 0
    %2186 = vmatpush2.bf16.xpose.msra.mxu0 0
    %2187 = vmatprep.subr.bf16.mxu0 0
    %2188 = vmatpush2.bf16.xpose.msra.mxu0 0
    %2189 = vmatprep.subr.bf16.mxu0 0
    %2190 = vmatpush2.bf16.xpose.msra.mxu0 0
    %2191 = vmatprep.subr.bf16.mxu0 0
    %2192 = vmatpush2.bf16.xpose.msra.mxu0 0
    %2193 = vmatprep.subr.bf16.mxu0 0
    %2194 = vmatpush2.bf16.xpose.msra.mxu0 0
    %2195 = vmatprep.subr.bf16.mxu0 0
    %2196 = vmatpush2.bf16.xpose.msra.mxu0 0
    %2197 = vmatprep.subr.bf16.mxu0 0
    %2198 = vmatpush2.bf16.xpose.msra.mxu0 0
    %2199 = vmatprep.mubr.bf16.mxu0 0
    %2200 = vmatmul.mubr.bf16.gmra.mxu0 %v2162
    %v2201 = vpop.f32.mrf.mxu0
    %v2202 = vadd.f32 0.0, %v2201
    %v2203 = vpop.f32.mrf.mxu0
    %v2204 = vpop.f32.mrf.mxu0
    %v2205 = vadd.f32 0.0, %v2204
    %v2206 = vpop.f32.mrf.mxu0
    %2207 = vdwg.mxu0
    %v2208 = vmul.f32 %v2155, 0.125
    %v2209 = vmul.f32 %v2158, 0.125
    %v2210 = vmul.f32 %v2202, 0.125
    %v2211 = vmul.f32 %v2205, 0.125
    %v2212 = vadd.f32 %v2208, %v671
    %v2213 = vadd.f32 %v2209, %v671
    %v2214 = vadd.f32 %v2210, %v675
    %v2215 = vadd.f32 %v2211, %v675
    %v2216 = vsel %vm682, %v2212, -inf
    %2217 = vmax.xlane.f32.xlu0 %v2216
    %v2218 = vpop.xlane.xlu0 %2217
    %v2219 = vsel %vm682, %v2213, -inf
    %2220 = vmax.xlane.f32.xlu0 %v2219
    %v2221 = vpop.xlane.xlu0 %2220
    %v2222 = vsel %vm682, %v2214, -inf
    %2223 = vmax.xlane.f32.xlu0 %v2222
    %v2224 = vpop.xlane.xlu0 %2223
    %v2225 = vsel %vm682, %v2215, -inf
    %2226 = vmax.xlane.f32.xlu0 %v2225
    %v2227 = vpop.xlane.xlu0 %2226
    %v2228 = vsub.f32 %v2212, %v2218
    %v2229 = vsub.f32 %v2213, %v2221
    %v2230 = vsub.f32 %v2214, %v2224
    %v2231 = vsub.f32 %v2215, %v2227
    %v2232 = vmul.f32 %v2228, 1.442695
    %v2233 = vpow.pop %v2232
    %v2234 = vmul.f32 %v2229, 1.442695
    %v2235 = vpow.pop %v2234
    %v2236 = vmul.f32 %v2230, 1.442695
    %v2237 = vpow.pop %v2236
    %v2238 = vmul.f32 %v2231, 1.442695
    %v2239 = vpow.pop %v2238
    %v2240 = vsel %vm682, %v2233, 0.0
    %2241 = vadd.xlane.f32.xlu0 %v2240
    %v2242 = vpop.xlane.xlu0 %2241
    %v2243 = vsel %vm682, %v2235, 0.0
    %2244 = vadd.xlane.f32.xlu0 %v2243
    %v2245 = vpop.xlane.xlu0 %2244
    %v2246 = vsel %vm682, %v2237, 0.0
    %2247 = vadd.xlane.f32.xlu0 %v2246
    %v2248 = vpop.xlane.xlu0 %2247
    %v2249 = vsel %vm682, %v2239, 0.0
    %2250 = vadd.xlane.f32.xlu0 %v2249
    %v2251 = vpop.xlane.xlu0 %2250
    %v2252 = vrcp.pop %v2242
    %v2253 = vrcp.pop %v2245
    %v2254 = vrcp.pop %v2248
    %v2255 = vrcp.pop %v2251
    %v2256 = vmul.f32 %v2233, %v2252
    %v2257 = vmul.f32 %v2235, %v2253
    %v2258 = vmul.f32 %v2237, %v2254
    %v2259 = vmul.f32 %v2239, %v2255
    %v2260 = vpack.c.bf16 %v2257, %v2256
    %v2261 = vpack.c.bf16 %v2259, %v2258
    %v2263 = vsel %vm682, %v2260, 0
    %2265 = vmatprep.subr.bf16.mxu0 0
    %2266 = vmatpush1.bf16.msra.mxu0 0
    %2267 = vmatprep.subr.bf16.mxu0 0
    %2268 = vmatpush1.bf16.msra.mxu0 0
    %2269 = vmatprep.subr.bf16.mxu0 0
    %2270 = vmatpush1.bf16.msra.mxu0 0
    %2271 = vmatprep.subr.bf16.mxu0 0
    %2272 = vmatpush1.bf16.msra.mxu0 0
    %2273 = vmatprep.subr.bf16.mxu0 0
    %2274 = vmatpush1.bf16.msra.mxu0 0
    %2275 = vmatprep.subr.bf16.mxu0 0
    %2276 = vmatpush1.bf16.msra.mxu0 0
    %2277 = vmatprep.subr.bf16.mxu0 0
    %2278 = vmatpush1.bf16.msra.mxu0 0
    %2279 = vmatprep.subr.bf16.mxu0 0
    %2280 = vmatpush1.bf16.msra.mxu0 %v2112
    %2281 = vmatprep.subr.bf16.mxu0 0
    %2282 = vmatpush2.bf16.msra.mxu0 0
    %2283 = vmatprep.subr.bf16.mxu0 0
    %2284 = vmatpush2.bf16.msra.mxu0 0
    %2285 = vmatprep.subr.bf16.mxu0 0
    %2286 = vmatpush2.bf16.msra.mxu0 0
    %2287 = vmatprep.subr.bf16.mxu0 0
    %2288 = vmatpush2.bf16.msra.mxu0 0
    %2289 = vmatprep.subr.bf16.mxu0 0
    %2290 = vmatpush2.bf16.msra.mxu0 0
    %2291 = vmatprep.subr.bf16.mxu0 0
    %2292 = vmatpush2.bf16.msra.mxu0 0
    %2293 = vmatprep.subr.bf16.mxu0 0
    %2294 = vmatpush2.bf16.msra.mxu0 0
    %2295 = vmatprep.subr.bf16.mxu0 0
    %2296 = vmatpush2.bf16.msra.mxu0 0
    %2297 = vmatprep.mubr.bf16.mxu0 0
    %2298 = vmatmul.mubr.bf16.gmra.mxu0 %v2263
    %v2299 = vpop.f32.mrf.mxu0
    %v2300 = vadd.f32 0.0, %v2299
    %v2301 = vpop.f32.mrf.mxu0
    %v2302 = vpop.f32.mrf.mxu0
    %v2303 = vadd.f32 0.0, %v2302
    %v2304 = vpop.f32.mrf.mxu0
    %2305 = vdwg.mxu0
    %v2307 = vsel %vm682, %v2261, 0
    %2309 = vmatprep.subr.bf16.mxu0 0
    %2310 = vmatpush1.bf16.msra.mxu0 0
    %2311 = vmatprep.subr.bf16.mxu0 0
    %2312 = vmatpush1.bf16.msra.mxu0 0
    %2313 = vmatprep.subr.bf16.mxu0 0
    %2314 = vmatpush1.bf16.msra.mxu0 0
    %2315 = vmatprep.subr.bf16.mxu0 0
    %2316 = vmatpush1.bf16.msra.mxu0 0
    %2317 = vmatprep.subr.bf16.mxu0 0
    %2318 = vmatpush1.bf16.msra.mxu0 0
    %2319 = vmatprep.subr.bf16.mxu0 0
    %2320 = vmatpush1.bf16.msra.mxu0 0
    %2321 = vmatprep.subr.bf16.mxu0 0
    %2322 = vmatpush1.bf16.msra.mxu0 0
    %2323 = vmatprep.subr.bf16.mxu0 0
    %2324 = vmatpush1.bf16.msra.mxu0 %v2113
    %2325 = vmatprep.subr.bf16.mxu0 0
    %2326 = vmatpush2.bf16.msra.mxu0 0
    %2327 = vmatprep.subr.bf16.mxu0 0
    %2328 = vmatpush2.bf16.msra.mxu0 0
    %2329 = vmatprep.subr.bf16.mxu0 0
    %2330 = vmatpush2.bf16.msra.mxu0 0
    %2331 = vmatprep.subr.bf16.mxu0 0
    %2332 = vmatpush2.bf16.msra.mxu0 0
    %2333 = vmatprep.subr.bf16.mxu0 0
    %2334 = vmatpush2.bf16.msra.mxu0 0
    %2335 = vmatprep.subr.bf16.mxu0 0
    %2336 = vmatpush2.bf16.msra.mxu0 0
    %2337 = vmatprep.subr.bf16.mxu0 0
    %2338 = vmatpush2.bf16.msra.mxu0 0
    %2339 = vmatprep.subr.bf16.mxu0 0
    %2340 = vmatpush2.bf16.msra.mxu0 0
    %2341 = vmatprep.mubr.bf16.mxu0 0
    %2342 = vmatmul.mubr.bf16.gmra.mxu0 %v2307
    %v2343 = vpop.f32.mrf.mxu0
    %v2344 = vadd.f32 0.0, %v2343
    %v2345 = vpop.f32.mrf.mxu0
    %v2346 = vpop.f32.mrf.mxu0
    %v2347 = vadd.f32 0.0, %v2346
    %v2348 = vpop.f32.mrf.mxu0
    %2349 = vdwg.mxu0
    %v2350 = vpack.c.bf16 %v2303, %v2300
    %v2351 = vpack.c.bf16 %v2347, %v2344
    %s2352 = scalar_lea.vmem [#allocation5], 64
    %v2353 = vld [vmem:[%s2352] sm:$0xf]
    %v2354 = vld [vmem:[%s2352 + $0x4] sm:$0xf]
    %v2355 = vld [vmem:[%s2352 + $0x8] sm:$0xf]
    %v2356 = vld [vmem:[%s2352 + $0xc] sm:$0xf]
    %v2357 = vld [vmem:[%s2352 + $0x10] sm:$0xf]
    %v2358 = vld [vmem:[%s2352 + $0x14] sm:$0xf]
    %v2359 = vld [vmem:[%s2352 + $0x18] sm:$0xf]
    %v2360 = vld [vmem:[%s2352 + $0x1c] sm:$0xf]
    %2362 = vrot.lane.b32.xlu0 %v2108, 64
    %v2363 = vpop.permute.xlu0 %2362
    %2365 = vrot.lane.b32.xlu0 %v2110, 64
    %v2366 = vpop.permute.xlu0 %2365
    %v2368 = vsel %vm569, %v2363, 0
    %v2371 = vsel %vm569, %v2366, 0
    %2373 = vmatprep.subr.bf16.mxu0 0
    %2374 = vmatpush1.bf16.xpose.msra.mxu0 0
    %2375 = vmatprep.subr.bf16.mxu0 0
    %2376 = vmatpush1.bf16.xpose.msra.mxu0 0
    %2377 = vmatprep.subr.bf16.mxu0 0
    %2378 = vmatpush1.bf16.xpose.msra.mxu0 0
    %2379 = vmatprep.subr.bf16.mxu0 0
    %2380 = vmatpush1.bf16.xpose.msra.mxu0 0
    %2381 = vmatprep.subr.bf16.mxu0 0
    %2382 = vmatpush1.bf16.xpose.msra.mxu0 0
    %2383 = vmatprep.subr.bf16.mxu0 0
    %2384 = vmatpush1.bf16.xpose.msra.mxu0 0
    %2385 = vmatprep.subr.bf16.mxu0 0
    %2386 = vmatpush1.bf16.xpose.msra.mxu0 0
    %2387 = vmatprep.subr.bf16.mxu0 0
    %2388 = vmatpush1.bf16.xpose.msra.mxu0 %v2371
    %2389 = vmatprep.subr.bf16.mxu0 0
    %2390 = vmatpush2.bf16.xpose.msra.mxu0 0
    %2391 = vmatprep.subr.bf16.mxu0 0
    %2392 = vmatpush2.bf16.xpose.msra.mxu0 0
    %2393 = vmatprep.subr.bf16.mxu0 0
    %2394 = vmatpush2.bf16.xpose.msra.mxu0 0
    %2395 = vmatprep.subr.bf16.mxu0 0
    %2396 = vmatpush2.bf16.xpose.msra.mxu0 0
    %2397 = vmatprep.subr.bf16.mxu0 0
    %2398 = vmatpush2.bf16.xpose.msra.mxu0 0
    %2399 = vmatprep.subr.bf16.mxu0 0
    %2400 = vmatpush2.bf16.xpose.msra.mxu0 0
    %2401 = vmatprep.subr.bf16.mxu0 0
    %2402 = vmatpush2.bf16.xpose.msra.mxu0 0
    %2403 = vmatprep.subr.bf16.mxu0 0
    %2404 = vmatpush2.bf16.xpose.msra.mxu0 0
    %2405 = vmatprep.mubr.bf16.mxu0 0
    %2406 = vmatmul.mubr.bf16.gmra.mxu0 %v2368
    %v2407 = vpop.f32.mrf.mxu0
    %v2408 = vadd.f32 0.0, %v2407
    %v2409 = vpop.f32.mrf.mxu0
    %v2410 = vpop.f32.mrf.mxu0
    %v2411 = vadd.f32 0.0, %v2410
    %v2412 = vpop.f32.mrf.mxu0
    %2413 = vdwg.mxu0
    %2415 = vrot.lane.b32.xlu0 %v2109, 64
    %v2416 = vpop.permute.xlu0 %2415
    %2418 = vrot.lane.b32.xlu0 %v2111, 64
    %v2419 = vpop.permute.xlu0 %2418
    %v2421 = vsel %vm569, %v2416, 0
    %v2424 = vsel %vm569, %v2419, 0
    %2426 = vmatprep.subr.bf16.mxu0 0
    %2427 = vmatpush1.bf16.xpose.msra.mxu0 0
    %2428 = vmatprep.subr.bf16.mxu0 0
    %2429 = vmatpush1.bf16.xpose.msra.mxu0 0
    %2430 = vmatprep.subr.bf16.mxu0 0
    %2431 = vmatpush1.bf16.xpose.msra.mxu0 0
    %2432 = vmatprep.subr.bf16.mxu0 0
    %2433 = vmatpush1.bf16.xpose.msra.mxu0 0
    %2434 = vmatprep.subr.bf16.mxu0 0
    %2435 = vmatpush1.bf16.xpose.msra.mxu0 0
    %2436 = vmatprep.subr.bf16.mxu0 0
    %2437 = vmatpush1.bf16.xpose.msra.mxu0 0
    %2438 = vmatprep.subr.bf16.mxu0 0
    %2439 = vmatpush1.bf16.xpose.msra.mxu0 0
    %2440 = vmatprep.subr.bf16.mxu0 0
    %2441 = vmatpush1.bf16.xpose.msra.mxu0 %v2424
    %2442 = vmatprep.subr.bf16.mxu0 0
    %2443 = vmatpush2.bf16.xpose.msra.mxu0 0
    %2444 = vmatprep.subr.bf16.mxu0 0
    %2445 = vmatpush2.bf16.xpose.msra.mxu0 0
    %2446 = vmatprep.subr.bf16.mxu0 0
    %2447 = vmatpush2.bf16.xpose.msra.mxu0 0
    %2448 = vmatprep.subr.bf16.mxu0 0
    %2449 = vmatpush2.bf16.xpose.msra.mxu0 0
    %2450 = vmatprep.subr.bf16.mxu0 0
    %2451 = vmatpush2.bf16.xpose.msra.mxu0 0
    %2452 = vmatprep.subr.bf16.mxu0 0
    %2453 = vmatpush2.bf16.xpose.msra.mxu0 0
    %2454 = vmatprep.subr.bf16.mxu0 0
    %2455 = vmatpush2.bf16.xpose.msra.mxu0 0
    %2456 = vmatprep.subr.bf16.mxu0 0
    %2457 = vmatpush2.bf16.xpose.msra.mxu0 0
    %2458 = vmatprep.mubr.bf16.mxu0 0
    %2459 = vmatmul.mubr.bf16.gmra.mxu0 %v2421
    %v2460 = vpop.f32.mrf.mxu0
    %v2461 = vadd.f32 0.0, %v2460
    %v2462 = vpop.f32.mrf.mxu0
    %v2463 = vpop.f32.mrf.mxu0
    %v2464 = vadd.f32 0.0, %v2463
    %v2465 = vpop.f32.mrf.mxu0
    %2466 = vdwg.mxu0
    %v2467 = vmul.f32 %v2408, 0.125
    %v2468 = vmul.f32 %v2411, 0.125
    %v2469 = vmul.f32 %v2461, 0.125
    %v2470 = vmul.f32 %v2464, 0.125
    %v2471 = vadd.f32 %v2467, %v671
    %v2472 = vadd.f32 %v2468, %v671
    %v2473 = vadd.f32 %v2469, %v675
    %v2474 = vadd.f32 %v2470, %v675
    %v2475 = vsel %vm682, %v2471, -inf
    %2476 = vmax.xlane.f32.xlu0 %v2475
    %v2477 = vpop.xlane.xlu0 %2476
    %v2478 = vsel %vm682, %v2472, -inf
    %2479 = vmax.xlane.f32.xlu0 %v2478
    %v2480 = vpop.xlane.xlu0 %2479
    %v2481 = vsel %vm682, %v2473, -inf
    %2482 = vmax.xlane.f32.xlu0 %v2481
    %v2483 = vpop.xlane.xlu0 %2482
    %v2484 = vsel %vm682, %v2474, -inf
    %2485 = vmax.xlane.f32.xlu0 %v2484
    %v2486 = vpop.xlane.xlu0 %2485
    %v2487 = vsub.f32 %v2471, %v2477
    %v2488 = vsub.f32 %v2472, %v2480
    %v2489 = vsub.f32 %v2473, %v2483
    %v2490 = vsub.f32 %v2474, %v2486
    %v2491 = vmul.f32 %v2487, 1.442695
    %v2492 = vpow.pop %v2491
    %v2493 = vmul.f32 %v2488, 1.442695
    %v2494 = vpow.pop %v2493
    %v2495 = vmul.f32 %v2489, 1.442695
    %v2496 = vpow.pop %v2495
    %v2497 = vmul.f32 %v2490, 1.442695
    %v2498 = vpow.pop %v2497
    %v2499 = vsel %vm682, %v2492, 0.0
    %2500 = vadd.xlane.f32.xlu0 %v2499
    %v2501 = vpop.xlane.xlu0 %2500
    %v2502 = vsel %vm682, %v2494, 0.0
    %2503 = vadd.xlane.f32.xlu0 %v2502
    %v2504 = vpop.xlane.xlu0 %2503
    %v2505 = vsel %vm682, %v2496, 0.0
    %2506 = vadd.xlane.f32.xlu0 %v2505
    %v2507 = vpop.xlane.xlu0 %2506
    %v2508 = vsel %vm682, %v2498, 0.0
    %2509 = vadd.xlane.f32.xlu0 %v2508
    %v2510 = vpop.xlane.xlu0 %2509
    %v2511 = vrcp.pop %v2501
    %v2512 = vrcp.pop %v2504
    %v2513 = vrcp.pop %v2507
    %v2514 = vrcp.pop %v2510
    %v2515 = vmul.f32 %v2492, %v2511
    %v2516 = vmul.f32 %v2494, %v2512
    %v2517 = vmul.f32 %v2496, %v2513
    %v2518 = vmul.f32 %v2498, %v2514
    %v2519 = vpack.c.bf16 %v2516, %v2515
    %v2520 = vpack.c.bf16 %v2518, %v2517
    %2522 = vrot.lane.b32.xlu0 %v2112, 64
    %v2523 = vpop.permute.xlu0 %2522
    %v2526 = vsel %vm682, %v2519, 0
    %2528 = vmatprep.subr.bf16.mxu0 0
    %2529 = vmatpush1.bf16.msra.mxu0 0
    %2530 = vmatprep.subr.bf16.mxu0 0
    %2531 = vmatpush1.bf16.msra.mxu0 0
    %2532 = vmatprep.subr.bf16.mxu0 0
    %2533 = vmatpush1.bf16.msra.mxu0 0
    %2534 = vmatprep.subr.bf16.mxu0 0
    %2535 = vmatpush1.bf16.msra.mxu0 0
    %2536 = vmatprep.subr.bf16.mxu0 0
    %2537 = vmatpush1.bf16.msra.mxu0 0
    %2538 = vmatprep.subr.bf16.mxu0 0
    %2539 = vmatpush1.bf16.msra.mxu0 0
    %2540 = vmatprep.subr.bf16.mxu0 0
    %2541 = vmatpush1.bf16.msra.mxu0 0
    %2542 = vmatprep.subr.bf16.mxu0 0
    %2543 = vmatpush1.bf16.msra.mxu0 %v2523
    %2544 = vmatprep.subr.bf16.mxu0 0
    %2545 = vmatpush2.bf16.msra.mxu0 0
    %2546 = vmatprep.subr.bf16.mxu0 0
    %2547 = vmatpush2.bf16.msra.mxu0 0
    %2548 = vmatprep.subr.bf16.mxu0 0
    %2549 = vmatpush2.bf16.msra.mxu0 0
    %2550 = vmatprep.subr.bf16.mxu0 0
    %2551 = vmatpush2.bf16.msra.mxu0 0
    %2552 = vmatprep.subr.bf16.mxu0 0
    %2553 = vmatpush2.bf16.msra.mxu0 0
    %2554 = vmatprep.subr.bf16.mxu0 0
    %2555 = vmatpush2.bf16.msra.mxu0 0
    %2556 = vmatprep.subr.bf16.mxu0 0
    %2557 = vmatpush2.bf16.msra.mxu0 0
    %2558 = vmatprep.subr.bf16.mxu0 0
    %2559 = vmatpush2.bf16.msra.mxu0 0
    %2560 = vmatprep.mubr.bf16.mxu0 0
    %2561 = vmatmul.mubr.bf16.gmra.mxu0 %v2526
    %v2562 = vpop.f32.mrf.mxu0
    %v2563 = vadd.f32 0.0, %v2562
    %v2564 = vpop.f32.mrf.mxu0
    %v2565 = vpop.f32.mrf.mxu0
    %v2566 = vadd.f32 0.0, %v2565
    %v2567 = vpop.f32.mrf.mxu0
    %2568 = vdwg.mxu0
    %2570 = vrot.lane.b32.xlu0 %v2113, 64
    %v2571 = vpop.permute.xlu0 %2570
    %v2574 = vsel %vm682, %v2520, 0
    %2576 = vmatprep.subr.bf16.mxu0 0
    %2577 = vmatpush1.bf16.msra.mxu0 0
    %2578 = vmatprep.subr.bf16.mxu0 0
    %2579 = vmatpush1.bf16.msra.mxu0 0
    %2580 = vmatprep.subr.bf16.mxu0 0
    %2581 = vmatpush1.bf16.msra.mxu0 0
    %2582 = vmatprep.subr.bf16.mxu0 0
    %2583 = vmatpush1.bf16.msra.mxu0 0
    %2584 = vmatprep.subr.bf16.mxu0 0
    %2585 = vmatpush1.bf16.msra.mxu0 0
    %2586 = vmatprep.subr.bf16.mxu0 0
    %2587 = vmatpush1.bf16.msra.mxu0 0
    %2588 = vmatprep.subr.bf16.mxu0 0
    %2589 = vmatpush1.bf16.msra.mxu0 0
    %2590 = vmatprep.subr.bf16.mxu0 0
    %2591 = vmatpush1.bf16.msra.mxu0 %v2571
    %2592 = vmatprep.subr.bf16.mxu0 0
    %2593 = vmatpush2.bf16.msra.mxu0 0
    %2594 = vmatprep.subr.bf16.mxu0 0
    %2595 = vmatpush2.bf16.msra.mxu0 0
    %2596 = vmatprep.subr.bf16.mxu0 0
    %2597 = vmatpush2.bf16.msra.mxu0 0
    %2598 = vmatprep.subr.bf16.mxu0 0
    %2599 = vmatpush2.bf16.msra.mxu0 0
    %2600 = vmatprep.subr.bf16.mxu0 0
    %2601 = vmatpush2.bf16.msra.mxu0 0
    %2602 = vmatprep.subr.bf16.mxu0 0
    %2603 = vmatpush2.bf16.msra.mxu0 0
    %2604 = vmatprep.subr.bf16.mxu0 0
    %2605 = vmatpush2.bf16.msra.mxu0 0
    %2606 = vmatprep.subr.bf16.mxu0 0
    %2607 = vmatpush2.bf16.msra.mxu0 0
    %2608 = vmatprep.mubr.bf16.mxu0 0
    %2609 = vmatmul.mubr.bf16.gmra.mxu0 %v2574
    %v2610 = vpop.f32.mrf.mxu0
    %v2611 = vadd.f32 0.0, %v2610
    %v2612 = vpop.f32.mrf.mxu0
    %v2613 = vpop.f32.mrf.mxu0
    %v2614 = vadd.f32 0.0, %v2613
    %v2615 = vpop.f32.mrf.mxu0
    %2616 = vdwg.mxu0
    %v2617 = vpack.c.bf16 %v2566, %v2563
    %v2618 = vpack.c.bf16 %v2614, %v2611
    %v2619 = vld [vmem:[%s2352 + $0x20] sm:$0xf]
    %v2620 = vld [vmem:[%s2352 + $0x24] sm:$0xf]
    %v2621 = vld [vmem:[%s2352 + $0x28] sm:$0xf]
    %v2622 = vld [vmem:[%s2352 + $0x2c] sm:$0xf]
    %v2623 = vld [vmem:[%s2352 + $0x30] sm:$0xf]
    %v2624 = vld [vmem:[%s2352 + $0x34] sm:$0xf]
    %v2625 = vld [vmem:[%s2352 + $0x38] sm:$0xf]
    %v2626 = vld [vmem:[%s2352 + $0x3c] sm:$0xf]
    %v2635 = vunpack.c.l.b16 %v2619
    %v2636 = vunpack.c.l.b16 %v2620
    %v2637 = vunpack.c.l.b16 %v2621
    %v2638 = vunpack.c.l.b16 %v2622
    %v2639 = vunpack.c.l.b16 %v2623
    %v2640 = vunpack.c.l.b16 %v2624
    %v2641 = vunpack.c.l.b16 %v2625
    %v2642 = vunpack.c.l.b16 %v2626
    %v2643 = vpack.c.b16 %v2636, %v2635
    %v2644 = vpack.c.b16 %v2638, %v2637
    %v2645 = vpack.c.b16 %v2640, %v2639
    %v2646 = vpack.c.b16 %v2642, %v2641
    %v2652 = vsel %vm569, %v2617, 0
    %v2655 = vsel %vm569, %v2618, 0
    %2657 = vmatprep.subr.bf16.mxu0 0
    %2658 = vmatpush1.bf16.msra.mxu0 0
    %2659 = vmatprep.subr.bf16.mxu0 0
    %2660 = vmatpush1.bf16.msra.mxu0 0
    %2661 = vmatprep.subr.bf16.mxu0 0
    %2662 = vmatpush1.bf16.msra.mxu0 0
    %2663 = vmatprep.subr.bf16.mxu0 0
    %2664 = vmatpush1.bf16.msra.mxu0 0
    %2665 = vmatprep.subr.bf16.mxu0 0
    %2666 = vmatpush1.bf16.msra.mxu0 %v2646
    %2667 = vmatprep.subr.bf16.mxu0 0
    %2668 = vmatpush1.bf16.msra.mxu0 %v2645
    %2669 = vmatprep.subr.bf16.mxu0 0
    %2670 = vmatpush1.bf16.msra.mxu0 %v2644
    %2671 = vmatprep.subr.bf16.mxu0 0
    %2672 = vmatpush1.bf16.msra.mxu0 %v2643
    %2673 = vmatprep.subr.bf16.mxu0 0
    %2674 = vmatpush2.bf16.msra.mxu0 0
    %2675 = vmatprep.subr.bf16.mxu0 0
    %2676 = vmatpush2.bf16.msra.mxu0 0
    %2677 = vmatprep.subr.bf16.mxu0 0
    %2678 = vmatpush2.bf16.msra.mxu0 0
    %2679 = vmatprep.subr.bf16.mxu0 0
    %2680 = vmatpush2.bf16.msra.mxu0 0
    %2681 = vmatprep.subr.bf16.mxu0 0
    %2682 = vmatpush2.bf16.msra.mxu0 0
    %2683 = vmatprep.subr.bf16.mxu0 0
    %2684 = vmatpush2.bf16.msra.mxu0 0
    %2685 = vmatprep.subr.bf16.mxu0 0
    %2686 = vmatpush2.bf16.msra.mxu0 0
    %2687 = vmatprep.subr.bf16.mxu0 0
    %2688 = vmatpush2.bf16.msra.mxu0 0
    %2689 = vmatprep.mubr.bf16.mxu0 0
    %2690 = vmatmul.mubr.bf16.gmra.mxu0 %v2652
    %v2691 = vpop.f32.mrf.mxu0
    %v2692 = vadd.f32 0.0, %v2691
    %v2693 = vpop.f32.mrf.mxu0
    %v2694 = vpop.f32.mrf.mxu0
    %v2695 = vadd.f32 0.0, %v2694
    %v2696 = vpop.f32.mrf.mxu0
    %2697 = vmatprep.mubr.bf16.mxu0 0
    %2698 = vmatmul.mubr.bf16.gmra.mxu0 %v2655
    %v2699 = vpop.f32.mrf.mxu0
    %v2700 = vadd.f32 0.0, %v2699
    %v2701 = vpop.f32.mrf.mxu0
    %v2702 = vpop.f32.mrf.mxu0
    %v2703 = vadd.f32 0.0, %v2702
    %v2704 = vpop.f32.mrf.mxu0
    %2705 = vdwg.mxu0
    %v2714 = vunpack.c.l.b16 %v2353
    %v2715 = vunpack.c.l.b16 %v2354
    %v2716 = vunpack.c.l.b16 %v2355
    %v2717 = vunpack.c.l.b16 %v2356
    %v2718 = vunpack.c.l.b16 %v2357
    %v2719 = vunpack.c.l.b16 %v2358
    %v2720 = vunpack.c.l.b16 %v2359
    %v2721 = vunpack.c.l.b16 %v2360
    %v2722 = vpack.c.b16 %v2715, %v2714
    %v2723 = vpack.c.b16 %v2717, %v2716
    %v2724 = vpack.c.b16 %v2719, %v2718
    %v2725 = vpack.c.b16 %v2721, %v2720
    %v2731 = vsel %vm569, %v2350, 0
    %v2734 = vsel %vm569, %v2351, 0
    %2736 = vmatprep.subr.bf16.mxu0 0
    %2737 = vmatpush1.bf16.msra.mxu0 0
    %2738 = vmatprep.subr.bf16.mxu0 0
    %2739 = vmatpush1.bf16.msra.mxu0 0
    %2740 = vmatprep.subr.bf16.mxu0 0
    %2741 = vmatpush1.bf16.msra.mxu0 0
    %2742 = vmatprep.subr.bf16.mxu0 0
    %2743 = vmatpush1.bf16.msra.mxu0 0
    %2744 = vmatprep.subr.bf16.mxu0 0
    %2745 = vmatpush1.bf16.msra.mxu0 %v2725
    %2746 = vmatprep.subr.bf16.mxu0 0
    %2747 = vmatpush1.bf16.msra.mxu0 %v2724
    %2748 = vmatprep.subr.bf16.mxu0 0
    %2749 = vmatpush1.bf16.msra.mxu0 %v2723
    %2750 = vmatprep.subr.bf16.mxu0 0
    %2751 = vmatpush1.bf16.msra.mxu0 %v2722
    %2752 = vmatprep.subr.bf16.mxu0 0
    %2753 = vmatpush2.bf16.msra.mxu0 0
    %2754 = vmatprep.subr.bf16.mxu0 0
    %2755 = vmatpush2.bf16.msra.mxu0 0
    %2756 = vmatprep.subr.bf16.mxu0 0
    %2757 = vmatpush2.bf16.msra.mxu0 0
    %2758 = vmatprep.subr.bf16.mxu0 0
    %2759 = vmatpush2.bf16.msra.mxu0 0
    %2760 = vmatprep.subr.bf16.mxu0 0
    %2761 = vmatpush2.bf16.msra.mxu0 0
    %2762 = vmatprep.subr.bf16.mxu0 0
    %2763 = vmatpush2.bf16.msra.mxu0 0
    %2764 = vmatprep.subr.bf16.mxu0 0
    %2765 = vmatpush2.bf16.msra.mxu0 0
    %2766 = vmatprep.subr.bf16.mxu0 0
    %2767 = vmatpush2.bf16.msra.mxu0 0
    %2768 = vmatprep.mubr.bf16.mxu0 0
    %2769 = vmatmul.mubr.bf16.gmra.mxu0 %v2731
    %v2770 = vpop.f32.mrf.mxu0
    %v2771 = vadd.f32 %v2692, %v2770
    %v2772 = vpop.f32.mrf.mxu0
    %v2773 = vpop.f32.mrf.mxu0
    %v2774 = vadd.f32 %v2695, %v2773
    %v2775 = vpop.f32.mrf.mxu0
    %2776 = vmatprep.mubr.bf16.mxu0 0
    %2777 = vmatmul.mubr.bf16.gmra.mxu0 %v2734
    %v2778 = vpop.f32.mrf.mxu0
    %v2779 = vadd.f32 %v2700, %v2778
    %v2780 = vpop.f32.mrf.mxu0
    %v2781 = vpop.f32.mrf.mxu0
    %v2782 = vadd.f32 %v2703, %v2781
    %v2783 = vpop.f32.mrf.mxu0
    %2784 = vdwg.mxu0
    %s2785 = scalar_lea.vmem %s10, 1
    %v2786 = vld [vmem:[%s2785] sm:$0x1]
    %v2788 = vlaneseq
    %v2789 = vshrl.u32 %v2788, 7
    %v2790 = vsub.s32 0, %v2789
    %v2791 = vrot.slane %v2786, %v2790
    %v2793 = vadd.f32 %v2771, %v2791
    %v2794 = vadd.f32 %v2774, %v2791
    %v2795 = vadd.f32 %v2779, %v2791
    %v2796 = vadd.f32 %v2782, %v2791
    %v2797 = vadd.f32 %v1821, %v2793
    %v2798 = vadd.f32 %v1822, %v2794
    %v2799 = vadd.f32 %v1823, %v2795
    %v2800 = vadd.f32 %v1824, %v2796
    %s2801 = scalar_lea.vmem %s11, 1
    %v2802 = vld [vmem:[%s2801] sm:$0x1]
    %s2803 = scalar_lea.vmem %s12, 1
    %v2804 = vld [vmem:[%s2803] sm:$0x1]
    %2805 = vadd.xlane.f32.xlu0 %v2797
    %v2806 = vpop.xlane.xlu0 %2805
    %2807 = vadd.xlane.f32.xlu0 %v2798
    %v2808 = vpop.xlane.xlu0 %2807
    %2809 = vadd.xlane.f32.xlu0 %v2799
    %v2810 = vpop.xlane.xlu0 %2809
    %2811 = vadd.xlane.f32.xlu0 %v2800
    %v2812 = vpop.xlane.xlu0 %2811
    %v2813 = vmul.f32 %v2806, %v201
    %v2814 = vmul.f32 %v2808, %v201
    %v2815 = vmul.f32 %v2810, %v201
    %v2816 = vmul.f32 %v2812, %v201
    %v2817 = vsub.f32 %v2797, %v2813
    %v2818 = vsub.f32 %v2798, %v2814
    %v2819 = vsub.f32 %v2799, %v2815
    %v2820 = vsub.f32 %v2800, %v2816
    %v2821 = vmul.f32 %v2817, %v2817
    %v2822 = vmul.f32 %v2818, %v2818
    %v2823 = vmul.f32 %v2819, %v2819
    %v2824 = vmul.f32 %v2820, %v2820
    %2825 = vadd.xlane.f32.xlu0 %v2821
    %v2826 = vpop.xlane.xlu0 %2825
    %2827 = vadd.xlane.f32.xlu0 %v2822
    %v2828 = vpop.xlane.xlu0 %2827
    %2829 = vadd.xlane.f32.xlu0 %v2823
    %v2830 = vpop.xlane.xlu0 %2829
    %2831 = vadd.xlane.f32.xlu0 %v2824
    %v2832 = vpop.xlane.xlu0 %2831
    %v2833 = vmul.f32 %v2826, %v201
    %v2834 = vmul.f32 %v2828, %v201
    %v2835 = vmul.f32 %v2830, %v201
    %v2836 = vmul.f32 %v2832, %v201
    %v2837 = vadd.f32 %v2833, 1e-12
    %v2838 = vadd.f32 %v2834, 1e-12
    %v2839 = vadd.f32 %v2835, 1e-12
    %v2840 = vadd.f32 %v2836, 1e-12
    %v2841 = vrsqrt.pop %v2837
    %v2842 = vrsqrt.pop %v2838
    %v2843 = vrsqrt.pop %v2839
    %v2844 = vrsqrt.pop %v2840
    %v2845 = vmul.f32 %v2817, %v2841
    %v2846 = vmul.f32 %v2818, %v2842
    %v2847 = vmul.f32 %v2819, %v2843
    %v2848 = vmul.f32 %v2820, %v2844
    %v2850 = vlaneseq
    %v2851 = vshrl.u32 %v2850, 7
    %v2852 = vsub.s32 0, %v2851
    %v2853 = vrot.slane %v2802, %v2852
    %v2855 = vmul.f32 %v2845, %v2853
    %v2856 = vmul.f32 %v2846, %v2853
    %v2857 = vmul.f32 %v2847, %v2853
    %v2858 = vmul.f32 %v2848, %v2853
    %v2860 = vlaneseq
    %v2861 = vshrl.u32 %v2860, 7
    %v2862 = vsub.s32 0, %v2861
    %v2863 = vrot.slane %v2804, %v2862
    %v2865 = vadd.f32 %v2855, %v2863
    %v2866 = vadd.f32 %v2856, %v2863
    %v2867 = vadd.f32 %v2857, %v2863
    %v2868 = vadd.f32 %v2858, %v2863
    %v2869 = vpack.c.bf16 %v2866, %v2865
    %v2870 = vpack.c.bf16 %v2868, %v2867
    %s2871 = scalar_lea.vmem %s13, 128
    %v2872 = vld [vmem:[%s2871] sm:$0xff]
    %v2873 = vld [vmem:[%s2871 + $0x8] sm:$0xff]
    %v2874 = vld [vmem:[%s2871 + $0x10] sm:$0xff]
    %v2875 = vld [vmem:[%s2871 + $0x18] sm:$0xff]
    %v2876 = vld [vmem:[%s2871 + $0x20] sm:$0xff]
    %v2877 = vld [vmem:[%s2871 + $0x28] sm:$0xff]
    %v2878 = vld [vmem:[%s2871 + $0x30] sm:$0xff]
    %v2879 = vld [vmem:[%s2871 + $0x38] sm:$0xff]
    %v2880 = vld [vmem:[%s2871 + $0x40] sm:$0xff]
    %v2881 = vld [vmem:[%s2871 + $0x48] sm:$0xff]
    %v2882 = vld [vmem:[%s2871 + $0x50] sm:$0xff]
    %v2883 = vld [vmem:[%s2871 + $0x58] sm:$0xff]
    %v2884 = vld [vmem:[%s2871 + $0x60] sm:$0xff]
    %v2885 = vld [vmem:[%s2871 + $0x68] sm:$0xff]
    %v2886 = vld [vmem:[%s2871 + $0x70] sm:$0xff]
    %v2887 = vld [vmem:[%s2871 + $0x78] sm:$0xff]
    %s2888 = scalar_lea.vmem %s14, 2
    %v2889 = vld [vmem:[%s2888] sm:$0x3]
    %v2891 = vlaneseq
    %v2892 = vshrl.u32 %v2891, 7
    %v2893 = vsub.s32 0, %v2892
    %v2894 = vrot.slane %v2889, %v2893
    %v2895 = vlaneseq
    %v2896 = vshrl.u32 %v2895, 7
    %v2897 = vsub.s32 1, %v2896
    %v2898 = vrot.slane %v2889, %v2897
    %v2917 = vunpack.c.l.b16 %v2872
    %v2918 = vunpack.c.h.b16 %v2872
    %v2919 = vunpack.c.l.b16 %v2873
    %v2920 = vunpack.c.h.b16 %v2873
    %v2921 = vunpack.c.l.b16 %v2874
    %v2922 = vunpack.c.h.b16 %v2874
    %v2923 = vunpack.c.l.b16 %v2875
    %v2924 = vunpack.c.h.b16 %v2875
    %v2925 = vunpack.c.l.b16 %v2876
    %v2926 = vunpack.c.h.b16 %v2876
    %v2927 = vunpack.c.l.b16 %v2877
    %v2928 = vunpack.c.h.b16 %v2877
    %v2929 = vunpack.c.l.b16 %v2878
    %v2930 = vunpack.c.h.b16 %v2878
    %v2931 = vunpack.c.l.b16 %v2879
    %v2932 = vunpack.c.h.b16 %v2879
    %v2933 = vunpack.c.l.b16 %v2880
    %v2934 = vunpack.c.h.b16 %v2880
    %v2935 = vunpack.c.l.b16 %v2881
    %v2936 = vunpack.c.h.b16 %v2881
    %v2937 = vunpack.c.l.b16 %v2882
    %v2938 = vunpack.c.h.b16 %v2882
    %v2939 = vunpack.c.l.b16 %v2883
    %v2940 = vunpack.c.h.b16 %v2883
    %v2941 = vunpack.c.l.b16 %v2884
    %v2942 = vunpack.c.h.b16 %v2884
    %v2943 = vunpack.c.l.b16 %v2885
    %v2944 = vunpack.c.h.b16 %v2885
    %v2945 = vunpack.c.l.b16 %v2886
    %v2946 = vunpack.c.h.b16 %v2886
    %v2947 = vunpack.c.l.b16 %v2887
    %v2948 = vunpack.c.h.b16 %v2887
    %v2949 = vpack.c.b16 %v2919, %v2917
    %v2950 = vpack.c.b16 %v2920, %v2918
    %v2951 = vpack.c.b16 %v2923, %v2921
    %v2952 = vpack.c.b16 %v2924, %v2922
    %v2953 = vpack.c.b16 %v2927, %v2925
    %v2954 = vpack.c.b16 %v2928, %v2926
    %v2955 = vpack.c.b16 %v2931, %v2929
    %v2956 = vpack.c.b16 %v2932, %v2930
    %v2957 = vpack.c.b16 %v2935, %v2933
    %v2958 = vpack.c.b16 %v2936, %v2934
    %v2959 = vpack.c.b16 %v2939, %v2937
    %v2960 = vpack.c.b16 %v2940, %v2938
    %v2961 = vpack.c.b16 %v2943, %v2941
    %v2962 = vpack.c.b16 %v2944, %v2942
    %v2963 = vpack.c.b16 %v2947, %v2945
    %v2964 = vpack.c.b16 %v2948, %v2946
    %2981 = vmatprep.subr.bf16.mxu0 %v2964
    %2982 = vmatpush1.bf16.msra.mxu0 %v2963
    %2983 = vmatprep.subr.bf16.mxu0 %v2962
    %2984 = vmatpush1.bf16.msra.mxu0 %v2961
    %2985 = vmatprep.subr.bf16.mxu0 %v2960
    %2986 = vmatpush1.bf16.msra.mxu0 %v2959
    %2987 = vmatprep.subr.bf16.mxu0 %v2958
    %2988 = vmatpush1.bf16.msra.mxu0 %v2957
    %2989 = vmatprep.subr.bf16.mxu0 %v2956
    %2990 = vmatpush1.bf16.msra.mxu0 %v2955
    %2991 = vmatprep.subr.bf16.mxu0 %v2954
    %2992 = vmatpush1.bf16.msra.mxu0 %v2953
    %2993 = vmatprep.subr.bf16.mxu0 %v2952
    %2994 = vmatpush1.bf16.msra.mxu0 %v2951
    %2995 = vmatprep.subr.bf16.mxu0 %v2950
    %2996 = vmatpush1.bf16.msra.mxu0 %v2949
    %2997 = vmatprep.subr.bf16.mxu0 0
    %2998 = vmatpush2.bf16.msra.mxu0 0
    %2999 = vmatprep.subr.bf16.mxu0 0
    %3000 = vmatpush2.bf16.msra.mxu0 0
    %3001 = vmatprep.subr.bf16.mxu0 0
    %3002 = vmatpush2.bf16.msra.mxu0 0
    %3003 = vmatprep.subr.bf16.mxu0 0
    %3004 = vmatpush2.bf16.msra.mxu0 0
    %3005 = vmatprep.subr.bf16.mxu0 0
    %3006 = vmatpush2.bf16.msra.mxu0 0
    %3007 = vmatprep.subr.bf16.mxu0 0
    %3008 = vmatpush2.bf16.msra.mxu0 0
    %3009 = vmatprep.subr.bf16.mxu0 0
    %3010 = vmatpush2.bf16.msra.mxu0 0
    %3011 = vmatprep.subr.bf16.mxu0 0
    %3012 = vmatpush2.bf16.msra.mxu0 0
    %3013 = vmatprep.mubr.bf16.mxu0 0
    %3014 = vmatmul.mubr.bf16.gmra.mxu0 %v2869
    %v3015 = vpop.f32.mrf.mxu0
    %v3016 = vadd.f32 %v2894, %v3015
    %v3017 = vpop.f32.mrf.mxu0
    %v3018 = vadd.f32 %v2898, %v3017
    %v3019 = vpop.f32.mrf.mxu0
    %v3020 = vadd.f32 %v2894, %v3019
    %v3021 = vpop.f32.mrf.mxu0
    %v3022 = vadd.f32 %v2898, %v3021
    %3023 = vmatprep.mubr.bf16.mxu0 0
    %3024 = vmatmul.mubr.bf16.gmra.mxu0 %v2870
    %v3025 = vpop.f32.mrf.mxu0
    %v3026 = vadd.f32 %v2894, %v3025
    %v3027 = vpop.f32.mrf.mxu0
    %v3028 = vadd.f32 %v2898, %v3027
    %v3029 = vpop.f32.mrf.mxu0
    %v3030 = vadd.f32 %v2894, %v3029
    %v3031 = vpop.f32.mrf.mxu0
    %v3032 = vadd.f32 %v2898, %v3031
    %3033 = vdwg.mxu0
    %v3034 = vmul.f32 %v3016, %v3016
    %v3035 = vmul.f32 %v3018, %v3018
    %v3036 = vmul.f32 %v3020, %v3020
    %v3037 = vmul.f32 %v3022, %v3022
    %v3038 = vmul.f32 %v3026, %v3026
    %v3039 = vmul.f32 %v3028, %v3028
    %v3040 = vmul.f32 %v3030, %v3030
    %v3041 = vmul.f32 %v3032, %v3032
    %v3042 = vmul.f32 %v3016, %v3034
    %v3043 = vmul.f32 %v3018, %v3035
    %v3044 = vmul.f32 %v3020, %v3036
    %v3045 = vmul.f32 %v3022, %v3037
    %v3046 = vmul.f32 %v3026, %v3038
    %v3047 = vmul.f32 %v3028, %v3039
    %v3048 = vmul.f32 %v3030, %v3040
    %v3049 = vmul.f32 %v3032, %v3041
    %v3050 = vmul.f32 %v3042, 0.044715
    %v3051 = vmul.f32 %v3043, 0.044715
    %v3052 = vmul.f32 %v3044, 0.044715
    %v3053 = vmul.f32 %v3045, 0.044715
    %v3054 = vmul.f32 %v3046, 0.044715
    %v3055 = vmul.f32 %v3047, 0.044715
    %v3056 = vmul.f32 %v3048, 0.044715
    %v3057 = vmul.f32 %v3049, 0.044715
    %v3058 = vadd.f32 %v3016, %v3050
    %v3059 = vadd.f32 %v3018, %v3051
    %v3060 = vadd.f32 %v3020, %v3052
    %v3061 = vadd.f32 %v3022, %v3053
    %v3062 = vadd.f32 %v3026, %v3054
    %v3063 = vadd.f32 %v3028, %v3055
    %v3064 = vadd.f32 %v3030, %v3056
    %v3065 = vadd.f32 %v3032, %v3057
    %v3066 = vmul.f32 %v3058, 0.7978846
    %v3067 = vmul.f32 %v3059, 0.7978846
    %v3068 = vmul.f32 %v3060, 0.7978846
    %v3069 = vmul.f32 %v3061, 0.7978846
    %v3070 = vmul.f32 %v3062, 0.7978846
    %v3071 = vmul.f32 %v3063, 0.7978846
    %v3072 = vmul.f32 %v3064, 0.7978846
    %v3073 = vmul.f32 %v3065, 0.7978846
    %v3074 = vtanh.pop %v3066
    %v3075 = vtanh.pop %v3067
    %v3076 = vtanh.pop %v3068
    %v3077 = vtanh.pop %v3069
    %v3078 = vtanh.pop %v3070
    %v3079 = vtanh.pop %v3071
    %v3080 = vtanh.pop %v3072
    %v3081 = vtanh.pop %v3073
    %v3082 = vadd.f32 %v3074, 1.0
    %v3083 = vadd.f32 %v3075, 1.0
    %v3084 = vadd.f32 %v3076, 1.0
    %v3085 = vadd.f32 %v3077, 1.0
    %v3086 = vadd.f32 %v3078, 1.0
    %v3087 = vadd.f32 %v3079, 1.0
    %v3088 = vadd.f32 %v3080, 1.0
    %v3089 = vadd.f32 %v3081, 1.0
    %v3090 = vmul.f32 %v3082, 0.5
    %v3091 = vmul.f32 %v3083, 0.5
    %v3092 = vmul.f32 %v3084, 0.5
    %v3093 = vmul.f32 %v3085, 0.5
    %v3094 = vmul.f32 %v3086, 0.5
    %v3095 = vmul.f32 %v3087, 0.5
    %v3096 = vmul.f32 %v3088, 0.5
    %v3097 = vmul.f32 %v3089, 0.5
    %v3098 = vmul.f32 %v3016, %v3090
    %v3099 = vmul.f32 %v3018, %v3091
    %v3100 = vmul.f32 %v3020, %v3092
    %v3101 = vmul.f32 %v3022, %v3093
    %v3102 = vmul.f32 %v3026, %v3094
    %v3103 = vmul.f32 %v3028, %v3095
    %v3104 = vmul.f32 %v3030, %v3096
    %v3105 = vmul.f32 %v3032, %v3097
    %v3106 = vpack.c.bf16 %v3100, %v3098
    %v3107 = vpack.c.bf16 %v3101, %v3099
    %v3108 = vpack.c.bf16 %v3104, %v3102
    %v3109 = vpack.c.bf16 %v3105, %v3103
    %s3110 = scalar_lea.vmem %s15, 128
    %v3111 = vld [vmem:[%s3110] sm:$0xf]
    %v3112 = vld [vmem:[%s3110 + $0x4] sm:$0xf]
    %v3113 = vld [vmem:[%s3110 + $0x8] sm:$0xf]
    %v3114 = vld [vmem:[%s3110 + $0xc] sm:$0xf]
    %v3115 = vld [vmem:[%s3110 + $0x10] sm:$0xf]
    %v3116 = vld [vmem:[%s3110 + $0x14] sm:$0xf]
    %v3117 = vld [vmem:[%s3110 + $0x18] sm:$0xf]
    %v3118 = vld [vmem:[%s3110 + $0x1c] sm:$0xf]
    %v3119 = vld [vmem:[%s3110 + $0x20] sm:$0xf]
    %v3120 = vld [vmem:[%s3110 + $0x24] sm:$0xf]
    %v3121 = vld [vmem:[%s3110 + $0x28] sm:$0xf]
    %v3122 = vld [vmem:[%s3110 + $0x2c] sm:$0xf]
    %v3123 = vld [vmem:[%s3110 + $0x30] sm:$0xf]
    %v3124 = vld [vmem:[%s3110 + $0x34] sm:$0xf]
    %v3125 = vld [vmem:[%s3110 + $0x38] sm:$0xf]
    %v3126 = vld [vmem:[%s3110 + $0x3c] sm:$0xf]
    %v3127 = vld [vmem:[%s3110 + $0x40] sm:$0xf]
    %v3128 = vld [vmem:[%s3110 + $0x44] sm:$0xf]
    %v3129 = vld [vmem:[%s3110 + $0x48] sm:$0xf]
    %v3130 = vld [vmem:[%s3110 + $0x4c] sm:$0xf]
    %v3131 = vld [vmem:[%s3110 + $0x50] sm:$0xf]
    %v3132 = vld [vmem:[%s3110 + $0x54] sm:$0xf]
    %v3133 = vld [vmem:[%s3110 + $0x58] sm:$0xf]
    %v3134 = vld [vmem:[%s3110 + $0x5c] sm:$0xf]
    %v3135 = vld [vmem:[%s3110 + $0x60] sm:$0xf]
    %v3136 = vld [vmem:[%s3110 + $0x64] sm:$0xf]
    %v3137 = vld [vmem:[%s3110 + $0x68] sm:$0xf]
    %v3138 = vld [vmem:[%s3110 + $0x6c] sm:$0xf]
    %v3139 = vld [vmem:[%s3110 + $0x70] sm:$0xf]
    %v3140 = vld [vmem:[%s3110 + $0x74] sm:$0xf]
    %v3141 = vld [vmem:[%s3110 + $0x78] sm:$0xf]
    %v3142 = vld [vmem:[%s3110 + $0x7c] sm:$0xf]
    %s3143 = scalar_lea.vmem %s16, 1
    %v3144 = vld [vmem:[%s3143] sm:$0x1]
    %v3146 = vlaneseq
    %v3147 = vshrl.u32 %v3146, 7
    %v3148 = vsub.s32 0, %v3147
    %v3149 = vrot.slane %v3144, %v3148
    %v3183 = vunpack.c.l.b16 %v3111
    %v3184 = vunpack.c.l.b16 %v3112
    %v3185 = vunpack.c.l.b16 %v3113
    %v3186 = vunpack.c.l.b16 %v3114
    %v3187 = vunpack.c.l.b16 %v3115
    %v3188 = vunpack.c.l.b16 %v3116
    %v3189 = vunpack.c.l.b16 %v3117
    %v3190 = vunpack.c.l.b16 %v3118
    %v3191 = vunpack.c.l.b16 %v3119
    %v3192 = vunpack.c.l.b16 %v3120
    %v3193 = vunpack.c.l.b16 %v3121
    %v3194 = vunpack.c.l.b16 %v3122
    %v3195 = vunpack.c.l.b16 %v3123
    %v3196 = vunpack.c.l.b16 %v3124
    %v3197 = vunpack.c.l.b16 %v3125
    %v3198 = vunpack.c.l.b16 %v3126
    %v3199 = vunpack.c.l.b16 %v3127
    %v3200 = vunpack.c.l.b16 %v3128
    %v3201 = vunpack.c.l.b16 %v3129
    %v3202 = vunpack.c.l.b16 %v3130
    %v3203 = vunpack.c.l.b16 %v3131
    %v3204 = vunpack.c.l.b16 %v3132
    %v3205 = vunpack.c.l.b16 %v3133
    %v3206 = vunpack.c.l.b16 %v3134
    %v3207 = vunpack.c.l.b16 %v3135
    %v3208 = vunpack.c.l.b16 %v3136
    %v3209 = vunpack.c.l.b16 %v3137
    %v3210 = vunpack.c.l.b16 %v3138
    %v3211 = vunpack.c.l.b16 %v3139
    %v3212 = vunpack.c.l.b16 %v3140
    %v3213 = vunpack.c.l.b16 %v3141
    %v3214 = vunpack.c.l.b16 %v3142
    %v3215 = vpack.c.b16 %v3184, %v3183
    %v3216 = vpack.c.b16 %v3186, %v3185
    %v3217 = vpack.c.b16 %v3188, %v3187
    %v3218 = vpack.c.b16 %v3190, %v3189
    %v3219 = vpack.c.b16 %v3192, %v3191
    %v3220 = vpack.c.b16 %v3194, %v3193
    %v3221 = vpack.c.b16 %v3196, %v3195
    %v3222 = vpack.c.b16 %v3198, %v3197
    %v3223 = vpack.c.b16 %v3200, %v3199
    %v3224 = vpack.c.b16 %v3202, %v3201
    %v3225 = vpack.c.b16 %v3204, %v3203
    %v3226 = vpack.c.b16 %v3206, %v3205
    %v3227 = vpack.c.b16 %v3208, %v3207
    %v3228 = vpack.c.b16 %v3210, %v3209
    %v3229 = vpack.c.b16 %v3212, %v3211
    %v3230 = vpack.c.b16 %v3214, %v3213
    %3247 = vmatprep.subr.bf16.mxu0 0
    %3248 = vmatpush1.bf16.msra.mxu0 %v3222
    %3249 = vmatprep.subr.bf16.mxu0 0
    %3250 = vmatpush1.bf16.msra.mxu0 %v3221
    %3251 = vmatprep.subr.bf16.mxu0 0
    %3252 = vmatpush1.bf16.msra.mxu0 %v3220
    %3253 = vmatprep.subr.bf16.mxu0 0
    %3254 = vmatpush1.bf16.msra.mxu0 %v3219
    %3255 = vmatprep.subr.bf16.mxu0 0
    %3256 = vmatpush1.bf16.msra.mxu0 %v3218
    %3257 = vmatprep.subr.bf16.mxu0 0
    %3258 = vmatpush1.bf16.msra.mxu0 %v3217
    %3259 = vmatprep.subr.bf16.mxu0 0
    %3260 = vmatpush1.bf16.msra.mxu0 %v3216
    %3261 = vmatprep.subr.bf16.mxu0 0
    %3262 = vmatpush1.bf16.msra.mxu0 %v3215
    %3263 = vmatprep.subr.bf16.mxu0 0
    %3264 = vmatpush2.bf16.msra.mxu0 %v3230
    %3265 = vmatprep.subr.bf16.mxu0 0
    %3266 = vmatpush2.bf16.msra.mxu0 %v3229
    %3267 = vmatprep.subr.bf16.mxu0 0
    %3268 = vmatpush2.bf16.msra.mxu0 %v3228
    %3269 = vmatprep.subr.bf16.mxu0 0
    %3270 = vmatpush2.bf16.msra.mxu0 %v3227
    %3271 = vmatprep.subr.bf16.mxu0 0
    %3272 = vmatpush2.bf16.msra.mxu0 %v3226
    %3273 = vmatprep.subr.bf16.mxu0 0
    %3274 = vmatpush2.bf16.msra.mxu0 %v3225
    %3275 = vmatprep.subr.bf16.mxu0 0
    %3276 = vmatpush2.bf16.msra.mxu0 %v3224
    %3277 = vmatprep.subr.bf16.mxu0 0
    %3278 = vmatpush2.bf16.msra.mxu0 %v3223
    %3279 = vmatprep.mubr.bf16.mxu0 %v3107
    %3280 = vmatmul.mubr.bf16.gmra.mxu0 %v3106
    %v3281 = vpop.f32.mrf.mxu0
    %v3282 = vadd.f32 %v3149, %v3281
    %v3283 = vpop.f32.mrf.mxu0
    %v3284 = vpop.f32.mrf.mxu0
    %v3285 = vadd.f32 %v3149, %v3284
    %v3286 = vpop.f32.mrf.mxu0
    %3287 = vmatprep.mubr.bf16.mxu0 %v3109
    %3288 = vmatmul.mubr.bf16.gmra.mxu0 %v3108
    %v3289 = vpop.f32.mrf.mxu0
    %v3290 = vadd.f32 %v3149, %v3289
    %v3291 = vpop.f32.mrf.mxu0
    %v3292 = vpop.f32.mrf.mxu0
    %v3293 = vadd.f32 %v3149, %v3292
    %v3294 = vpop.f32.mrf.mxu0
    %3295 = vdwg.mxu0
    %v3296 = vadd.f32 %v2865, %v3282
    %v3297 = vadd.f32 %v2866, %v3285
    %v3298 = vadd.f32 %v2867, %v3290
    %v3299 = vadd.f32 %v2868, %v3293
    %s3300 = scalar_lea.vmem %s17, 1
    %v3301 = vld [vmem:[%s3300] sm:$0x1]
    %s3302 = scalar_lea.vmem %s18, 1
    %v3303 = vld [vmem:[%s3302] sm:$0x1]
    %3304 = vadd.xlane.f32.xlu0 %v3296
    %v3305 = vpop.xlane.xlu0 %3304
    %3306 = vadd.xlane.f32.xlu0 %v3297
    %v3307 = vpop.xlane.xlu0 %3306
    %3308 = vadd.xlane.f32.xlu0 %v3298
    %v3309 = vpop.xlane.xlu0 %3308
    %3310 = vadd.xlane.f32.xlu0 %v3299
    %v3311 = vpop.xlane.xlu0 %3310
    %v3312 = vmul.f32 %v3305, %v201
    %v3313 = vmul.f32 %v3307, %v201
    %v3314 = vmul.f32 %v3309, %v201
    %v3315 = vmul.f32 %v3311, %v201
    %v3316 = vsub.f32 %v3296, %v3312
    %v3317 = vsub.f32 %v3297, %v3313
    %v3318 = vsub.f32 %v3298, %v3314
    %v3319 = vsub.f32 %v3299, %v3315
    %v3320 = vmul.f32 %v3316, %v3316
    %v3321 = vmul.f32 %v3317, %v3317
    %v3322 = vmul.f32 %v3318, %v3318
    %v3323 = vmul.f32 %v3319, %v3319
    %3324 = vadd.xlane.f32.xlu0 %v3320
    %v3325 = vpop.xlane.xlu0 %3324
    %3326 = vadd.xlane.f32.xlu0 %v3321
    %v3327 = vpop.xlane.xlu0 %3326
    %3328 = vadd.xlane.f32.xlu0 %v3322
    %v3329 = vpop.xlane.xlu0 %3328
    %3330 = vadd.xlane.f32.xlu0 %v3323
    %v3331 = vpop.xlane.xlu0 %3330
    %v3332 = vmul.f32 %v3325, %v201
    %v3333 = vmul.f32 %v3327, %v201
    %v3334 = vmul.f32 %v3329, %v201
    %v3335 = vmul.f32 %v3331, %v201
    %v3336 = vadd.f32 %v3332, 1e-12
    %v3337 = vadd.f32 %v3333, 1e-12
    %v3338 = vadd.f32 %v3334, 1e-12
    %v3339 = vadd.f32 %v3335, 1e-12
    %v3340 = vrsqrt.pop %v3336
    %v3341 = vrsqrt.pop %v3337
    %v3342 = vrsqrt.pop %v3338
    %v3343 = vrsqrt.pop %v3339
    %v3344 = vmul.f32 %v3316, %v3340
    %v3345 = vmul.f32 %v3317, %v3341
    %v3346 = vmul.f32 %v3318, %v3342
    %v3347 = vmul.f32 %v3319, %v3343
    %v3349 = vlaneseq
    %v3350 = vshrl.u32 %v3349, 7
    %v3351 = vsub.s32 0, %v3350
    %v3352 = vrot.slane %v3301, %v3351
    %v3354 = vmul.f32 %v3344, %v3352
    %v3355 = vmul.f32 %v3345, %v3352
    %v3356 = vmul.f32 %v3346, %v3352
    %v3357 = vmul.f32 %v3347, %v3352
    %v3359 = vlaneseq
    %v3360 = vshrl.u32 %v3359, 7
    %v3361 = vsub.s32 0, %v3360
    %v3362 = vrot.slane %v3303, %v3361
    %v3364 = vadd.f32 %v3354, %v3362
    %v3365 = vadd.f32 %v3355, %v3362
    %v3366 = vadd.f32 %v3356, %v3362
    %v3367 = vadd.f32 %v3357, %v3362
    %v3368 = vpack.c.bf16 %v3364, %v3364
    %v3369 = vpack.c.bf16 %v3366, %v3366
    %v3370 = vld [vmem:[#allocation7] sm:$0xf]
    %v3371 = vld [vmem:[#allocation7 + $0x4] sm:$0xf]
    %v3372 = vld [vmem:[#allocation7 + $0x8] sm:$0xf]
    %v3373 = vld [vmem:[#allocation7 + $0xc] sm:$0xf]
    %v3374 = vld [vmem:[#allocation7 + $0x10] sm:$0xf]
    %v3375 = vld [vmem:[#allocation7 + $0x14] sm:$0xf]
    %v3376 = vld [vmem:[#allocation7 + $0x18] sm:$0xf]
    %v3377 = vld [vmem:[#allocation7 + $0x1c] sm:$0xf]
    %v3378 = vld [vmem:[#allocation7 + $0x20] sm:$0xf]
    %v3379 = vld [vmem:[#allocation7 + $0x24] sm:$0xf]
    %v3380 = vld [vmem:[#allocation7 + $0x28] sm:$0xf]
    %v3381 = vld [vmem:[#allocation7 + $0x2c] sm:$0xf]
    %v3382 = vld [vmem:[#allocation7 + $0x30] sm:$0xf]
    %v3383 = vld [vmem:[#allocation7 + $0x34] sm:$0xf]
    %v3384 = vld [vmem:[#allocation7 + $0x38] sm:$0xf]
    %v3385 = vld [vmem:[#allocation7 + $0x3c] sm:$0xf]
    %v3386 = vld [vmem:[#allocation8] sm:$0x1]
    %v3388 = vlaneseq
    %v3389 = vshrl.u32 %v3388, 7
    %v3390 = vsub.s32 0, %v3389
    %v3391 = vrot.slane %v3386, %v3390
    %v3395 = vunpack.c.l.b16 %v3368
    %v3396 = vunpack.c.l.b16 %v3369
    %v3397 = vrot.slane %v3396, 7
    %vm3398 = vcmask 1041409
    %v3399 = vsel %vm3398, %v3397, %v3395
    %v3400 = vpack.c.b16 %v3399, %v3399
    %v3418 = vunpack.c.l.b16 %v3370
    %v3419 = vunpack.c.l.b16 %v3371
    %v3420 = vunpack.c.l.b16 %v3372
    %v3421 = vunpack.c.l.b16 %v3373
    %v3422 = vunpack.c.l.b16 %v3374
    %v3423 = vunpack.c.l.b16 %v3375
    %v3424 = vunpack.c.l.b16 %v3376
    %v3425 = vunpack.c.l.b16 %v3377
    %v3426 = vunpack.c.l.b16 %v3378
    %v3427 = vunpack.c.l.b16 %v3379
    %v3428 = vunpack.c.l.b16 %v3380
    %v3429 = vunpack.c.l.b16 %v3381
    %v3430 = vunpack.c.l.b16 %v3382
    %v3431 = vunpack.c.l.b16 %v3383
    %v3432 = vunpack.c.l.b16 %v3384
    %v3433 = vunpack.c.l.b16 %v3385
    %v3434 = vpack.c.b16 %v3419, %v3418
    %v3435 = vpack.c.b16 %v3421, %v3420
    %v3436 = vpack.c.b16 %v3423, %v3422
    %v3437 = vpack.c.b16 %v3425, %v3424
    %v3438 = vpack.c.b16 %v3427, %v3426
    %v3439 = vpack.c.b16 %v3429, %v3428
    %v3440 = vpack.c.b16 %v3431, %v3430
    %v3441 = vpack.c.b16 %v3433, %v3432
    %3450 = vmatprep.subr.bf16.mxu0 0
    %3451 = vmatpush1.bf16.msra.mxu0 %v3441
    %3452 = vmatprep.subr.bf16.mxu0 0
    %3453 = vmatpush1.bf16.msra.mxu0 %v3440
    %3454 = vmatprep.subr.bf16.mxu0 0
    %3455 = vmatpush1.bf16.msra.mxu0 %v3439
    %3456 = vmatprep.subr.bf16.mxu0 0
    %3457 = vmatpush1.bf16.msra.mxu0 %v3438
    %3458 = vmatprep.subr.bf16.mxu0 0
    %3459 = vmatpush1.bf16.msra.mxu0 %v3437
    %3460 = vmatprep.subr.bf16.mxu0 0
    %3461 = vmatpush1.bf16.msra.mxu0 %v3436
    %3462 = vmatprep.subr.bf16.mxu0 0
    %3463 = vmatpush1.bf16.msra.mxu0 %v3435
    %3464 = vmatprep.subr.bf16.mxu0 0
    %3465 = vmatpush1.bf16.msra.mxu0 %v3434
    %3466 = vmatprep.subr.bf16.mxu0 0
    %3467 = vmatpush2.bf16.msra.mxu0 0
    %3468 = vmatprep.subr.bf16.mxu0 0
    %3469 = vmatpush2.bf16.msra.mxu0 0
    %3470 = vmatprep.subr.bf16.mxu0 0
    %3471 = vmatpush2.bf16.msra.mxu0 0
    %3472 = vmatprep.subr.bf16.mxu0 0
    %3473 = vmatpush2.bf16.msra.mxu0 0
    %3474 = vmatprep.subr.bf16.mxu0 0
    %3475 = vmatpush2.bf16.msra.mxu0 0
    %3476 = vmatprep.subr.bf16.mxu0 0
    %3477 = vmatpush2.bf16.msra.mxu0 0
    %3478 = vmatprep.subr.bf16.mxu0 0
    %3479 = vmatpush2.bf16.msra.mxu0 0
    %3480 = vmatprep.subr.bf16.mxu0 0
    %3481 = vmatpush2.bf16.msra.mxu0 0
    %3482 = vmatprep.mubr.bf16.mxu0 0
    %3483 = vmatmul.mubr.bf16.gmra.mxu0 %v3400
    %v3484 = vpop.f32.mrf.mxu0
    %v3485 = vadd.f32 %v3391, %v3484
    %v3486 = vpop.f32.mrf.mxu0
    %v3487 = vpop.f32.mrf.mxu0
    %v3488 = vpop.f32.mrf.mxu0
    %3489 = vdwg.mxu0
    %v3490 = vtanh.pop %v3485
    %v3491 = vpack.c.bf16 %v3490, %v3490
    %v3492 = vld [vmem:[#allocation10] sm:$0xf]
    %v3493 = vld [vmem:[#allocation10 + $0x4] sm:$0xf]
    %v3494 = vld [vmem:[#allocation10 + $0x8] sm:$0xf]
    %v3495 = vld [vmem:[#allocation10 + $0xc] sm:$0xf]
    %v3496 = vld [vmem:[#allocation10 + $0x10] sm:$0xf]
    %v3497 = vld [vmem:[#allocation10 + $0x14] sm:$0xf]
    %v3498 = vld [vmem:[#allocation10 + $0x18] sm:$0xf]
    %v3499 = vld [vmem:[#allocation10 + $0x1c] sm:$0xf]
    %v3500 = vld [vmem:[#allocation10 + $0x20] sm:$0xf]
    %v3501 = vld [vmem:[#allocation10 + $0x24] sm:$0xf]
    %v3502 = vld [vmem:[#allocation10 + $0x28] sm:$0xf]
    %v3503 = vld [vmem:[#allocation10 + $0x2c] sm:$0xf]
    %v3504 = vld [vmem:[#allocation10 + $0x30] sm:$0xf]
    %v3505 = vld [vmem:[#allocation10 + $0x34] sm:$0xf]
    %v3506 = vld [vmem:[#allocation10 + $0x38] sm:$0xf]
    %v3507 = vld [vmem:[#allocation10 + $0x3c] sm:$0xf]
    %v3508 = vld [vmem:[#allocation11] sm:$0x1]
    %v3510 = vlaneseq
    %v3511 = vshrl.u32 %v3510, 7
    %v3512 = vsub.s32 0, %v3511
    %v3513 = vrot.slane %v3508, %v3512
    %v3531 = vunpack.c.l.b16 %v3492
    %v3532 = vunpack.c.l.b16 %v3493
    %v3533 = vunpack.c.l.b16 %v3494
    %v3534 = vunpack.c.l.b16 %v3495
    %v3535 = vunpack.c.l.b16 %v3496
    %v3536 = vunpack.c.l.b16 %v3497
    %v3537 = vunpack.c.l.b16 %v3498
    %v3538 = vunpack.c.l.b16 %v3499
    %v3539 = vunpack.c.l.b16 %v3500
    %v3540 = vunpack.c.l.b16 %v3501
    %v3541 = vunpack.c.l.b16 %v3502
    %v3542 = vunpack.c.l.b16 %v3503
    %v3543 = vunpack.c.l.b16 %v3504
    %v3544 = vunpack.c.l.b16 %v3505
    %v3545 = vunpack.c.l.b16 %v3506
    %v3546 = vunpack.c.l.b16 %v3507
    %v3547 = vpack.c.b16 %v3532, %v3531
    %v3548 = vpack.c.b16 %v3534, %v3533
    %v3549 = vpack.c.b16 %v3536, %v3535
    %v3550 = vpack.c.b16 %v3538, %v3537
    %v3551 = vpack.c.b16 %v3540, %v3539
    %v3552 = vpack.c.b16 %v3542, %v3541
    %v3553 = vpack.c.b16 %v3544, %v3543
    %v3554 = vpack.c.b16 %v3546, %v3545
    %3563 = vmatprep.subr.bf16.mxu0 0
    %3564 = vmatpush1.bf16.msra.mxu0 %v3554
    %3565 = vmatprep.subr.bf16.mxu0 0
    %3566 = vmatpush1.bf16.msra.mxu0 %v3553
    %3567 = vmatprep.subr.bf16.mxu0 0
    %3568 = vmatpush1.bf16.msra.mxu0 %v3552
    %3569 = vmatprep.subr.bf16.mxu0 0
    %3570 = vmatpush1.bf16.msra.mxu0 %v3551
    %3571 = vmatprep.subr.bf16.mxu0 0
    %3572 = vmatpush1.bf16.msra.mxu0 %v3550
    %3573 = vmatprep.subr.bf16.mxu0 0
    %3574 = vmatpush1.bf16.msra.mxu0 %v3549
    %3575 = vmatprep.subr.bf16.mxu0 0
    %3576 = vmatpush1.bf16.msra.mxu0 %v3548
    %3577 = vmatprep.subr.bf16.mxu0 0
    %3578 = vmatpush1.bf16.msra.mxu0 %v3547
    %3579 = vmatprep.subr.bf16.mxu0 0
    %3580 = vmatpush2.bf16.msra.mxu0 0
    %3581 = vmatprep.subr.bf16.mxu0 0
    %3582 = vmatpush2.bf16.msra.mxu0 0
    %3583 = vmatprep.subr.bf16.mxu0 0
    %3584 = vmatpush2.bf16.msra.mxu0 0
    %3585 = vmatprep.subr.bf16.mxu0 0
    %3586 = vmatpush2.bf16.msra.mxu0 0
    %3587 = vmatprep.subr.bf16.mxu0 0
    %3588 = vmatpush2.bf16.msra.mxu0 0
    %3589 = vmatprep.subr.bf16.mxu0 0
    %3590 = vmatpush2.bf16.msra.mxu0 0
    %3591 = vmatprep.subr.bf16.mxu0 0
    %3592 = vmatpush2.bf16.msra.mxu0 0
    %3593 = vmatprep.subr.bf16.mxu0 0
    %3594 = vmatpush2.bf16.msra.mxu0 0
    %3595 = vmatprep.mubr.bf16.mxu0 0
    %3596 = vmatmul.mubr.bf16.gmra.mxu0 %v3491
    %v3597 = vpop.f32.mrf.mxu0
    %v3598 = vadd.f32 %v3513, %v3597
    %v3599 = vpop.f32.mrf.mxu0
    %v3600 = vpop.f32.mrf.mxu0
    %v3601 = vpop.f32.mrf.mxu0
    %3602 = vdwg.mxu0
    %3603 = vst [vmem:[#allocation16] sm:$0x3] %v3598
    %v3604 = vpack.c.bf16 %v3365, %v3364
    %v3605 = vpack.c.bf16 %v3367, %v3366
    %v3606 = vld [vmem:[#allocation13] sm:$0xf]
    %v3607 = vld [vmem:[#allocation13 + $0x4] sm:$0xf]
    %v3608 = vld [vmem:[#allocation13 + $0x8] sm:$0xf]
    %v3609 = vld [vmem:[#allocation13 + $0xc] sm:$0xf]
    %v3610 = vld [vmem:[#allocation13 + $0x10] sm:$0xf]
    %v3611 = vld [vmem:[#allocation13 + $0x14] sm:$0xf]
    %v3612 = vld [vmem:[#allocation13 + $0x18] sm:$0xf]
    %v3613 = vld [vmem:[#allocation13 + $0x1c] sm:$0xf]
    %v3614 = vld [vmem:[#allocation13 + $0x20] sm:$0xf]
    %v3615 = vld [vmem:[#allocation13 + $0x24] sm:$0xf]
    %v3616 = vld [vmem:[#allocation13 + $0x28] sm:$0xf]
    %v3617 = vld [vmem:[#allocation13 + $0x2c] sm:$0xf]
    %v3618 = vld [vmem:[#allocation13 + $0x30] sm:$0xf]
    %v3619 = vld [vmem:[#allocation13 + $0x34] sm:$0xf]
    %v3620 = vld [vmem:[#allocation13 + $0x38] sm:$0xf]
    %v3621 = vld [vmem:[#allocation13 + $0x3c] sm:$0xf]
    %v3622 = vld [vmem:[#allocation14] sm:$0x1]
    %v3624 = vlaneseq
    %v3625 = vshrl.u32 %v3624, 7
    %v3626 = vsub.s32 0, %v3625
    %v3627 = vrot.slane %v3622, %v3626
    %v3645 = vunpack.c.l.b16 %v3606
    %v3646 = vunpack.c.l.b16 %v3607
    %v3647 = vunpack.c.l.b16 %v3608
    %v3648 = vunpack.c.l.b16 %v3609
    %v3649 = vunpack.c.l.b16 %v3610
    %v3650 = vunpack.c.l.b16 %v3611
    %v3651 = vunpack.c.l.b16 %v3612
    %v3652 = vunpack.c.l.b16 %v3613
    %v3653 = vunpack.c.l.b16 %v3614
    %v3654 = vunpack.c.l.b16 %v3615
    %v3655 = vunpack.c.l.b16 %v3616
    %v3656 = vunpack.c.l.b16 %v3617
    %v3657 = vunpack.c.l.b16 %v3618
    %v3658 = vunpack.c.l.b16 %v3619
    %v3659 = vunpack.c.l.b16 %v3620
    %v3660 = vunpack.c.l.b16 %v3621
    %v3661 = vpack.c.b16 %v3646, %v3645
    %v3662 = vpack.c.b16 %v3648, %v3647
    %v3663 = vpack.c.b16 %v3650, %v3649
    %v3664 = vpack.c.b16 %v3652, %v3651
    %v3665 = vpack.c.b16 %v3654, %v3653
    %v3666 = vpack.c.b16 %v3656, %v3655
    %v3667 = vpack.c.b16 %v3658, %v3657
    %v3668 = vpack.c.b16 %v3660, %v3659
    %3677 = vmatprep.subr.bf16.mxu0 0
    %3678 = vmatpush1.bf16.msra.mxu0 %v3668
    %3679 = vmatprep.subr.bf16.mxu0 0
    %3680 = vmatpush1.bf16.msra.mxu0 %v3667
    %3681 = vmatprep.subr.bf16.mxu0 0
    %3682 = vmatpush1.bf16.msra.mxu0 %v3666
    %3683 = vmatprep.subr.bf16.mxu0 0
    %3684 = vmatpush1.bf16.msra.mxu0 %v3665
    %3685 = vmatprep.subr.bf16.mxu0 0
    %3686 = vmatpush1.bf16.msra.mxu0 %v3664
    %3687 = vmatprep.subr.bf16.mxu0 0
    %3688 = vmatpush1.bf16.msra.mxu0 %v3663
    %3689 = vmatprep.subr.bf16.mxu0 0
    %3690 = vmatpush1.bf16.msra.mxu0 %v3662
    %3691 = vmatprep.subr.bf16.mxu0 0
    %3692 = vmatpush1.bf16.msra.mxu0 %v3661
    %3693 = vmatprep.subr.bf16.mxu0 0
    %3694 = vmatpush2.bf16.msra.mxu0 0
    %3695 = vmatprep.subr.bf16.mxu0 0
    %3696 = vmatpush2.bf16.msra.mxu0 0
    %3697 = vmatprep.subr.bf16.mxu0 0
    %3698 = vmatpush2.bf16.msra.mxu0 0
    %3699 = vmatprep.subr.bf16.mxu0 0
    %3700 = vmatpush2.bf16.msra.mxu0 0
    %3701 = vmatprep.subr.bf16.mxu0 0
    %3702 = vmatpush2.bf16.msra.mxu0 0
    %3703 = vmatprep.subr.bf16.mxu0 0
    %3704 = vmatpush2.bf16.msra.mxu0 0
    %3705 = vmatprep.subr.bf16.mxu0 0
    %3706 = vmatpush2.bf16.msra.mxu0 0
    %3707 = vmatprep.subr.bf16.mxu0 0
    %3708 = vmatpush2.bf16.msra.mxu0 0
    %3709 = vmatprep.mubr.bf16.mxu0 0
    %3710 = vmatmul.mubr.bf16.gmra.mxu0 %v3604
    %v3711 = vpop.f32.mrf.mxu0
    %v3712 = vadd.f32 %v3627, %v3711
    %v3713 = vpop.f32.mrf.mxu0
    %v3714 = vpop.f32.mrf.mxu0
    %v3715 = vadd.f32 %v3627, %v3714
    %v3716 = vpop.f32.mrf.mxu0
    %3717 = vmatprep.mubr.bf16.mxu0 0
    %3718 = vmatmul.mubr.bf16.gmra.mxu0 %v3605
    %v3719 = vpop.f32.mrf.mxu0
    %v3720 = vadd.f32 %v3627, %v3719
    %v3721 = vpop.f32.mrf.mxu0
    %v3722 = vpop.f32.mrf.mxu0
    %v3723 = vadd.f32 %v3627, %v3722
    %v3724 = vpop.f32.mrf.mxu0
    %3725 = vdwg.mxu0
    %3726 = vst [vmem:[%s26] sm:$0xff] %v3712
    %3727 = vst [vmem:[%s26 + $0x8] sm:$0xff] %v3715
    %3728 = vst [vmem:[%s26 + $0x10] sm:$0xff] %v3720
    %3729 = vst [vmem:[%s26 + $0x18] sm:$0xff] %v3723
    %v3730 = vlaneseq
    %v3731 = vand.u32 %v3730, 127
    %vm3732 = vcmp.lt.s32.totalorder %v3731, 7
    %v3733 = vsel %vm3732, %v3598, -1e+30
    %vm3734 = vcmask 1041408
    %v3735 = vsel %vm3734, %v3733, -inf
    %3736 = vmax.xlane.f32.xlu0 %v3735
    %v3737 = vpop.xlane.xlu0 %3736
    %v3738 = vsub.f32 %v3733, %v3737
    %v3739 = vmul.f32 %v3738, 1.442695
    %v3740 = vpow.pop %v3739
    %v3741 = vsel %vm3734, %v3740, 0.0
    %3742 = vadd.xlane.f32.xlu0 %v3741
    %v3743 = vpop.xlane.xlu0 %3742
    %v3744 = vlog2.pop %v3743
    %v3745 = vmul.f32 %v3744, 0.6931472
    %v3746 = vadd.f32 %v3737, %v3745
    %v3747 = vld [vmem:[%s3] sm:$0x3]
    %v3748 = vmul.f32 %v3598, %v3747
    %v3749 = vsel %vm3734, %v3748, 0.0
    %3750 = vadd.xlane.f32.xlu0 %v3749
    %v3751 = vpop.xlane.xlu0 %3750
    %v3752 = vsub.f32 %v3746, %v3751
    %vm3753 = vcmask 1024
    %v3754 = vsel %vm3753, %v3752, 0.0
    %3755 = vadd.xlane.f32.xlu0 %v3754
    %v3756 = vpop.xlane.xlu0 %3755
    %v3757 = vrot.slane %v3756, 4
    %v3758 = vadd.f32 %v3756, %v3757
    %v3759 = vrot.slane %v3758, 2
    %v3760 = vadd.f32 %v3758, %v3759
    %v3761 = vrot.slane %v3760, 1
    %v3762 = vadd.f32 %v3760, %v3761
    %s3763 = vtos %v3762
    %v3764 = vrcp.pop 2.0
    %s3765 = vtos %v3764
    %s3766 = smul.f32 %s3763, %s3765
    %vm3767 = vcmp.lt.s32.totalorder %v3731, 9
    %v3768 = vsel %vm3767, %v3712, -1e+30
    %v3769 = vsel %vm3767, %v3715, -1e+30
    %v3770 = vsel %vm3767, %v3720, -1e+30
    %v3771 = vsel %vm3767, %v3723, -1e+30
    %3772 = vmax.xlane.f32.xlu0 %v3768
    %v3773 = vpop.xlane.xlu0 %3772
    %3774 = vmax.xlane.f32.xlu0 %v3769
    %v3775 = vpop.xlane.xlu0 %3774
    %3776 = vmax.xlane.f32.xlu0 %v3770
    %v3777 = vpop.xlane.xlu0 %3776
    %3778 = vmax.xlane.f32.xlu0 %v3771
    %v3779 = vpop.xlane.xlu0 %3778
    %v3780 = vsub.f32 %v3768, %v3773
    %v3781 = vsub.f32 %v3769, %v3775
    %v3782 = vsub.f32 %v3770, %v3777
    %v3783 = vsub.f32 %v3771, %v3779
    %v3784 = vmul.f32 %v3780, 1.442695
    %v3785 = vpow.pop %v3784
    %v3786 = vmul.f32 %v3781, 1.442695
    %v3787 = vpow.pop %v3786
    %v3788 = vmul.f32 %v3782, 1.442695
    %v3789 = vpow.pop %v3788
    %v3790 = vmul.f32 %v3783, 1.442695
    %v3791 = vpow.pop %v3790
    %3792 = vadd.xlane.f32.xlu0 %v3785
    %v3793 = vpop.xlane.xlu0 %3792
    %3794 = vadd.xlane.f32.xlu0 %v3787
    %v3795 = vpop.xlane.xlu0 %3794
    %3796 = vadd.xlane.f32.xlu0 %v3789
    %v3797 = vpop.xlane.xlu0 %3796
    %3798 = vadd.xlane.f32.xlu0 %v3791
    %v3799 = vpop.xlane.xlu0 %3798
    %v3800 = vlog2.pop %v3793
    %v3801 = vmul.f32 %v3800, 0.6931472
    %v3802 = vlog2.pop %v3795
    %v3803 = vmul.f32 %v3802, 0.6931472
    %v3804 = vlog2.pop %v3797
    %v3805 = vmul.f32 %v3804, 0.6931472
    %v3806 = vlog2.pop %v3799
    %v3807 = vmul.f32 %v3806, 0.6931472
    %v3808 = vadd.f32 %v3773, %v3801
    %v3809 = vadd.f32 %v3775, %v3803
    %v3810 = vadd.f32 %v3777, %v3805
    %v3811 = vadd.f32 %v3779, %v3807
    %v3812 = vld [vmem:[%s4] sm:$0xff]
    %v3813 = vld [vmem:[%s4 + $0x8] sm:$0xff]
    %v3814 = vld [vmem:[%s4 + $0x10] sm:$0xff]
    %v3815 = vld [vmem:[%s4 + $0x18] sm:$0xff]
    %v3816 = vmul.f32 %v3712, %v3812
    %v3817 = vmul.f32 %v3715, %v3813
    %v3818 = vmul.f32 %v3720, %v3814
    %v3819 = vmul.f32 %v3723, %v3815
    %3820 = vadd.xlane.f32.xlu0 %v3816
    %v3821 = vpop.xlane.xlu0 %3820
    %3822 = vadd.xlane.f32.xlu0 %v3817
    %v3823 = vpop.xlane.xlu0 %3822
    %3824 = vadd.xlane.f32.xlu0 %v3818
    %v3825 = vpop.xlane.xlu0 %3824
    %3826 = vadd.xlane.f32.xlu0 %v3819
    %v3827 = vpop.xlane.xlu0 %3826
    %v3828 = vld [vmem:[%s2] sm:$0xff]
    %v3829 = vld [vmem:[%s2 + $0x8] sm:$0xff]
    %v3830 = vld [vmem:[%s2 + $0x10] sm:$0xff]
    %v3831 = vld [vmem:[%s2 + $0x18] sm:$0xff]
    %v3832 = vsub.f32 %v3808, %v3821
    %v3833 = vsub.f32 %v3809, %v3823
    %v3834 = vsub.f32 %v3810, %v3825
    %v3835 = vsub.f32 %v3811, %v3827
    %v3836 = vmul.f32 %v3828, %v3832
    %v3837 = vmul.f32 %v3829, %v3833
    %v3838 = vmul.f32 %v3830, %v3834
    %v3839 = vmul.f32 %v3831, %v3835
    %vm3840 = vcmask 7168
    %v3841 = vsel %vm3840, %v3836, 0.0
    %v3842 = vsel %vm3840, %v3837, 0.0
    %v3843 = vadd.f32 %v3841, %v3842
    %v3844 = vsel %vm3840, %v3838, 0.0
    %v3845 = vadd.f32 %v3843, %v3844
    %v3846 = vsel %vm3840, %v3839, 0.0
    %v3847 = vadd.f32 %v3845, %v3846
    %3848 = vadd.xlane.f32.xlu0 %v3847
    %v3849 = vpop.xlane.xlu0 %3848
    %v3850 = vrot.slane %v3849, 4
    %v3851 = vadd.f32 %v3849, %v3850
    %v3852 = vrot.slane %v3851, 2
    %v3853 = vadd.f32 %v3851, %v3852
    %v3854 = vrot.slane %v3853, 1
    %v3855 = vadd.f32 %v3853, %v3854
    %s3856 = vtos %v3855
    %v3857 = vsel %vm3840, %v3828, 0.0
    %v3858 = vsel %vm3840, %v3829, 0.0
    %v3859 = vadd.f32 %v3857, %v3858
    %v3860 = vsel %vm3840, %v3830, 0.0
    %v3861 = vadd.f32 %v3859, %v3860
    %v3862 = vsel %vm3840, %v3831, 0.0
    %v3863 = vadd.f32 %v3861, %v3862
    %3864 = vadd.xlane.f32.xlu0 %v3863
    %v3865 = vpop.xlane.xlu0 %3864
    %v3866 = vrot.slane %v3865, 4
    %v3867 = vadd.f32 %v3865, %v3866
    %v3868 = vrot.slane %v3867, 2
    %v3869 = vadd.f32 %v3867, %v3868
    %v3870 = vrot.slane %v3869, 1
    %v3871 = vadd.f32 %v3869, %v3870
    %s3872 = vtos %v3871
    %v3873 = vstv %s3872
    %v3874 = vrcp.pop %v3873
    %s3875 = vtos %v3874
    %s3876 = smul.f32 %s3856, %s3875
    %s3877 = sadd.f32 %s3766, %s3876
    %v3878 = vstv %s3877
    %vm3879 = vcmask 0
    %3880 = vst.msk [vmem:[#allocation17] sm:$0x1] %vm3879, %v3878
    // Predicated region
    $region134: #{joint_bert_forward.1} parent=1 // pred_check
      _
    $region135: #{joint_bert_forward.1} parent=1 // pred_check_branch
      %3882 = sbr.rel (0) target = $region137
    $region136: #{joint_bert_forward.1} parent=1 // pred_region
      %s3884 = ssub.s32 32, 32
      %3885 = vsyncadd [#allocation4], %s3884
      %s3887 = sshll.u32 [#allocation16], 4
      %s3888 = int_to_ptr.vmem [resolvable:$true] %s3887
      %3890 = dma.vmem_to_hbm [thread:$0]  %s3888, 32, %s25, [#allocation4]
    $region137: #{joint_bert_forward.1} parent=1 // pred_fallthru
      _
    // Predicated region
    $region138: #{joint_bert_forward.1} parent=1 // pred_check
      _
    $region139: #{joint_bert_forward.1} parent=1 // pred_check_branch
      %3892 = sbr.rel (0) target = $region141
    $region140: #{joint_bert_forward.1} parent=1 // pred_region
      _
    $region141: #{joint_bert_forward.1} parent=1 // pred_fallthru
      _
    // Predicated region
    $region142: #{joint_bert_forward.1} parent=1 // pred_check
      _
    $region143: #{joint_bert_forward.1} parent=1 // pred_check_branch
      %3894 = sbr.rel (0) target = $region145
    $region144: #{joint_bert_forward.1} parent=1 // pred_region
      %s3896 = ssub.s32 16, 16
      %3897 = vsyncadd [#allocation18], %s3896
      %s3899 = sshll.u32 [#allocation17], 4
      %s3900 = int_to_ptr.vmem [resolvable:$true] %s3899
      %3902 = dma.vmem_to_hbm [thread:$0]  %s3900, 16, %s27, [#allocation18]
    $region145: #{joint_bert_forward.1} parent=1 // pred_fallthru
      _
    // Predicated region
    $region146: #{joint_bert_forward.1} parent=1 // pred_check
      _
    $region147: #{joint_bert_forward.1} parent=1 // pred_check_branch
      %3904 = sbr.rel (0) target = $region149
    $region148: #{joint_bert_forward.1} parent=1 // pred_region
      %3905 = dma.done [#allocation4], 32
    $region149: #{joint_bert_forward.1} parent=1 // pred_fallthru
      _
    // Predicated region
    $region150: #{joint_bert_forward.1} parent=1 // pred_check
      _
    $region151: #{joint_bert_forward.1} parent=1 // pred_check_branch
      %3907 = sbr.rel (0) target = $region153
    $region152: #{joint_bert_forward.1} parent=1 // pred_region
      _
    $region153: #{joint_bert_forward.1} parent=1 // pred_fallthru
      _
    // Predicated region
    $region154: #{joint_bert_forward.1} parent=1 // pred_check
      _
    $region155: #{joint_bert_forward.1} parent=1 // pred_check_branch
      %3909 = sbr.rel (0) target = $region157
    $region156: #{joint_bert_forward.1} parent=1 // pred_region
      %3910 = dma.done [#allocation18], 16
    $region157: #{joint_bert_forward.1} parent=1 // pred_fallthru
      _
    %3911 = vsyncpa [#allocation3], 1
    %3912 = vsyncpa [#allocation6], 1
    %3913 = vsyncpa [#allocation9], 1
    %3914 = vsyncpa [#allocation12], 1
    %3915 = vsyncpa [#allocation15], 1
    %3916 = vsyncpa [#allocation4], 1
    %3917 = vsyncpa [#allocation18], 1

</llo_original>
